<compile_context>
chip_gen: v6e
topology: v6e:2x2x1
jax: 0.10.0
libtpu: 0.0.40
codegen_flags: <defaults>
</compile_context>

<pallas_src>
import math

import jax
import jax.numpy as jnp
from jax import lax
from jax.experimental import pallas as pl
from jax.experimental.pallas import tpu as pltpu

CHANNEL = 3  # CIFAR-10 RGB


# --------------------------------------------------------------------------
# Fused per-grid-step kernel: conv1 -> pool -> conv2 -> pool -> fused decoder
# --------------------------------------------------------------------------
def _make_fused_kernel(h, w, bsz):
    cin = CHANNEL
    h2, w2 = h // 2, w // 2           # after pool1
    h4, w4 = h // 4, w // 4           # after pool2
    kpad = 32                         # 9*cin = 27 K-columns zero-padded to 32

    def kernel(cols1_ref,             # (B, h*w, 32)  wrapper im2col, parity-major rows
               w1_ref, b1_ref,        # (32, 32), (1, 32)
               w2_ref, b2_ref,        # (288, 16), (1, 16)
               wd_ref, bd_ref,        # (16, 128), (1, 128) fused dec2∘dec1 (48 real cols)
               o_ref,                 # (B, h4*w4, 128) tap-decomposed output
               xp2_ref,               # VMEM (B, h2+2, w2+2, 32) padded conv2 input
               c2p_ref):              # VMEM (B*h4*w2, 16) y-pooled conv2 rows
        f32 = jnp.float32
        B = bsz

        # ---- enc1: Conv2d(3->32, k3, p1) == one im2col dot (im2col in wrapper)
        a1 = jnp.dot(cols1_ref[...].reshape(B * h * w, kpad), w1_ref[...],
                     preferred_element_type=f32) + b1_ref[...]
        a1 = a1.reshape(B, h * w, 32)

        # ---- pool1: rows are (px, py, y2, x2)-ordered, so the 2x2 max pool is
        #      two contiguous-half maxes on the value (no strided loads).
        m = jnp.maximum(a1[:, : h * w2, :], a1[:, h * w2:, :])      # max over x parity
        p1 = jnp.maximum(m[:, : h2 * w2, :], m[:, h2 * w2:, :])     # max over y parity
        # p1: (B, h2*w2, 32), rows in (y2, x2) row-major order.

        # ---- padded conv2 input: rewrite only the 1-wide zero ring, then the
        #      interior (the interior is fully overwritten every step).
        zrow = jnp.zeros((B, 1, w2 + 2, 32), f32)
        zcol = jnp.zeros((B, h2 + 2, 1, 32), f32)
        xp2_ref[:, 0:1, :, :] = zrow
        xp2_ref[:, h2 + 1:h2 + 2, :, :] = zrow
        xp2_ref[:, :, 0:1, :] = zcol
        xp2_ref[:, :, w2 + 1:w2 + 2, :] = zcol
        xp2_ref[:, 1:h2 + 1, 1:w2 + 1, :] = p1.reshape(B, h2, w2, 32)

        # ---- enc2: Conv2d(32->16, k3, p1) as a single K=288 im2col dot -------
        taps2 = [xp2_ref[:, ky:ky + h2, kx:kx + w2, :]
                 for ky in range(3) for kx in range(3)]              # 9 x (B,h2,w2,32)
        cols2 = jnp.concatenate(taps2, axis=-1).reshape(B * h2 * w2, 9 * 32)
        a2 = jnp.dot(cols2, w2_ref[...],
                     preferred_element_type=f32) + b2_ref[...]       # (B*h2*w2, 16)

        # ---- pool2: y-pool via contiguous halves on the value; x-pool via a
        #      small scratch and stride-2 sublane loads.
        a2 = a2.reshape(B, h4, 2 * w2, 16)
        rowmax = jnp.maximum(a2[:, :, :w2, :], a2[:, :, w2:, :])     # (B, h4, w2, 16)
        c2p_ref[...] = rowmax.reshape(B * h4 * w2, 16)
        p2 = jnp.maximum(c2p_ref[pl.ds(0, B * h4 * w4, 2), :],       # even x
                         c2p_ref[pl.ds(1, B * h4 * w4, 2), :])       # odd x
        # p2: (B*h4*w4, 16), rows = b*h4*w4 + y2*w4 + x2.

        # ---- decoder: dec2∘dec1 fused into ONE dot with a precomputed weight
        #      (48 real tap-major columns, zero-padded to 128 -> full-lane store)
        d = jnp.dot(p2, wd_ref[...], preferred_element_type=f32) + bd_ref[...]
        o_ref[...] = d.reshape(B, h4 * w4, 128).astype(o_ref.dtype)

    return kernel


def _pick_batch_block(n):
    # Prefer >= 2 grid steps so v7x's two TensorCores both get work; cap the
    # per-step image block (VMEM budget, esp. v7x's 64 MiB physical VMEM).
    for b in (8, 4, 2):
        if n % b == 0 and n // b >= 2:
            return b
    return 1


# --------------------------------------------------------------------------
# Mynet forward (NCHW in / NCHW out, like the PyTorch module)
# --------------------------------------------------------------------------
@jax.jit
def mynet_forward(params, x_nchw):
    n, c, h, w = x_nchw.shape
    assert c == CHANNEL and 9 * c <= 32
    assert h % 4 == 0 and w % 16 == 0, "fused kernel assumes H%4==0, W%16==0"
    h2, w2, h4, w4 = h // 2, w // 2, h // 4, w // 4
    bsz = _pick_batch_block(n)

    # ---- wrapper-side im2col for conv1 (tiny one-time XLA glue) --------------
    # K columns: k = (ky*3 + kx)*c + ci, zero-padded 27 -> 32.
    # Rows per image ordered (px, py, y2, x2) with y = 2*y2+py, x = 2*x2+px so
    # both pool reductions inside the kernel are contiguous-half maxes.
    xh = jnp.pad(jnp.transpose(x_nchw, (0, 2, 3, 1)),
                 ((0, 0), (1, 1), (1, 1), (0, 0)))                    # (n,h+2,w+2,c)
    taps = [xh[:, ky:ky + h, kx:kx + w, :]
            for ky in range(3) for kx in range(3)]
    cols1 = jnp.concatenate(taps, axis=-1)                            # (n,h,w,27)
    cols1 = jnp.pad(cols1, ((0, 0), (0, 0), (0, 0), (0, 32 - 9 * c)))
    cols1 = cols1.reshape(n, h2, 2, w2, 2, 32).transpose(0, 4, 2, 1, 3, 5)
    cols1 = cols1.reshape(n, h * w, 32)

    # ---- weight packing: every layer is a single MXU dot in the kernel ------
    w1 = jnp.pad(params["enc1_w"].reshape(9 * c, 32), ((0, 32 - 9 * c), (0, 0)))
    b1 = params["enc1_b"].reshape(1, 32)
    w2p = params["enc2_w"].reshape(9 * 32, 16)
    b2 = params["enc2_b"].reshape(1, 16)
    # dec2 tap-major (16,128) and dec1 block-diagonal (128,48) pre-multiplied
    # into a single (16,48) weight; zero-padded to 128 output columns.
    wd2 = jnp.transpose(params["dec2_w"], (2, 0, 1, 3)).reshape(16, 4 * 32)
    bd2 = jnp.tile(params["dec2_b"], 4).reshape(1, 4 * 32)
    wd1 = jnp.transpose(params["dec1_w"], (2, 0, 1, 3)).reshape(32, 4 * c)
    wblk = jnp.kron(jnp.eye(4, dtype=wd1.dtype), wd1)                 # (128, 16*c)
    bd1 = jnp.tile(params["dec1_b"], 16).reshape(1, 16 * c)
    wdec = jnp.pad(jnp.dot(wd2, wblk), ((0, 0), (0, 128 - 16 * c)))   # (16, 128)
    bdec = jnp.pad(jnp.dot(bd2, wblk) + bd1, ((0, 0), (0, 128 - 16 * c)))

    out = pl.pallas_call(
        _make_fused_kernel(h, w, bsz),
        out_shape=jax.ShapeDtypeStruct((n, h4 * w4, 128), jnp.float32),
        grid=(n // bsz,),
        in_specs=[
            pl.BlockSpec((bsz, h * w, 32), lambda i: (i, 0, 0)),
            pl.BlockSpec((32, 32), lambda i: (0, 0)),
            pl.BlockSpec((1, 32), lambda i: (0, 0)),
            pl.BlockSpec((9 * 32, 16), lambda i: (0, 0)),
            pl.BlockSpec((1, 16), lambda i: (0, 0)),
            pl.BlockSpec((16, 128), lambda i: (0, 0)),
            pl.BlockSpec((1, 128), lambda i: (0, 0)),
        ],
        out_specs=pl.BlockSpec((bsz, h4 * w4, 128), lambda i: (i, 0, 0)),
        scratch_shapes=[
            pltpu.VMEM((bsz, h2 + 2, w2 + 2, 32), jnp.float32),
            pltpu.VMEM((bsz * h4 * w2, 16), jnp.float32),
        ],
        compiler_params=pltpu.CompilerParams(
            dimension_semantics=("parallel",),       # batch blocks across TCs
            vmem_limit_bytes=48 * 1024 * 1024),
    )(cols1, w1, b1, w2p, b2, wdec, bdec)

    # Drop the 80 zero-pad columns, then interleave the tap-decomposed decoder
    # output back to NCHW:
    #   col = ((ky2*2+kx2)*2+ky1)*2*c + kx1*c + co
    #   y = 4*i2 + 2*ky2 + ky1, x = 4*j2 + 2*kx2 + kx1
    out = out[..., : 16 * c].reshape(n, h4, w4, 2, 2, 2, 2, c)
    out = out.transpose(0, 7, 1, 3, 5, 2, 4, 6)
    return out.reshape(n, c, h, w)


# --------------------------------------------------------------------------
# Deterministic parameter init (PyTorch-style uniform +-1/sqrt(fan_in))
# --------------------------------------------------------------------------
def init_params(key):
    c = CHANNEL

    def u(k, shape, fan_in):
        bound = 1.0 / math.sqrt(fan_in)
        return jax.random.uniform(k, shape, jnp.float32, -bound, bound)

    ks = jax.random.split(key, 8)
    return {
        # conv weights stored HWIO: (kh, kw, Cin, Cout)
        "enc1_w": u(ks[0], (3, 3, c, 32), c * 9),
        "enc1_b": u(ks[1], (32,), c * 9),
        "enc2_w": u(ks[2], (3, 3, 32, 16), 32 * 9),
        "enc2_b": u(ks[3], (16,), 32 * 9),
        # conv-transpose weights stored (kh, kw, Cin, Cout)
        "dec2_w": u(ks[4], (2, 2, 16, 32), 32 * 4),
        "dec2_b": u(ks[5], (32,), 32 * 4),
        "dec1_w": u(ks[6], (2, 2, 32, c), c * 4),
        "dec1_b": u(ks[7], (c,), c * 4),
    }


# --------------------------------------------------------------------------
# Pure-JAX reference (full-precision convs for a tight numerical check)
# --------------------------------------------------------------------------
def ref_forward(params, x_nchw):
    dn = ("NHWC", "HWIO", "NHWC")
    p1 = ((1, 1), (1, 1))
    hp = lax.Precision.HIGHEST
    x = jnp.transpose(x_nchw, (0, 2, 3, 1))
    x = lax.conv_general_dilated(x, params["enc1_w"], (1, 1), p1,
                                 dimension_numbers=dn,
                                 precision=hp) + params["enc1_b"]
    x = lax.reduce_window(x, -jnp.inf, lax.max, (1, 2, 2, 1), (1, 2, 2, 1), "VALID")
    x = lax.conv_general_dilated(x, params["enc2_w"], (1, 1), p1,
                                 dimension_numbers=dn,
                                 precision=hp) + params["enc2_b"]
    x = lax.reduce_window(x, -jnp.inf, lax.max, (1, 2, 2, 1), (1, 2, 2, 1), "VALID")
    # ConvTranspose(k=2, s=2, p=0) == input-dilated conv with flipped kernel
    x = lax.conv_general_dilated(x, params["dec2_w"][::-1, ::-1], (1, 1), p1,
                                 lhs_dilation=(2, 2), dimension_numbers=dn,
                                 precision=hp) + params["dec2_b"]
    x = lax.conv_general_dilated(x, params["dec1_w"][::-1, ::-1], (1, 1), p1,
                                 lhs_dilation=(2, 2), dimension_numbers=dn,
                                 precision=hp) + params["dec1_b"]
    return jnp.transpose(x, (0, 3, 1, 2))


if __name__ == "__main__":
    key = jax.random.PRNGKey(0)
    kp, kx, kx2 = jax.random.split(key, 3)
    params = init_params(kp)

    # CIFAR-10-shaped input: batch=2, channels=3, 32x32 spatial (NCHW).
    x = jax.random.normal(kx, (2, 3, 32, 32), jnp.float32)
    y = jax.block_until_ready(mynet_forward(params, x))
    assert y.shape == (2, 3, 32, 32), y.shape
    y_ref = ref_forward(params, x)
    err = float(jnp.max(jnp.abs(y - y_ref)))
    assert jnp.allclose(y, y_ref, atol=1e-3, rtol=1e-3), err

    # Also exercise the batched path (B=4 images per grid step, 2 grid steps).
    x8 = jax.random.normal(kx2, (8, 3, 32, 32), jnp.float32)
    y8 = jax.block_until_ready(mynet_forward(params, x8))
    y8_ref = ref_forward(params, x8)
    err8 = float(jnp.max(jnp.abs(y8 - y8_ref)))
    assert jnp.allclose(y8, y8_ref, atol=1e-3, rtol=1e-3), err8

    print("KERNEL_OK")
</pallas_src>

<mosaic_0001>
module attributes {stable_mosaic.version = 11 : i64} {
  func.func @kernel(%arg0: i32, %arg1: memref<1x1024x32xf32, #tpu.memory_space<vmem>>, %arg2: memref<32x32xf32, #tpu.memory_space<vmem>>, %arg3: memref<1x32xf32, #tpu.memory_space<vmem>>, %arg4: memref<288x16xf32, #tpu.memory_space<vmem>>, %arg5: memref<1x16xf32, #tpu.memory_space<vmem>>, %arg6: memref<16x128xf32, #tpu.memory_space<vmem>>, %arg7: memref<1x128xf32, #tpu.memory_space<vmem>>, %arg8: memref<1x64x128xf32, #tpu.memory_space<vmem>>, %arg9: memref<1x18x18x32xf32, #tpu.memory_space<vmem>>, %arg10: memref<128x16xf32, #tpu.memory_space<vmem>>) attributes {dimension_semantics = [#tpu.dimension_semantics<parallel>], iteration_bounds = array<i64: 2>, scalar_prefetch = 0 : i64, scratch_operands = 2 : i64, tpu.core_type = #tpu.core_type<tc>, window_params = [{transform_indices = @transform_0, window_bounds = array<i64: 1, 1024, 32>}, {pipeline_mode = #tpu.pipeline_mode<synchronous>, transform_indices = @transform_1, window_bounds = array<i64: 32, 32>}, {pipeline_mode = #tpu.pipeline_mode<synchronous>, transform_indices = @transform_2, window_bounds = array<i64: 1, 32>}, {pipeline_mode = #tpu.pipeline_mode<synchronous>, transform_indices = @transform_3, window_bounds = array<i64: 288, 16>}, {pipeline_mode = #tpu.pipeline_mode<synchronous>, transform_indices = @transform_4, window_bounds = array<i64: 1, 16>}, {pipeline_mode = #tpu.pipeline_mode<synchronous>, transform_indices = @transform_5, window_bounds = array<i64: 16, 128>}, {pipeline_mode = #tpu.pipeline_mode<synchronous>, transform_indices = @transform_6, window_bounds = array<i64: 1, 128>}, {transform_indices = @transform_7, window_bounds = array<i64: 1, 64, 128>}]} {
    %c0 = arith.constant 0 : index
    %c0_0 = arith.constant 0 : index
    %c0_1 = arith.constant 0 : index
    %0 = vector.load %arg1[%c0, %c0_0, %c0_1] : memref<1x1024x32xf32, #tpu.memory_space<vmem>>, vector<1x1024x32xf32>
    %1 = vector.shape_cast %0 : vector<1x1024x32xf32> to vector<1024x32xf32>
    %c0_2 = arith.constant 0 : index
    %c0_3 = arith.constant 0 : index
    %2 = vector.load %arg2[%c0_2, %c0_3] : memref<32x32xf32, #tpu.memory_space<vmem>>, vector<32x32xf32>
    %cst = arith.constant dense<0.000000e+00> : vector<1024x32xf32>
    %3 = tpu.matmul %1, %2, %cst {dimension_numbers = #tpu.dot_dimension_numbers<[1], [0], [0], [1], [0, 0, 1, 1], [], []>} : vector<1024x32xf32>, vector<32x32xf32>, vector<1024x32xf32> -> vector<1024x32xf32>
    %c0_4 = arith.constant 0 : index
    %c0_5 = arith.constant 0 : index
    %4 = vector.load %arg3[%c0_4, %c0_5] : memref<1x32xf32, #tpu.memory_space<vmem>>, vector<1x32xf32>
    %5 = vector.broadcast %4 : vector<1x32xf32> to vector<1024x32xf32>
    %6 = arith.addf %3, %5 : vector<1024x32xf32>
    %7 = vector.shape_cast %6 : vector<1024x32xf32> to vector<1x1024x32xf32>
    %8 = vector.extract_strided_slice %7 {offsets = [0, 0, 0], sizes = [1, 512, 32], strides = [1, 1, 1]} : vector<1x1024x32xf32> to vector<1x512x32xf32>
    %9 = vector.extract_strided_slice %7 {offsets = [0, 512, 0], sizes = [1, 512, 32], strides = [1, 1, 1]} : vector<1x1024x32xf32> to vector<1x512x32xf32>
    %10 = arith.maximumf %8, %9 : vector<1x512x32xf32>
    %11 = vector.extract_strided_slice %10 {offsets = [0, 0, 0], sizes = [1, 256, 32], strides = [1, 1, 1]} : vector<1x512x32xf32> to vector<1x256x32xf32>
    %12 = vector.extract_strided_slice %10 {offsets = [0, 256, 0], sizes = [1, 256, 32], strides = [1, 1, 1]} : vector<1x512x32xf32> to vector<1x256x32xf32>
    %13 = arith.maximumf %11, %12 : vector<1x256x32xf32>
    %cst_6 = arith.constant 0.000000e+00 : f32
    %14 = vector.broadcast %cst_6 : f32 to vector<1x1x18x32xf32>
    %cst_7 = arith.constant 0.000000e+00 : f32
    %15 = vector.broadcast %cst_7 : f32 to vector<1x18x1x32xf32>
    %c0_8 = arith.constant 0 : index
    %c0_9 = arith.constant 0 : index
    %c0_10 = arith.constant 0 : index
    %c0_11 = arith.constant 0 : index
    %16 = vector.load %arg9[%c0_8, %c0_9, %c0_10, %c0_11] : memref<1x18x18x32xf32, #tpu.memory_space<vmem>>, vector<1x1x18x32xf32>
    tpu.vector_store %arg9[%c0_8, %c0_9, %c0_10, %c0_11], %14 {strides = array<i32>} : memref<1x18x18x32xf32, #tpu.memory_space<vmem>>, vector<1x1x18x32xf32>,
    %c0_12 = arith.constant 0 : index
    %c17 = arith.constant 17 : index
    %c0_13 = arith.constant 0 : index
    %c0_14 = arith.constant 0 : index
    %17 = vector.load %arg9[%c0_12, %c17, %c0_13, %c0_14] : memref<1x18x18x32xf32, #tpu.memory_space<vmem>>, vector<1x1x18x32xf32>
    tpu.vector_store %arg9[%c0_12, %c17, %c0_13, %c0_14], %14 {strides = array<i32>} : memref<1x18x18x32xf32, #tpu.memory_space<vmem>>, vector<1x1x18x32xf32>,
    %c0_15 = arith.constant 0 : index
    %c0_16 = arith.constant 0 : index
    %c0_17 = arith.constant 0 : index
    %c0_18 = arith.constant 0 : index
    %18 = vector.load %arg9[%c0_15, %c0_16, %c0_17, %c0_18] : memref<1x18x18x32xf32, #tpu.memory_space<vmem>>, vector<1x18x1x32xf32>
    tpu.vector_store %arg9[%c0_15, %c0_16, %c0_17, %c0_18], %15 {strides = array<i32>} : memref<1x18x18x32xf32, #tpu.memory_space<vmem>>, vector<1x18x1x32xf32>,
    %c0_19 = arith.constant 0 : index
    %c0_20 = arith.constant 0 : index
    %c17_21 = arith.constant 17 : index
    %c0_22 = arith.constant 0 : index
    %19 = vector.load %arg9[%c0_19, %c0_20, %c17_21, %c0_22] : memref<1x18x18x32xf32, #tpu.memory_space<vmem>>, vector<1x18x1x32xf32>
    tpu.vector_store %arg9[%c0_19, %c0_20, %c17_21, %c0_22], %15 {strides = array<i32>} : memref<1x18x18x32xf32, #tpu.memory_space<vmem>>, vector<1x18x1x32xf32>,
    %20 = vector.shape_cast %13 : vector<1x256x32xf32> to vector<1x16x16x32xf32>
    %c0_23 = arith.constant 0 : index
    %c1 = arith.constant 1 : index
    %c1_24 = arith.constant 1 : index
    %c0_25 = arith.constant 0 : index
    %21 = vector.load %arg9[%c0_23, %c1, %c1_24, %c0_25] : memref<1x18x18x32xf32, #tpu.memory_space<vmem>>, vector<1x16x16x32xf32>
    tpu.vector_store %arg9[%c0_23, %c1, %c1_24, %c0_25], %20 {strides = array<i32>} : memref<1x18x18x32xf32, #tpu.memory_space<vmem>>, vector<1x16x16x32xf32>,
    %c0_26 = arith.constant 0 : index
    %c0_27 = arith.constant 0 : index
    %c0_28 = arith.constant 0 : index
    %c0_29 = arith.constant 0 : index
    %22 = vector.load %arg9[%c0_26, %c0_27, %c0_28, %c0_29] : memref<1x18x18x32xf32, #tpu.memory_space<vmem>>, vector<1x16x16x32xf32>
    %c0_30 = arith.constant 0 : index
    %c0_31 = arith.constant 0 : index
    %c1_32 = arith.constant 1 : index
    %c0_33 = arith.constant 0 : index
    %23 = vector.load %arg9[%c0_30, %c0_31, %c1_32, %c0_33] : memref<1x18x18x32xf32, #tpu.memory_space<vmem>>, vector<1x16x16x32xf32>
    %c0_34 = arith.constant 0 : index
    %c0_35 = arith.constant 0 : index
    %c2 = arith.constant 2 : index
    %c0_36 = arith.constant 0 : index
    %24 = vector.load %arg9[%c0_34, %c0_35, %c2, %c0_36] : memref<1x18x18x32xf32, #tpu.memory_space<vmem>>, vector<1x16x16x32xf32>
    %c0_37 = arith.constant 0 : index
    %c1_38 = arith.constant 1 : index
    %c0_39 = arith.constant 0 : index
    %c0_40 = arith.constant 0 : index
    %25 = vector.load %arg9[%c0_37, %c1_38, %c0_39, %c0_40] : memref<1x18x18x32xf32, #tpu.memory_space<vmem>>, vector<1x16x16x32xf32>
    %c0_41 = arith.constant 0 : index
    %c1_42 = arith.constant 1 : index
    %c1_43 = arith.constant 1 : index
    %c0_44 = arith.constant 0 : index
    %26 = vector.load %arg9[%c0_41, %c1_42, %c1_43, %c0_44] : memref<1x18x18x32xf32, #tpu.memory_space<vmem>>, vector<1x16x16x32xf32>
    %c0_45 = arith.constant 0 : index
    %c1_46 = arith.constant 1 : index
    %c2_47 = arith.constant 2 : index
    %c0_48 = arith.constant 0 : index
    %27 = vector.load %arg9[%c0_45, %c1_46, %c2_47, %c0_48] : memref<1x18x18x32xf32, #tpu.memory_space<vmem>>, vector<1x16x16x32xf32>
    %c0_49 = arith.constant 0 : index
    %c2_50 = arith.constant 2 : index
    %c0_51 = arith.constant 0 : index
    %c0_52 = arith.constant 0 : index
    %28 = vector.load %arg9[%c0_49, %c2_50, %c0_51, %c0_52] : memref<1x18x18x32xf32, #tpu.memory_space<vmem>>, vector<1x16x16x32xf32>
    %c0_53 = arith.constant 0 : index
    %c2_54 = arith.constant 2 : index
    %c1_55 = arith.constant 1 : index
    %c0_56 = arith.constant 0 : index
    %29 = vector.load %arg9[%c0_53, %c2_54, %c1_55, %c0_56] : memref<1x18x18x32xf32, #tpu.memory_space<vmem>>, vector<1x16x16x32xf32>
    %c0_57 = arith.constant 0 : index
    %c2_58 = arith.constant 2 : index
    %c2_59 = arith.constant 2 : index
    %c0_60 = arith.constant 0 : index
    %30 = vector.load %arg9[%c0_57, %c2_58, %c2_59, %c0_60] : memref<1x18x18x32xf32, #tpu.memory_space<vmem>>, vector<1x16x16x32xf32>
    %31 = tpu.concatenate %22, %23, %24, %25, %26, %27, %28, %29, %30 in 3 : vector<1x16x16x32xf32>, vector<1x16x16x32xf32>, vector<1x16x16x32xf32>, vector<1x16x16x32xf32>, vector<1x16x16x32xf32>, vector<1x16x16x32xf32>, vector<1x16x16x32xf32>, vector<1x16x16x32xf32>, vector<1x16x16x32xf32> -> vector<1x16x16x288xf32>
    %32 = vector.shape_cast %31 : vector<1x16x16x288xf32> to vector<256x288xf32>
    %c0_61 = arith.constant 0 : index
    %c0_62 = arith.constant 0 : index
    %33 = vector.load %arg4[%c0_61, %c0_62] : memref<288x16xf32, #tpu.memory_space<vmem>>, vector<288x16xf32>
    %cst_63 = arith.constant dense<0.000000e+00> : vector<256x16xf32>
    %34 = tpu.matmul %32, %33, %cst_63 {dimension_numbers = #tpu.dot_dimension_numbers<[1], [0], [0], [1], [0, 0, 1, 1], [], []>} : vector<256x288xf32>, vector<288x16xf32>, vector<256x16xf32> -> vector<256x16xf32>
    %c0_64 = arith.constant 0 : index
    %c0_65 = arith.constant 0 : index
    %35 = vector.load %arg5[%c0_64, %c0_65] : memref<1x16xf32, #tpu.memory_space<vmem>>, vector<1x16xf32>
    %36 = vector.broadcast %35 : vector<1x16xf32> to vector<256x16xf32>
    %37 = arith.addf %34, %36 : vector<256x16xf32>
    %38 = vector.shape_cast %37 : vector<256x16xf32> to vector<1x8x32x16xf32>
    %39 = vector.extract_strided_slice %38 {offsets = [0, 0, 0, 0], sizes = [1, 8, 16, 16], strides = [1, 1, 1, 1]} : vector<1x8x32x16xf32> to vector<1x8x16x16xf32>
    %40 = vector.extract_strided_slice %38 {offsets = [0, 0, 16, 0], sizes = [1, 8, 16, 16], strides = [1, 1, 1, 1]} : vector<1x8x32x16xf32> to vector<1x8x16x16xf32>
    %41 = arith.maximumf %39, %40 : vector<1x8x16x16xf32>
    %42 = vector.shape_cast %41 : vector<1x8x16x16xf32> to vector<128x16xf32>
    %c0_66 = arith.constant 0 : index
    %c0_67 = arith.constant 0 : index
    %43 = vector.load %arg10[%c0_66, %c0_67] : memref<128x16xf32, #tpu.memory_space<vmem>>, vector<128x16xf32>
    tpu.vector_store %arg10[%c0_66, %c0_67], %42 {strides = array<i32>} : memref<128x16xf32, #tpu.memory_space<vmem>>, vector<128x16xf32>,
    %c0_68 = arith.constant 0 : index
    %c0_69 = arith.constant 0 : index
    %44 = tpu.strided_load %arg10[%c0_68, %c0_69] {strides = array<i32: 2, 1>} : memref<128x16xf32, #tpu.memory_space<vmem>>, vector<64x16xf32>
    %c1_70 = arith.constant 1 : index
    %c0_71 = arith.constant 0 : index
    %45 = tpu.strided_load %arg10[%c1_70, %c0_71] {strides = array<i32: 2, 1>} : memref<128x16xf32, #tpu.memory_space<vmem>>, vector<64x16xf32>
    %46 = arith.maximumf %44, %45 : vector<64x16xf32>
    %c0_72 = arith.constant 0 : index
    %c0_73 = arith.constant 0 : index
    %47 = vector.load %arg6[%c0_72, %c0_73] : memref<16x128xf32, #tpu.memory_space<vmem>>, vector<16x128xf32>
    %cst_74 = arith.constant dense<0.000000e+00> : vector<64x128xf32>
    %48 = tpu.matmul %46, %47, %cst_74 {dimension_numbers = #tpu.dot_dimension_numbers<[1], [0], [0], [1], [0, 0, 1, 1], [], []>} : vector<64x16xf32>, vector<16x128xf32>, vector<64x128xf32> -> vector<64x128xf32>
    %c0_75 = arith.constant 0 : index
    %c0_76 = arith.constant 0 : index
    %49 = vector.load %arg7[%c0_75, %c0_76] : memref<1x128xf32, #tpu.memory_space<vmem>>, vector<1x128xf32>
    %50 = vector.broadcast %49 : vector<1x128xf32> to vector<64x128xf32>
    %51 = arith.addf %48, %50 : vector<64x128xf32>
    %52 = vector.shape_cast %51 : vector<64x128xf32> to vector<1x64x128xf32>
    %c0_77 = arith.constant 0 : index
    %c0_78 = arith.constant 0 : index
    %c0_79 = arith.constant 0 : index
    %53 = vector.load %arg8[%c0_77, %c0_78, %c0_79] : memref<1x64x128xf32, #tpu.memory_space<vmem>>, vector<1x64x128xf32>
    tpu.vector_store %arg8[%c0_77, %c0_78, %c0_79], %52 {strides = array<i32>} : memref<1x64x128xf32, #tpu.memory_space<vmem>>, vector<1x64x128xf32>,
    return
  }
  func.func @transform_0(%arg0: i32) -> (i32, i32, i32) {
    %c0_i32 = arith.constant 0 : i32
    %c0_i32_0 = arith.constant 0 : i32
    %c0_i32_1 = arith.constant 0 : i32
    return %arg0, %c0_i32, %c0_i32_0 : i32, i32, i32
  }
  func.func @transform_1(%arg0: i32) -> (i32, i32) {
    %c0_i32 = arith.constant 0 : i32
    %c0_i32_0 = arith.constant 0 : i32
    %c0_i32_1 = arith.constant 0 : i32
    return %c0_i32, %c0_i32_0 : i32, i32
  }
  func.func @transform_2(%arg0: i32) -> (i32, i32) {
    %c0_i32 = arith.constant 0 : i32
    %c0_i32_0 = arith.constant 0 : i32
    %c0_i32_1 = arith.constant 0 : i32
    return %c0_i32, %c0_i32_0 : i32, i32
  }
  func.func @transform_3(%arg0: i32) -> (i32, i32) {
    %c0_i32 = arith.constant 0 : i32
    %c0_i32_0 = arith.constant 0 : i32
    %c0_i32_1 = arith.constant 0 : i32
    return %c0_i32, %c0_i32_0 : i32, i32
  }
  func.func @transform_4(%arg0: i32) -> (i32, i32) {
    %c0_i32 = arith.constant 0 : i32
    %c0_i32_0 = arith.constant 0 : i32
    %c0_i32_1 = arith.constant 0 : i32
    return %c0_i32, %c0_i32_0 : i32, i32
  }
  func.func @transform_5(%arg0: i32) -> (i32, i32) {
    %c0_i32 = arith.constant 0 : i32
    %c0_i32_0 = arith.constant 0 : i32
    %c0_i32_1 = arith.constant 0 : i32
    return %c0_i32, %c0_i32_0 : i32, i32
  }
  func.func @transform_6(%arg0: i32) -> (i32, i32) {
    %c0_i32 = arith.constant 0 : i32
    %c0_i32_0 = arith.constant 0 : i32
    %c0_i32_1 = arith.constant 0 : i32
    return %c0_i32, %c0_i32_0 : i32, i32
  }
  func.func @transform_7(%arg0: i32) -> (i32, i32, i32) {
    %c0_i32 = arith.constant 0 : i32
    %c0_i32_0 = arith.constant 0 : i32
    %c0_i32_1 = arith.constant 0 : i32
    return %arg0, %c0_i32, %c0_i32_0 : i32, i32, i32
  }
}

</mosaic_0001>

<llo_original>
// kernel: mul.4
$region0: #{mul.4}
  %s0 = inlined_call_operand.vmem [shape: f32[32,2,2,3], index: 0, kind: input, shape index: {}]
  %s1 = inlined_call_operand.vmem [shape: f32[32,12], index: 1, kind: output, shape index: {}]
  $region1: #{mul.4} parent=0
    #allocation0 [shape = 'u8[16384]{0}', space=vmem, size = 0x4000, scoped, tag = 'scoped mem for input reshape']
    %s3 = sshll.u32 1, 4
    %s4 = ssub.s32 %s3, 1
    %s5 = smul.addr 4, 3
    %s6 = scalar_lea.vmem %s0, %s5
    %v7 = vld [vmem:[%s6] sm:%s4]
    %s8 = scalar_lea.vmem [#allocation0], 24
    %9 = vst [vmem:[%s8] sm:%s4] %v7
    %s10 = smul.addr 4, 2
    %s11 = scalar_lea.vmem %s0, %s10
    %v12 = vld [vmem:[%s11] sm:%s4]
    %s13 = scalar_lea.vmem [#allocation0], 16
    %14 = vst [vmem:[%s13] sm:%s4] %v12
    %s15 = scalar_lea.vmem %s0, 4
    %v16 = vld [vmem:[%s15] sm:%s4]
    %s17 = scalar_lea.vmem [#allocation0], 8
    %18 = vst [vmem:[%s17] sm:%s4] %v16
    %v19 = vld [vmem:[%s0] sm:%s4]
    %20 = vst [vmem:[#allocation0] sm:%s4] %v19
    %v21 = vld [vmem:[#allocation0] sm:$0x7]
    %vm22 = vcmask 261120
    %23 = vst.msk [vmem:[%s1] sm:$0x7] %vm22, %v21
    %s24 = scalar_lea.vmem [#allocation0], 8
    %v25 = vld [vmem:[%s24] sm:$0x7]
    %vm26 = vcmask 261120
    %s27 = scalar_lea.vmem %s1, 3
    %28 = vst.msk [vmem:[%s27] sm:$0x7] %vm26, %v25
    %s29 = scalar_lea.vmem [#allocation0], 16
    %v30 = vld [vmem:[%s29] sm:$0x7]
    %vm31 = vcmask 261120
    %s32 = scalar_lea.vmem %s1, 6
    %33 = vst.msk [vmem:[%s32] sm:$0x7] %vm31, %v30
    %s34 = scalar_lea.vmem [#allocation0], 24
    %v35 = vld [vmem:[%s34] sm:$0x7]
    %vm36 = vcmask 261120
    %s37 = scalar_lea.vmem %s1, 9
    %38 = vst.msk [vmem:[%s37] sm:$0x7] %vm36, %v35

// kernel: tile.13
$region0: #{tile.13}
  #allocation0 [shape = 's32[1]{0}', space=sflag, size = 0x4, scoped, tag = 'scoped memory for tile.13']
  %s0 = inlined_call_operand.vmem [shape: f32[32], index: 0, kind: input, shape index: {}]
  %s1 = inlined_call_operand.vmem [shape: f32[4,32], index: 1, kind: output, shape index: {}]
  // Predicated region
  $region2: #{tile.13} parent=0 // pred_check
    _
  $region3: #{tile.13} parent=0 // pred_check_branch
    %3 = sbr.rel (0) target = $region5
  $region4: #{tile.13} parent=0 // pred_region
    _
  $region5: #{tile.13} parent=0 // pred_fallthru
    _
  %v4 = vld [vmem:[%s0] ss:$0 sm:$0xff]
  %5 = vst [vmem:[%s1] sm:$0xf] %v4

// kernel: tile.18
$region0: #{tile.18}
  #allocation0 [shape = 's32[1]{0}', space=sflag, size = 0x4, scoped, tag = 'scoped memory for tile.18']
  %s0 = inlined_call_operand.vmem [shape: f32[3], index: 0, kind: input, shape index: {}]
  %s1 = inlined_call_operand.vmem [shape: f32[16,3], index: 1, kind: output, shape index: {}]
  // Predicated region
  $region2: #{tile.18} parent=0 // pred_check
    _
  $region3: #{tile.18} parent=0 // pred_check_branch
    %3 = sbr.rel (0) target = $region5
  $region4: #{tile.18} parent=0 // pred_region
    _
  $region5: #{tile.18} parent=0 // pred_fallthru
    _
  %v4 = vld [vmem:[%s0] ss:$0 sm:$0xff]
  %5 = vst [vmem:[%s1] sm:$0xff] %v4
  %s6 = scalar_lea.vmem %s1, 8
  %7 = vst [vmem:[%s6] sm:$0xff] %v4

// kernel: mynet_forward.1
$region0: #{mynet_forward.1}
  #allocation0 [shape = 'u32[]', space=smem, size = 0x4, offset = 0x4, fixed_abs, tag = 'smem constant byte address 0x4 - core index']
  #allocation1 [shape = 'u32[144,128]{1,0:T(1,128)}', space=vmem, size = 0x12000, scoped, tag = 'internal scratch']
  #allocation2 [shape = 'f32[1,18,18,32]{3,2,1,0:T(8,128)}', space=vmem, size = 0x36000, scoped, tag = 'scratch operand']
  #allocation3 [shape = 'f32[128,16]{1,0:T(8,128)}', space=vmem, size = 0x10000, scoped, tag = 'scratch operand']
  %s0 = inlined_call_operand.vmem [shape: f32[2,1024,32], index: 0, kind: input, shape index: {}]
  %s1 = inlined_call_operand.vmem [shape: f32[32,32], index: 1, kind: input, shape index: {}]
  %s2 = inlined_call_operand.vmem [shape: f32[1,32], index: 2, kind: input, shape index: {}]
  %s3 = inlined_call_operand.vmem [shape: f32[288,16], index: 3, kind: input, shape index: {}]
  %s4 = inlined_call_operand.vmem [shape: f32[1,16], index: 4, kind: input, shape index: {}]
  %s5 = inlined_call_operand.vmem [shape: f32[16,128], index: 5, kind: input, shape index: {}]
  %s6 = inlined_call_operand.vmem [shape: f32[1,128], index: 6, kind: input, shape index: {}]
  %s7 = inlined_call_operand.vmem [shape: f32[2,64,128], index: 7, kind: output, shape index: {}]
  %s8 = sld [smem:[#allocation0]]
  $region61: #{mynet_forward.1} parent=0
    _
  %s10 = ssub.s32 1, %s8
  %s11 = scalar_select 0, %s10, %s8
  loop: start=0, step=1, limit=4
  $region2: #{mynet_forward.1} parent=0 // loop_pre_header
    _
  $region3: #{mynet_forward.1} parent=0 // loop_header
    %s13 = sphi 0, %s17
    %p14 = scmp.ge.s32.totalorder %s13, 4
    %s23 = sphi 0, %s25
    %s26 = sphi 0, %s23
    %s27 = sphi 0, %s26
    %s43 = sphi 0, %s27
    %s47 = sphi 0, %s47
    %s49 = sphi 0, %s47
    %s50 = sphi 0, %s49
    %s64 = sphi 0, %s50
    %s68 = sphi 0, %s68
    %s70 = sphi 0, %s68
    %s71 = sphi 0, %s70
    %s85 = sphi 0, %s71
    %s89 = sphi 0, %s89
    %s91 = sphi 0, %s89
    %s92 = sphi 0, %s91
    %s106 = sphi 0, %s92
    %s110 = sphi 0, %s110
    %s112 = sphi 0, %s110
    %s113 = sphi 0, %s112
    %s127 = sphi 0, %s113
    %s131 = sphi 0, %s131
    %s133 = sphi 0, %s131
    %s134 = sphi 0, %s133
    %s148 = sphi 0, %s134
    %s152 = sphi 0, %s152
    %s154 = sphi 0, %s152
    %s155 = sphi 0, %s154
    %s169 = sphi 0, %s155
    %s175 = sphi 0, %s177
    %s178 = sphi 0, %s175
    %s179 = sphi 0, %s178
    %s195 = sphi 0, %s179
  $region4: #{mynet_forward.1} parent=0 // loop_header_branch
    %16 = sbr.rel (%p14) target = $region8
  $region5: #{mynet_forward.1} parent=0 // loop_body
    %s18 = ssub.s32 %s13, 1
    %s19 = ssub.s32 %s13, 2
    %s20 = sadd.s32 %s13, 1
    %s21 = ssub.s32 %s13, %s20
    %p22 = scmp.eq.s32.totalorder %s21, 0
    %s24 = sadd.s32 %s23, 1
    %s25 = scalar_select %p22, %s23, %s24
    %p28 = pneg %p22
    %p29 = scmp.eq.s32.totalorder %s13, 1
    %p30 = por %p28, %p29
    %p31 = scmp.ne.s32.totalorder %s23, %s26
    %p32 = scmp.eq.s32.totalorder %s13, 0
    %p33 = por %p31, %p32
    %p34 = scmp.ne.s32.totalorder %s23, %s26
    %p35 = scmp.eq.s32.totalorder %s18, 1
    %p36 = por %p34, %p35
    %p37 = scmp.ne.s32.totalorder %s26, %s27
    %p38 = scmp.eq.s32.totalorder %s18, 0
    %p39 = por %p37, %p38
    %p40 = scmp.ne.s32.totalorder %s26, %s27
    %p41 = scmp.eq.s32.totalorder %s19, 1
    %p42 = por %p40, %p41
    %p44 = scmp.ne.s32.totalorder %s27, %s43
    %p45 = scmp.eq.s32.totalorder %s19, 0
    %p46 = por %p44, %p45
    %s48 = sadd.s32 %s47, 1
    %p51 = scmp.eq.s32.totalorder %s13, 1
    %p52 = scmp.ne.s32.totalorder %s47, %s49
    %p53 = scmp.eq.s32.totalorder %s13, 0
    %p54 = por %p52, %p53
    %p55 = scmp.ne.s32.totalorder %s47, %s49
    %p56 = scmp.eq.s32.totalorder %s18, 1
    %p57 = por %p55, %p56
    %p58 = scmp.ne.s32.totalorder %s49, %s50
    %p59 = scmp.eq.s32.totalorder %s18, 0
    %p60 = por %p58, %p59
    %p61 = scmp.ne.s32.totalorder %s49, %s50
    %p62 = scmp.eq.s32.totalorder %s19, 1
    %p63 = por %p61, %p62
    %p65 = scmp.ne.s32.totalorder %s50, %s64
    %p66 = scmp.eq.s32.totalorder %s19, 0
    %p67 = por %p65, %p66
    %s69 = sadd.s32 %s68, 1
    %p72 = scmp.eq.s32.totalorder %s13, 1
    %p73 = scmp.ne.s32.totalorder %s68, %s70
    %p74 = scmp.eq.s32.totalorder %s13, 0
    %p75 = por %p73, %p74
    %p76 = scmp.ne.s32.totalorder %s68, %s70
    %p77 = scmp.eq.s32.totalorder %s18, 1
    %p78 = por %p76, %p77
    %p79 = scmp.ne.s32.totalorder %s70, %s71
    %p80 = scmp.eq.s32.totalorder %s18, 0
    %p81 = por %p79, %p80
    %p82 = scmp.ne.s32.totalorder %s70, %s71
    %p83 = scmp.eq.s32.totalorder %s19, 1
    %p84 = por %p82, %p83
    %p86 = scmp.ne.s32.totalorder %s71, %s85
    %p87 = scmp.eq.s32.totalorder %s19, 0
    %p88 = por %p86, %p87
    %s90 = sadd.s32 %s89, 1
    %p93 = scmp.eq.s32.totalorder %s13, 1
    %p94 = scmp.ne.s32.totalorder %s89, %s91
    %p95 = scmp.eq.s32.totalorder %s13, 0
    %p96 = por %p94, %p95
    %p97 = scmp.ne.s32.totalorder %s89, %s91
    %p98 = scmp.eq.s32.totalorder %s18, 1
    %p99 = por %p97, %p98
    %p100 = scmp.ne.s32.totalorder %s91, %s92
    %p101 = scmp.eq.s32.totalorder %s18, 0
    %p102 = por %p100, %p101
    %p103 = scmp.ne.s32.totalorder %s91, %s92
    %p104 = scmp.eq.s32.totalorder %s19, 1
    %p105 = por %p103, %p104
    %p107 = scmp.ne.s32.totalorder %s92, %s106
    %p108 = scmp.eq.s32.totalorder %s19, 0
    %p109 = por %p107, %p108
    %s111 = sadd.s32 %s110, 1
    %p114 = scmp.eq.s32.totalorder %s13, 1
    %p115 = scmp.ne.s32.totalorder %s110, %s112
    %p116 = scmp.eq.s32.totalorder %s13, 0
    %p117 = por %p115, %p116
    %p118 = scmp.ne.s32.totalorder %s110, %s112
    %p119 = scmp.eq.s32.totalorder %s18, 1
    %p120 = por %p118, %p119
    %p121 = scmp.ne.s32.totalorder %s112, %s113
    %p122 = scmp.eq.s32.totalorder %s18, 0
    %p123 = por %p121, %p122
    %p124 = scmp.ne.s32.totalorder %s112, %s113
    %p125 = scmp.eq.s32.totalorder %s19, 1
    %p126 = por %p124, %p125
    %p128 = scmp.ne.s32.totalorder %s113, %s127
    %p129 = scmp.eq.s32.totalorder %s19, 0
    %p130 = por %p128, %p129
    %s132 = sadd.s32 %s131, 1
    %p135 = scmp.eq.s32.totalorder %s13, 1
    %p136 = scmp.ne.s32.totalorder %s131, %s133
    %p137 = scmp.eq.s32.totalorder %s13, 0
    %p138 = por %p136, %p137
    %p139 = scmp.ne.s32.totalorder %s131, %s133
    %p140 = scmp.eq.s32.totalorder %s18, 1
    %p141 = por %p139, %p140
    %p142 = scmp.ne.s32.totalorder %s133, %s134
    %p143 = scmp.eq.s32.totalorder %s18, 0
    %p144 = por %p142, %p143
    %p145 = scmp.ne.s32.totalorder %s133, %s134
    %p146 = scmp.eq.s32.totalorder %s19, 1
    %p147 = por %p145, %p146
    %p149 = scmp.ne.s32.totalorder %s134, %s148
    %p150 = scmp.eq.s32.totalorder %s19, 0
    %p151 = por %p149, %p150
    %s153 = sadd.s32 %s152, 1
    %p156 = scmp.eq.s32.totalorder %s13, 1
    %p157 = scmp.ne.s32.totalorder %s152, %s154
    %p158 = scmp.eq.s32.totalorder %s13, 0
    %p159 = por %p157, %p158
    %p160 = scmp.ne.s32.totalorder %s152, %s154
    %p161 = scmp.eq.s32.totalorder %s18, 1
    %p162 = por %p160, %p161
    %p163 = scmp.ne.s32.totalorder %s154, %s155
    %p164 = scmp.eq.s32.totalorder %s18, 0
    %p165 = por %p163, %p164
    %p166 = scmp.ne.s32.totalorder %s154, %s155
    %p167 = scmp.eq.s32.totalorder %s19, 1
    %p168 = por %p166, %p167
    %p170 = scmp.ne.s32.totalorder %s155, %s169
    %p171 = scmp.eq.s32.totalorder %s19, 0
    %p172 = por %p170, %p171
    %s173 = ssub.s32 %s13, %s20
    %p174 = scmp.eq.s32.totalorder %s173, 0
    %s176 = sadd.s32 %s175, 1
    %s177 = scalar_select %p174, %s175, %s176
    %p180 = pneg %p174
    %p181 = scmp.eq.s32.totalorder %s13, 1
    %p182 = por %p180, %p181
    %p183 = scmp.ne.s32.totalorder %s175, %s178
    %p184 = scmp.eq.s32.totalorder %s13, 0
    %p185 = por %p183, %p184
    %p186 = scmp.ne.s32.totalorder %s175, %s178
    %p187 = scmp.eq.s32.totalorder %s18, 1
    %p188 = por %p186, %p187
    %p189 = scmp.ne.s32.totalorder %s178, %s179
    %p190 = scmp.eq.s32.totalorder %s18, 0
    %p191 = por %p189, %p190
    %p192 = scmp.ne.s32.totalorder %s178, %s179
    %p193 = scmp.eq.s32.totalorder %s19, 1
    %p194 = por %p192, %p193
    %p196 = scmp.ne.s32.totalorder %s179, %s195
    %p197 = scmp.eq.s32.totalorder %s19, 0
    %p198 = por %p196, %p197
    %p199 = scmp.le.s32.totalorder 1, %s13
    %p200 = scmp.lt.s32.totalorder %s13, 3
    %p201 = pnand %p199, %p200
    %p202 = pneg %p201
    // Predicated region
    $region9: #{mynet_forward.1} parent=5 // pred_check
      _
    $region10: #{mynet_forward.1} parent=5 // pred_check_branch
      %204 = sbr.rel (%p201) target = $region12
    $region11: #{mynet_forward.1} parent=5 // pred_region
      %s205 = ssub.s32 %s13, 1
      // Predicated region
      $region13: #{mynet_forward.1} parent=11 // pred_check
        %p206 = pneg %p60
      $region14: #{mynet_forward.1} parent=11 // pred_check_branch
        %208 = sbr.rel (%p206) target = $region16
      $region15: #{mynet_forward.1} parent=11 // pred_region
        _
      $region16: #{mynet_forward.1} parent=11 // pred_fallthru
        _
      // Predicated region
      $region17: #{mynet_forward.1} parent=11 // pred_check
        %p209 = pneg %p81
      $region18: #{mynet_forward.1} parent=11 // pred_check_branch
        %211 = sbr.rel (%p209) target = $region20
      $region19: #{mynet_forward.1} parent=11 // pred_region
        _
      $region20: #{mynet_forward.1} parent=11 // pred_fallthru
        _
      // Predicated region
      $region21: #{mynet_forward.1} parent=11 // pred_check
        %p212 = pneg %p102
      $region22: #{mynet_forward.1} parent=11 // pred_check_branch
        %214 = sbr.rel (%p212) target = $region24
      $region23: #{mynet_forward.1} parent=11 // pred_region
        _
      $region24: #{mynet_forward.1} parent=11 // pred_fallthru
        _
      // Predicated region
      $region25: #{mynet_forward.1} parent=11 // pred_check
        %p215 = pneg %p123
      $region26: #{mynet_forward.1} parent=11 // pred_check_branch
        %217 = sbr.rel (%p215) target = $region28
      $region27: #{mynet_forward.1} parent=11 // pred_region
        _
      $region28: #{mynet_forward.1} parent=11 // pred_fallthru
        _
      // Predicated region
      $region29: #{mynet_forward.1} parent=11 // pred_check
        %p218 = pneg %p144
      $region30: #{mynet_forward.1} parent=11 // pred_check_branch
        %220 = sbr.rel (%p218) target = $region32
      $region31: #{mynet_forward.1} parent=11 // pred_region
        _
      $region32: #{mynet_forward.1} parent=11 // pred_fallthru
        _
      // Predicated region
      $region33: #{mynet_forward.1} parent=11 // pred_check
        %p221 = pneg %p165
      $region34: #{mynet_forward.1} parent=11 // pred_check_branch
        %223 = sbr.rel (%p221) target = $region36
      $region35: #{mynet_forward.1} parent=11 // pred_region
        _
      $region36: #{mynet_forward.1} parent=11 // pred_fallthru
        _
    $region12: #{mynet_forward.1} parent=5 // pred_fallthru
      _
    %p224 = scmp.lt.s32.totalorder %s13, 2
    // Predicated region
    $region37: #{mynet_forward.1} parent=5 // pred_check
      %p225 = pneg %p224
    $region38: #{mynet_forward.1} parent=5 // pred_check_branch
      %227 = sbr.rel (%p225) target = $region40
    $region39: #{mynet_forward.1} parent=5 // pred_region
      // Predicated region
      $region41: #{mynet_forward.1} parent=39 // pred_check
        %p228 = pneg %p33
      $region42: #{mynet_forward.1} parent=39 // pred_check_branch
        %230 = sbr.rel (%p228) target = $region44
      $region43: #{mynet_forward.1} parent=39 // pred_region
        %p231 = scmp.lt.s32.totalorder %s13, 1
        %s232 = scalar_select %p231, %s13, 1
        %s233 = smul.addr %s232, 128
        %s234 = smul.addr %s233, 8
        %s235 = scalar_lea.vmem %s0, %s234
      $region44: #{mynet_forward.1} parent=39 // pred_fallthru
        _
    $region40: #{mynet_forward.1} parent=5 // pred_fallthru
      _
    %p236 = scmp.le.s32.totalorder 1, %s13
    %p237 = scmp.lt.s32.totalorder %s13, 3
    %p238 = pnand %p236, %p237
    %p239 = pneg %p238
    // Predicated region
    $region45: #{mynet_forward.1} parent=5 // pred_check
      _
    $region46: #{mynet_forward.1} parent=5 // pred_check_branch
      %241 = sbr.rel (%p238) target = $region48
    $region47: #{mynet_forward.1} parent=5 // pred_region
      %s242 = ssub.s32 %s13, 1
      %p243 = scmp.lt.s32.totalorder %s18, 1
      %s244 = scalar_select %p243, %s18, 1
      %s245 = smul.addr %s244, 128
      %s246 = smul.addr %s245, 8
      %s247 = scalar_lea.vmem %s0, %s246
      %p248 = pneg %p39
      %p249 = pneg %p36
      %p250 = pneg %p60
      %p251 = pneg %p57
      %p252 = pneg %p81
      %p253 = pneg %p78
      %p254 = pneg %p102
      %p255 = pneg %p99
      %p256 = pneg %p123
      %p257 = pneg %p120
      %p258 = pneg %p144
      %p259 = pneg %p141
      %p260 = pneg %p165
      %p261 = pneg %p162
      %p262 = pneg %p191
      %p263 = pneg %p188
      %p264 = scmp.lt.s32.totalorder %s18, 1
      %s265 = scalar_select %p264, %s18, 1
      %s266 = smul.addr %s265, 8
      %s267 = smul.addr %s266, 8
      %s268 = scalar_lea.vmem %s7, %s267
      %p269 = scmp.lt.s32.totalorder %s18, 1
      %s270 = scalar_select %p269, %s18, 1
      %s271 = smul.addr %s270, 128
      %s272 = smul.addr %s271, 8
      %s273 = scalar_lea.vmem %s0, %s272
      %p274 = scmp.lt.s32.totalorder %s18, 1
      %s275 = scalar_select %p274, %s18, 1
      %s276 = smul.addr %s275, 8
      %s277 = smul.addr %s276, 8
      %s278 = scalar_lea.vmem %s7, %s277
      %v279 = vld [vmem:[%s273] sm:$0xff]
      %v280 = vld [vmem:[%s273 + $0x8] sm:$0xff]
      %v281 = vld [vmem:[%s273 + $0x10] sm:$0xff]
      %v282 = vld [vmem:[%s273 + $0x18] sm:$0xff]
      %v283 = vld [vmem:[%s273 + $0x20] sm:$0xff]
      %v284 = vld [vmem:[%s273 + $0x28] sm:$0xff]
      %v285 = vld [vmem:[%s273 + $0x30] sm:$0xff]
      %v286 = vld [vmem:[%s273 + $0x38] sm:$0xff]
      %v287 = vld [vmem:[%s273 + $0x40] sm:$0xff]
      %v288 = vld [vmem:[%s273 + $0x48] sm:$0xff]
      %v289 = vld [vmem:[%s273 + $0x50] sm:$0xff]
      %v290 = vld [vmem:[%s273 + $0x58] sm:$0xff]
      %v291 = vld [vmem:[%s273 + $0x60] sm:$0xff]
      %v292 = vld [vmem:[%s273 + $0x68] sm:$0xff]
      %v293 = vld [vmem:[%s273 + $0x70] sm:$0xff]
      %v294 = vld [vmem:[%s273 + $0x78] sm:$0xff]
      %v295 = vld [vmem:[%s273 + $0x80] sm:$0xff]
      %v296 = vld [vmem:[%s273 + $0x88] sm:$0xff]
      %v297 = vld [vmem:[%s273 + $0x90] sm:$0xff]
      %v298 = vld [vmem:[%s273 + $0x98] sm:$0xff]
      %v299 = vld [vmem:[%s273 + $0xa0] sm:$0xff]
      %v300 = vld [vmem:[%s273 + $0xa8] sm:$0xff]
      %v301 = vld [vmem:[%s273 + $0xb0] sm:$0xff]
      %v302 = vld [vmem:[%s273 + $0xb8] sm:$0xff]
      %v303 = vld [vmem:[%s273 + $0xc0] sm:$0xff]
      %v304 = vld [vmem:[%s273 + $0xc8] sm:$0xff]
      %v305 = vld [vmem:[%s273 + $0xd0] sm:$0xff]
      %v306 = vld [vmem:[%s273 + $0xd8] sm:$0xff]
      %v307 = vld [vmem:[%s273 + $0xe0] sm:$0xff]
      %v308 = vld [vmem:[%s273 + $0xe8] sm:$0xff]
      %v309 = vld [vmem:[%s273 + $0xf0] sm:$0xff]
      %v310 = vld [vmem:[%s273 + $0xf8] sm:$0xff]
      %v311 = vld [vmem:[%s273 + $0x100] sm:$0xff]
      %v312 = vld [vmem:[%s273 + $0x108] sm:$0xff]
      %v313 = vld [vmem:[%s273 + $0x110] sm:$0xff]
      %v314 = vld [vmem:[%s273 + $0x118] sm:$0xff]
      %v315 = vld [vmem:[%s273 + $0x120] sm:$0xff]
      %v316 = vld [vmem:[%s273 + $0x128] sm:$0xff]
      %v317 = vld [vmem:[%s273 + $0x130] sm:$0xff]
      %v318 = vld [vmem:[%s273 + $0x138] sm:$0xff]
      %v319 = vld [vmem:[%s273 + $0x140] sm:$0xff]
      %v320 = vld [vmem:[%s273 + $0x148] sm:$0xff]
      %v321 = vld [vmem:[%s273 + $0x150] sm:$0xff]
      %v322 = vld [vmem:[%s273 + $0x158] sm:$0xff]
      %v323 = vld [vmem:[%s273 + $0x160] sm:$0xff]
      %v324 = vld [vmem:[%s273 + $0x168] sm:$0xff]
      %v325 = vld [vmem:[%s273 + $0x170] sm:$0xff]
      %v326 = vld [vmem:[%s273 + $0x178] sm:$0xff]
      %v327 = vld [vmem:[%s273 + $0x180] sm:$0xff]
      %v328 = vld [vmem:[%s273 + $0x188] sm:$0xff]
      %v329 = vld [vmem:[%s273 + $0x190] sm:$0xff]
      %v330 = vld [vmem:[%s273 + $0x198] sm:$0xff]
      %v331 = vld [vmem:[%s273 + $0x1a0] sm:$0xff]
      %v332 = vld [vmem:[%s273 + $0x1a8] sm:$0xff]
      %v333 = vld [vmem:[%s273 + $0x1b0] sm:$0xff]
      %v334 = vld [vmem:[%s273 + $0x1b8] sm:$0xff]
      %v335 = vld [vmem:[%s273 + $0x1c0] sm:$0xff]
      %v336 = vld [vmem:[%s273 + $0x1c8] sm:$0xff]
      %v337 = vld [vmem:[%s273 + $0x1d0] sm:$0xff]
      %v338 = vld [vmem:[%s273 + $0x1d8] sm:$0xff]
      %v339 = vld [vmem:[%s273 + $0x1e0] sm:$0xff]
      %v340 = vld [vmem:[%s273 + $0x1e8] sm:$0xff]
      %v341 = vld [vmem:[%s273 + $0x1f0] sm:$0xff]
      %v342 = vld [vmem:[%s273 + $0x1f8] sm:$0xff]
      %v343 = vld [vmem:[%s273 + $0x200] sm:$0xff]
      %v344 = vld [vmem:[%s273 + $0x208] sm:$0xff]
      %v345 = vld [vmem:[%s273 + $0x210] sm:$0xff]
      %v346 = vld [vmem:[%s273 + $0x218] sm:$0xff]
      %v347 = vld [vmem:[%s273 + $0x220] sm:$0xff]
      %v348 = vld [vmem:[%s273 + $0x228] sm:$0xff]
      %v349 = vld [vmem:[%s273 + $0x230] sm:$0xff]
      %v350 = vld [vmem:[%s273 + $0x238] sm:$0xff]
      %v351 = vld [vmem:[%s273 + $0x240] sm:$0xff]
      %v352 = vld [vmem:[%s273 + $0x248] sm:$0xff]
      %v353 = vld [vmem:[%s273 + $0x250] sm:$0xff]
      %v354 = vld [vmem:[%s273 + $0x258] sm:$0xff]
      %v355 = vld [vmem:[%s273 + $0x260] sm:$0xff]
      %v356 = vld [vmem:[%s273 + $0x268] sm:$0xff]
      %v357 = vld [vmem:[%s273 + $0x270] sm:$0xff]
      %v358 = vld [vmem:[%s273 + $0x278] sm:$0xff]
      %v359 = vld [vmem:[%s273 + $0x280] sm:$0xff]
      %v360 = vld [vmem:[%s273 + $0x288] sm:$0xff]
      %v361 = vld [vmem:[%s273 + $0x290] sm:$0xff]
      %v362 = vld [vmem:[%s273 + $0x298] sm:$0xff]
      %v363 = vld [vmem:[%s273 + $0x2a0] sm:$0xff]
      %v364 = vld [vmem:[%s273 + $0x2a8] sm:$0xff]
      %v365 = vld [vmem:[%s273 + $0x2b0] sm:$0xff]
      %v366 = vld [vmem:[%s273 + $0x2b8] sm:$0xff]
      %v367 = vld [vmem:[%s273 + $0x2c0] sm:$0xff]
      %v368 = vld [vmem:[%s273 + $0x2c8] sm:$0xff]
      %v369 = vld [vmem:[%s273 + $0x2d0] sm:$0xff]
      %v370 = vld [vmem:[%s273 + $0x2d8] sm:$0xff]
      %v371 = vld [vmem:[%s273 + $0x2e0] sm:$0xff]
      %v372 = vld [vmem:[%s273 + $0x2e8] sm:$0xff]
      %v373 = vld [vmem:[%s273 + $0x2f0] sm:$0xff]
      %v374 = vld [vmem:[%s273 + $0x2f8] sm:$0xff]
      %v375 = vld [vmem:[%s273 + $0x300] sm:$0xff]
      %v376 = vld [vmem:[%s273 + $0x308] sm:$0xff]
      %v377 = vld [vmem:[%s273 + $0x310] sm:$0xff]
      %v378 = vld [vmem:[%s273 + $0x318] sm:$0xff]
      %v379 = vld [vmem:[%s273 + $0x320] sm:$0xff]
      %v380 = vld [vmem:[%s273 + $0x328] sm:$0xff]
      %v381 = vld [vmem:[%s273 + $0x330] sm:$0xff]
      %v382 = vld [vmem:[%s273 + $0x338] sm:$0xff]
      %v383 = vld [vmem:[%s273 + $0x340] sm:$0xff]
      %v384 = vld [vmem:[%s273 + $0x348] sm:$0xff]
      %v385 = vld [vmem:[%s273 + $0x350] sm:$0xff]
      %v386 = vld [vmem:[%s273 + $0x358] sm:$0xff]
      %v387 = vld [vmem:[%s273 + $0x360] sm:$0xff]
      %v388 = vld [vmem:[%s273 + $0x368] sm:$0xff]
      %v389 = vld [vmem:[%s273 + $0x370] sm:$0xff]
      %v390 = vld [vmem:[%s273 + $0x378] sm:$0xff]
      %v391 = vld [vmem:[%s273 + $0x380] sm:$0xff]
      %v392 = vld [vmem:[%s273 + $0x388] sm:$0xff]
      %v393 = vld [vmem:[%s273 + $0x390] sm:$0xff]
      %v394 = vld [vmem:[%s273 + $0x398] sm:$0xff]
      %v395 = vld [vmem:[%s273 + $0x3a0] sm:$0xff]
      %v396 = vld [vmem:[%s273 + $0x3a8] sm:$0xff]
      %v397 = vld [vmem:[%s273 + $0x3b0] sm:$0xff]
      %v398 = vld [vmem:[%s273 + $0x3b8] sm:$0xff]
      %v399 = vld [vmem:[%s273 + $0x3c0] sm:$0xff]
      %v400 = vld [vmem:[%s273 + $0x3c8] sm:$0xff]
      %v401 = vld [vmem:[%s273 + $0x3d0] sm:$0xff]
      %v402 = vld [vmem:[%s273 + $0x3d8] sm:$0xff]
      %v403 = vld [vmem:[%s273 + $0x3e0] sm:$0xff]
      %v404 = vld [vmem:[%s273 + $0x3e8] sm:$0xff]
      %v405 = vld [vmem:[%s273 + $0x3f0] sm:$0xff]
      %v406 = vld [vmem:[%s273 + $0x3f8] sm:$0xff]
      %v407 = vld [vmem:[%s1] sm:$0xff]
      %v408 = vld [vmem:[%s1 + $0x8] sm:$0xff]
      %v409 = vld [vmem:[%s1 + $0x10] sm:$0xff]
      %v410 = vld [vmem:[%s1 + $0x18] sm:$0xff]
      %v411 = vld [vmem:[%s2] sm:$0x1]
      %v413 = vlaneseq
      %v414 = vshrl.u32 %v413, 7
      %v415 = vsub.s32 0, %v414
      %v416 = vrot.slane %v411, %v415
      %vm418 = vcmask 261120
      %v420 = vsel %vm418, %v279, 0
      %v423 = vsel %vm418, %v280, 0
      %v426 = vsel %vm418, %v281, 0
      %v429 = vsel %vm418, %v282, 0
      %v432 = vsel %vm418, %v283, 0
      %v435 = vsel %vm418, %v284, 0
      %v438 = vsel %vm418, %v285, 0
      %v441 = vsel %vm418, %v286, 0
      %v444 = vsel %vm418, %v287, 0
      %v447 = vsel %vm418, %v288, 0
      %v450 = vsel %vm418, %v289, 0
      %v453 = vsel %vm418, %v290, 0
      %v456 = vsel %vm418, %v291, 0
      %v459 = vsel %vm418, %v292, 0
      %v462 = vsel %vm418, %v293, 0
      %v465 = vsel %vm418, %v294, 0
      %v468 = vsel %vm418, %v295, 0
      %v471 = vsel %vm418, %v296, 0
      %v474 = vsel %vm418, %v297, 0
      %v477 = vsel %vm418, %v298, 0
      %v480 = vsel %vm418, %v299, 0
      %v483 = vsel %vm418, %v300, 0
      %v486 = vsel %vm418, %v301, 0
      %v489 = vsel %vm418, %v302, 0
      %v492 = vsel %vm418, %v303, 0
      %v495 = vsel %vm418, %v304, 0
      %v498 = vsel %vm418, %v305, 0
      %v501 = vsel %vm418, %v306, 0
      %v504 = vsel %vm418, %v307, 0
      %v507 = vsel %vm418, %v308, 0
      %v510 = vsel %vm418, %v309, 0
      %v513 = vsel %vm418, %v310, 0
      %v516 = vsel %vm418, %v311, 0
      %v519 = vsel %vm418, %v312, 0
      %v522 = vsel %vm418, %v313, 0
      %v525 = vsel %vm418, %v314, 0
      %v528 = vsel %vm418, %v315, 0
      %v531 = vsel %vm418, %v316, 0
      %v534 = vsel %vm418, %v317, 0
      %v537 = vsel %vm418, %v318, 0
      %v540 = vsel %vm418, %v319, 0
      %v543 = vsel %vm418, %v320, 0
      %v546 = vsel %vm418, %v321, 0
      %v549 = vsel %vm418, %v322, 0
      %v552 = vsel %vm418, %v323, 0
      %v555 = vsel %vm418, %v324, 0
      %v558 = vsel %vm418, %v325, 0
      %v561 = vsel %vm418, %v326, 0
      %v564 = vsel %vm418, %v327, 0
      %v567 = vsel %vm418, %v328, 0
      %v570 = vsel %vm418, %v329, 0
      %v573 = vsel %vm418, %v330, 0
      %v576 = vsel %vm418, %v331, 0
      %v579 = vsel %vm418, %v332, 0
      %v582 = vsel %vm418, %v333, 0
      %v585 = vsel %vm418, %v334, 0
      %v588 = vsel %vm418, %v335, 0
      %v591 = vsel %vm418, %v336, 0
      %v594 = vsel %vm418, %v337, 0
      %v597 = vsel %vm418, %v338, 0
      %v600 = vsel %vm418, %v339, 0
      %v603 = vsel %vm418, %v340, 0
      %v606 = vsel %vm418, %v341, 0
      %v609 = vsel %vm418, %v342, 0
      %v612 = vsel %vm418, %v343, 0
      %v615 = vsel %vm418, %v344, 0
      %v618 = vsel %vm418, %v345, 0
      %v621 = vsel %vm418, %v346, 0
      %v624 = vsel %vm418, %v347, 0
      %v627 = vsel %vm418, %v348, 0
      %v630 = vsel %vm418, %v349, 0
      %v633 = vsel %vm418, %v350, 0
      %v636 = vsel %vm418, %v351, 0
      %v639 = vsel %vm418, %v352, 0
      %v642 = vsel %vm418, %v353, 0
      %v645 = vsel %vm418, %v354, 0
      %v648 = vsel %vm418, %v355, 0
      %v651 = vsel %vm418, %v356, 0
      %v654 = vsel %vm418, %v357, 0
      %v657 = vsel %vm418, %v358, 0
      %v660 = vsel %vm418, %v359, 0
      %v663 = vsel %vm418, %v360, 0
      %v666 = vsel %vm418, %v361, 0
      %v669 = vsel %vm418, %v362, 0
      %v672 = vsel %vm418, %v363, 0
      %v675 = vsel %vm418, %v364, 0
      %v678 = vsel %vm418, %v365, 0
      %v681 = vsel %vm418, %v366, 0
      %v684 = vsel %vm418, %v367, 0
      %v687 = vsel %vm418, %v368, 0
      %v690 = vsel %vm418, %v369, 0
      %v693 = vsel %vm418, %v370, 0
      %v696 = vsel %vm418, %v371, 0
      %v699 = vsel %vm418, %v372, 0
      %v702 = vsel %vm418, %v373, 0
      %v705 = vsel %vm418, %v374, 0
      %v708 = vsel %vm418, %v375, 0
      %v711 = vsel %vm418, %v376, 0
      %v714 = vsel %vm418, %v377, 0
      %v717 = vsel %vm418, %v378, 0
      %v720 = vsel %vm418, %v379, 0
      %v723 = vsel %vm418, %v380, 0
      %v726 = vsel %vm418, %v381, 0
      %v729 = vsel %vm418, %v382, 0
      %v732 = vsel %vm418, %v383, 0
      %v735 = vsel %vm418, %v384, 0
      %v738 = vsel %vm418, %v385, 0
      %v741 = vsel %vm418, %v386, 0
      %v744 = vsel %vm418, %v387, 0
      %v747 = vsel %vm418, %v388, 0
      %v750 = vsel %vm418, %v389, 0
      %v753 = vsel %vm418, %v390, 0
      %v756 = vsel %vm418, %v391, 0
      %v759 = vsel %vm418, %v392, 0
      %v762 = vsel %vm418, %v393, 0
      %v765 = vsel %vm418, %v394, 0
      %v768 = vsel %vm418, %v395, 0
      %v771 = vsel %vm418, %v396, 0
      %v774 = vsel %vm418, %v397, 0
      %v777 = vsel %vm418, %v398, 0
      %v780 = vsel %vm418, %v399, 0
      %v783 = vsel %vm418, %v400, 0
      %v786 = vsel %vm418, %v401, 0
      %v789 = vsel %vm418, %v402, 0
      %v792 = vsel %vm418, %v403, 0
      %v795 = vsel %vm418, %v404, 0
      %v798 = vsel %vm418, %v405, 0
      %v801 = vsel %vm418, %v406, 0
      %803 = vmatprep.subr.mxu0 0.0
      %804 = vmatpush1.msra.mxu0 0.0
      %805 = vmatprep.subr.mxu0 0.0
      %806 = vmatpush1.msra.mxu0 0.0
      %807 = vmatprep.subr.mxu0 0.0
      %808 = vmatpush1.msra.mxu0 0.0
      %809 = vmatprep.subr.mxu0 0.0
      %810 = vmatpush1.msra.mxu0 0.0
      %811 = vmatprep.subr.mxu0 0.0
      %812 = vmatpush1.msra.mxu0 0.0
      %813 = vmatprep.subr.mxu0 0.0
      %814 = vmatpush1.msra.mxu0 0.0
      %815 = vmatprep.subr.mxu0 0.0
      %816 = vmatpush1.msra.mxu0 0.0
      %817 = vmatprep.subr.mxu0 0.0
      %818 = vmatpush1.msra.mxu0 0.0
      %819 = vmatprep.subr.mxu0 0.0
      %820 = vmatpush1.msra.mxu0 0.0
      %821 = vmatprep.subr.mxu0 0.0
      %822 = vmatpush1.msra.mxu0 0.0
      %823 = vmatprep.subr.mxu0 0.0
      %824 = vmatpush1.msra.mxu0 0.0
      %825 = vmatprep.subr.mxu0 0.0
      %826 = vmatpush1.msra.mxu0 0.0
      %827 = vmatprep.subr.mxu0 0.0
      %828 = vmatpush1.msra.mxu0 %v410
      %829 = vmatprep.subr.mxu0 0.0
      %830 = vmatpush1.msra.mxu0 %v409
      %831 = vmatprep.subr.mxu0 0.0
      %832 = vmatpush1.msra.mxu0 %v408
      %833 = vmatprep.subr.mxu0 0.0
      %834 = vmatpush1.msra.mxu0 %v407
      %835 = vmatprep.subr.mxu0 0.0
      %836 = vmatpush2.msra.mxu0 0.0
      %837 = vmatprep.subr.mxu0 0.0
      %838 = vmatpush2.msra.mxu0 0.0
      %839 = vmatprep.subr.mxu0 0.0
      %840 = vmatpush2.msra.mxu0 0.0
      %841 = vmatprep.subr.mxu0 0.0
      %842 = vmatpush2.msra.mxu0 0.0
      %843 = vmatprep.subr.mxu0 0.0
      %844 = vmatpush2.msra.mxu0 0.0
      %845 = vmatprep.subr.mxu0 0.0
      %846 = vmatpush2.msra.mxu0 0.0
      %847 = vmatprep.subr.mxu0 0.0
      %848 = vmatpush2.msra.mxu0 0.0
      %849 = vmatprep.subr.mxu0 0.0
      %850 = vmatpush2.msra.mxu0 0.0
      %851 = vmatprep.subr.mxu0 0.0
      %852 = vmatpush2.msra.mxu0 0.0
      %853 = vmatprep.subr.mxu0 0.0
      %854 = vmatpush2.msra.mxu0 0.0
      %855 = vmatprep.subr.mxu0 0.0
      %856 = vmatpush2.msra.mxu0 0.0
      %857 = vmatprep.subr.mxu0 0.0
      %858 = vmatpush2.msra.mxu0 0.0
      %859 = vmatprep.subr.mxu0 0.0
      %860 = vmatpush2.msra.mxu0 0.0
      %861 = vmatprep.subr.mxu0 0.0
      %862 = vmatpush2.msra.mxu0 0.0
      %863 = vmatprep.subr.mxu0 0.0
      %864 = vmatpush2.msra.mxu0 0.0
      %865 = vmatprep.subr.mxu0 0.0
      %866 = vmatpush2.msra.mxu0 0.0
      %867 = vmatprep.mubr.f32.mxu0 0.0
      %868 = vmatmul.mubr.f32.gmra.mxu0 %v420
      %v869 = vpop.f32.mrf.mxu0
      %v870 = vadd.f32 %v416, %v869
      %v871 = vpop.f32.mrf.mxu0
      %872 = vmatprep.mubr.f32.mxu0 0.0
      %873 = vmatmul.mubr.f32.gmra.mxu0 %v423
      %v874 = vpop.f32.mrf.mxu0
      %v875 = vadd.f32 %v416, %v874
      %v876 = vpop.f32.mrf.mxu0
      %877 = vmatprep.mubr.f32.mxu0 0.0
      %878 = vmatmul.mubr.f32.gmra.mxu0 %v426
      %v879 = vpop.f32.mrf.mxu0
      %v880 = vadd.f32 %v416, %v879
      %v881 = vpop.f32.mrf.mxu0
      %882 = vmatprep.mubr.f32.mxu0 0.0
      %883 = vmatmul.mubr.f32.gmra.mxu0 %v429
      %v884 = vpop.f32.mrf.mxu0
      %v885 = vadd.f32 %v416, %v884
      %v886 = vpop.f32.mrf.mxu0
      %887 = vmatprep.mubr.f32.mxu0 0.0
      %888 = vmatmul.mubr.f32.gmra.mxu0 %v432
      %v889 = vpop.f32.mrf.mxu0
      %v890 = vadd.f32 %v416, %v889
      %v891 = vpop.f32.mrf.mxu0
      %892 = vmatprep.mubr.f32.mxu0 0.0
      %893 = vmatmul.mubr.f32.gmra.mxu0 %v435
      %v894 = vpop.f32.mrf.mxu0
      %v895 = vadd.f32 %v416, %v894
      %v896 = vpop.f32.mrf.mxu0
      %897 = vmatprep.mubr.f32.mxu0 0.0
      %898 = vmatmul.mubr.f32.gmra.mxu0 %v438
      %v899 = vpop.f32.mrf.mxu0
      %v900 = vadd.f32 %v416, %v899
      %v901 = vpop.f32.mrf.mxu0
      %902 = vmatprep.mubr.f32.mxu0 0.0
      %903 = vmatmul.mubr.f32.gmra.mxu0 %v441
      %v904 = vpop.f32.mrf.mxu0
      %v905 = vadd.f32 %v416, %v904
      %v906 = vpop.f32.mrf.mxu0
      %907 = vmatprep.mubr.f32.mxu0 0.0
      %908 = vmatmul.mubr.f32.gmra.mxu0 %v444
      %v909 = vpop.f32.mrf.mxu0
      %v910 = vadd.f32 %v416, %v909
      %v911 = vpop.f32.mrf.mxu0
      %912 = vmatprep.mubr.f32.mxu0 0.0
      %913 = vmatmul.mubr.f32.gmra.mxu0 %v447
      %v914 = vpop.f32.mrf.mxu0
      %v915 = vadd.f32 %v416, %v914
      %v916 = vpop.f32.mrf.mxu0
      %917 = vmatprep.mubr.f32.mxu0 0.0
      %918 = vmatmul.mubr.f32.gmra.mxu0 %v450
      %v919 = vpop.f32.mrf.mxu0
      %v920 = vadd.f32 %v416, %v919
      %v921 = vpop.f32.mrf.mxu0
      %922 = vmatprep.mubr.f32.mxu0 0.0
      %923 = vmatmul.mubr.f32.gmra.mxu0 %v453
      %v924 = vpop.f32.mrf.mxu0
      %v925 = vadd.f32 %v416, %v924
      %v926 = vpop.f32.mrf.mxu0
      %927 = vmatprep.mubr.f32.mxu0 0.0
      %928 = vmatmul.mubr.f32.gmra.mxu0 %v456
      %v929 = vpop.f32.mrf.mxu0
      %v930 = vadd.f32 %v416, %v929
      %v931 = vpop.f32.mrf.mxu0
      %932 = vmatprep.mubr.f32.mxu0 0.0
      %933 = vmatmul.mubr.f32.gmra.mxu0 %v459
      %v934 = vpop.f32.mrf.mxu0
      %v935 = vadd.f32 %v416, %v934
      %v936 = vpop.f32.mrf.mxu0
      %937 = vmatprep.mubr.f32.mxu0 0.0
      %938 = vmatmul.mubr.f32.gmra.mxu0 %v462
      %v939 = vpop.f32.mrf.mxu0
      %v940 = vadd.f32 %v416, %v939
      %v941 = vpop.f32.mrf.mxu0
      %942 = vmatprep.mubr.f32.mxu0 0.0
      %943 = vmatmul.mubr.f32.gmra.mxu0 %v465
      %v944 = vpop.f32.mrf.mxu0
      %v945 = vadd.f32 %v416, %v944
      %v946 = vpop.f32.mrf.mxu0
      %947 = vmatprep.mubr.f32.mxu0 0.0
      %948 = vmatmul.mubr.f32.gmra.mxu0 %v468
      %v949 = vpop.f32.mrf.mxu0
      %v950 = vadd.f32 %v416, %v949
      %v951 = vpop.f32.mrf.mxu0
      %952 = vmatprep.mubr.f32.mxu0 0.0
      %953 = vmatmul.mubr.f32.gmra.mxu0 %v471
      %v954 = vpop.f32.mrf.mxu0
      %v955 = vadd.f32 %v416, %v954
      %v956 = vpop.f32.mrf.mxu0
      %957 = vmatprep.mubr.f32.mxu0 0.0
      %958 = vmatmul.mubr.f32.gmra.mxu0 %v474
      %v959 = vpop.f32.mrf.mxu0
      %v960 = vadd.f32 %v416, %v959
      %v961 = vpop.f32.mrf.mxu0
      %962 = vmatprep.mubr.f32.mxu0 0.0
      %963 = vmatmul.mubr.f32.gmra.mxu0 %v477
      %v964 = vpop.f32.mrf.mxu0
      %v965 = vadd.f32 %v416, %v964
      %v966 = vpop.f32.mrf.mxu0
      %967 = vmatprep.mubr.f32.mxu0 0.0
      %968 = vmatmul.mubr.f32.gmra.mxu0 %v480
      %v969 = vpop.f32.mrf.mxu0
      %v970 = vadd.f32 %v416, %v969
      %v971 = vpop.f32.mrf.mxu0
      %972 = vmatprep.mubr.f32.mxu0 0.0
      %973 = vmatmul.mubr.f32.gmra.mxu0 %v483
      %v974 = vpop.f32.mrf.mxu0
      %v975 = vadd.f32 %v416, %v974
      %v976 = vpop.f32.mrf.mxu0
      %977 = vmatprep.mubr.f32.mxu0 0.0
      %978 = vmatmul.mubr.f32.gmra.mxu0 %v486
      %v979 = vpop.f32.mrf.mxu0
      %v980 = vadd.f32 %v416, %v979
      %v981 = vpop.f32.mrf.mxu0
      %982 = vmatprep.mubr.f32.mxu0 0.0
      %983 = vmatmul.mubr.f32.gmra.mxu0 %v489
      %v984 = vpop.f32.mrf.mxu0
      %v985 = vadd.f32 %v416, %v984
      %v986 = vpop.f32.mrf.mxu0
      %987 = vmatprep.mubr.f32.mxu0 0.0
      %988 = vmatmul.mubr.f32.gmra.mxu0 %v492
      %v989 = vpop.f32.mrf.mxu0
      %v990 = vadd.f32 %v416, %v989
      %v991 = vpop.f32.mrf.mxu0
      %992 = vmatprep.mubr.f32.mxu0 0.0
      %993 = vmatmul.mubr.f32.gmra.mxu0 %v495
      %v994 = vpop.f32.mrf.mxu0
      %v995 = vadd.f32 %v416, %v994
      %v996 = vpop.f32.mrf.mxu0
      %997 = vmatprep.mubr.f32.mxu0 0.0
      %998 = vmatmul.mubr.f32.gmra.mxu0 %v498
      %v999 = vpop.f32.mrf.mxu0
      %v1000 = vadd.f32 %v416, %v999
      %v1001 = vpop.f32.mrf.mxu0
      %1002 = vmatprep.mubr.f32.mxu0 0.0
      %1003 = vmatmul.mubr.f32.gmra.mxu0 %v501
      %v1004 = vpop.f32.mrf.mxu0
      %v1005 = vadd.f32 %v416, %v1004
      %v1006 = vpop.f32.mrf.mxu0
      %1007 = vmatprep.mubr.f32.mxu0 0.0
      %1008 = vmatmul.mubr.f32.gmra.mxu0 %v504
      %v1009 = vpop.f32.mrf.mxu0
      %v1010 = vadd.f32 %v416, %v1009
      %v1011 = vpop.f32.mrf.mxu0
      %1012 = vmatprep.mubr.f32.mxu0 0.0
      %1013 = vmatmul.mubr.f32.gmra.mxu0 %v507
      %v1014 = vpop.f32.mrf.mxu0
      %v1015 = vadd.f32 %v416, %v1014
      %v1016 = vpop.f32.mrf.mxu0
      %1017 = vmatprep.mubr.f32.mxu0 0.0
      %1018 = vmatmul.mubr.f32.gmra.mxu0 %v510
      %v1019 = vpop.f32.mrf.mxu0
      %v1020 = vadd.f32 %v416, %v1019
      %v1021 = vpop.f32.mrf.mxu0
      %1022 = vmatprep.mubr.f32.mxu0 0.0
      %1023 = vmatmul.mubr.f32.gmra.mxu0 %v513
      %v1024 = vpop.f32.mrf.mxu0
      %v1025 = vadd.f32 %v416, %v1024
      %v1026 = vpop.f32.mrf.mxu0
      %1027 = vmatprep.mubr.f32.mxu0 0.0
      %1028 = vmatmul.mubr.f32.gmra.mxu0 %v516
      %v1029 = vpop.f32.mrf.mxu0
      %v1030 = vadd.f32 %v416, %v1029
      %v1031 = vpop.f32.mrf.mxu0
      %1032 = vmatprep.mubr.f32.mxu0 0.0
      %1033 = vmatmul.mubr.f32.gmra.mxu0 %v519
      %v1034 = vpop.f32.mrf.mxu0
      %v1035 = vadd.f32 %v416, %v1034
      %v1036 = vpop.f32.mrf.mxu0
      %1037 = vmatprep.mubr.f32.mxu0 0.0
      %1038 = vmatmul.mubr.f32.gmra.mxu0 %v522
      %v1039 = vpop.f32.mrf.mxu0
      %v1040 = vadd.f32 %v416, %v1039
      %v1041 = vpop.f32.mrf.mxu0
      %1042 = vmatprep.mubr.f32.mxu0 0.0
      %1043 = vmatmul.mubr.f32.gmra.mxu0 %v525
      %v1044 = vpop.f32.mrf.mxu0
      %v1045 = vadd.f32 %v416, %v1044
      %v1046 = vpop.f32.mrf.mxu0
      %1047 = vmatprep.mubr.f32.mxu0 0.0
      %1048 = vmatmul.mubr.f32.gmra.mxu0 %v528
      %v1049 = vpop.f32.mrf.mxu0
      %v1050 = vadd.f32 %v416, %v1049
      %v1051 = vpop.f32.mrf.mxu0
      %1052 = vmatprep.mubr.f32.mxu0 0.0
      %1053 = vmatmul.mubr.f32.gmra.mxu0 %v531
      %v1054 = vpop.f32.mrf.mxu0
      %v1055 = vadd.f32 %v416, %v1054
      %v1056 = vpop.f32.mrf.mxu0
      %1057 = vmatprep.mubr.f32.mxu0 0.0
      %1058 = vmatmul.mubr.f32.gmra.mxu0 %v534
      %v1059 = vpop.f32.mrf.mxu0
      %v1060 = vadd.f32 %v416, %v1059
      %v1061 = vpop.f32.mrf.mxu0
      %1062 = vmatprep.mubr.f32.mxu0 0.0
      %1063 = vmatmul.mubr.f32.gmra.mxu0 %v537
      %v1064 = vpop.f32.mrf.mxu0
      %v1065 = vadd.f32 %v416, %v1064
      %v1066 = vpop.f32.mrf.mxu0
      %1067 = vmatprep.mubr.f32.mxu0 0.0
      %1068 = vmatmul.mubr.f32.gmra.mxu0 %v540
      %v1069 = vpop.f32.mrf.mxu0
      %v1070 = vadd.f32 %v416, %v1069
      %v1071 = vpop.f32.mrf.mxu0
      %1072 = vmatprep.mubr.f32.mxu0 0.0
      %1073 = vmatmul.mubr.f32.gmra.mxu0 %v543
      %v1074 = vpop.f32.mrf.mxu0
      %v1075 = vadd.f32 %v416, %v1074
      %v1076 = vpop.f32.mrf.mxu0
      %1077 = vmatprep.mubr.f32.mxu0 0.0
      %1078 = vmatmul.mubr.f32.gmra.mxu0 %v546
      %v1079 = vpop.f32.mrf.mxu0
      %v1080 = vadd.f32 %v416, %v1079
      %v1081 = vpop.f32.mrf.mxu0
      %1082 = vmatprep.mubr.f32.mxu0 0.0
      %1083 = vmatmul.mubr.f32.gmra.mxu0 %v549
      %v1084 = vpop.f32.mrf.mxu0
      %v1085 = vadd.f32 %v416, %v1084
      %v1086 = vpop.f32.mrf.mxu0
      %1087 = vmatprep.mubr.f32.mxu0 0.0
      %1088 = vmatmul.mubr.f32.gmra.mxu0 %v552
      %v1089 = vpop.f32.mrf.mxu0
      %v1090 = vadd.f32 %v416, %v1089
      %v1091 = vpop.f32.mrf.mxu0
      %1092 = vmatprep.mubr.f32.mxu0 0.0
      %1093 = vmatmul.mubr.f32.gmra.mxu0 %v555
      %v1094 = vpop.f32.mrf.mxu0
      %v1095 = vadd.f32 %v416, %v1094
      %v1096 = vpop.f32.mrf.mxu0
      %1097 = vmatprep.mubr.f32.mxu0 0.0
      %1098 = vmatmul.mubr.f32.gmra.mxu0 %v558
      %v1099 = vpop.f32.mrf.mxu0
      %v1100 = vadd.f32 %v416, %v1099
      %v1101 = vpop.f32.mrf.mxu0
      %1102 = vmatprep.mubr.f32.mxu0 0.0
      %1103 = vmatmul.mubr.f32.gmra.mxu0 %v561
      %v1104 = vpop.f32.mrf.mxu0
      %v1105 = vadd.f32 %v416, %v1104
      %v1106 = vpop.f32.mrf.mxu0
      %1107 = vmatprep.mubr.f32.mxu0 0.0
      %1108 = vmatmul.mubr.f32.gmra.mxu0 %v564
      %v1109 = vpop.f32.mrf.mxu0
      %v1110 = vadd.f32 %v416, %v1109
      %v1111 = vpop.f32.mrf.mxu0
      %1112 = vmatprep.mubr.f32.mxu0 0.0
      %1113 = vmatmul.mubr.f32.gmra.mxu0 %v567
      %v1114 = vpop.f32.mrf.mxu0
      %v1115 = vadd.f32 %v416, %v1114
      %v1116 = vpop.f32.mrf.mxu0
      %1117 = vmatprep.mubr.f32.mxu0 0.0
      %1118 = vmatmul.mubr.f32.gmra.mxu0 %v570
      %v1119 = vpop.f32.mrf.mxu0
      %v1120 = vadd.f32 %v416, %v1119
      %v1121 = vpop.f32.mrf.mxu0
      %1122 = vmatprep.mubr.f32.mxu0 0.0
      %1123 = vmatmul.mubr.f32.gmra.mxu0 %v573
      %v1124 = vpop.f32.mrf.mxu0
      %v1125 = vadd.f32 %v416, %v1124
      %v1126 = vpop.f32.mrf.mxu0
      %1127 = vmatprep.mubr.f32.mxu0 0.0
      %1128 = vmatmul.mubr.f32.gmra.mxu0 %v576
      %v1129 = vpop.f32.mrf.mxu0
      %v1130 = vadd.f32 %v416, %v1129
      %v1131 = vpop.f32.mrf.mxu0
      %1132 = vmatprep.mubr.f32.mxu0 0.0
      %1133 = vmatmul.mubr.f32.gmra.mxu0 %v579
      %v1134 = vpop.f32.mrf.mxu0
      %v1135 = vadd.f32 %v416, %v1134
      %v1136 = vpop.f32.mrf.mxu0
      %1137 = vmatprep.mubr.f32.mxu0 0.0
      %1138 = vmatmul.mubr.f32.gmra.mxu0 %v582
      %v1139 = vpop.f32.mrf.mxu0
      %v1140 = vadd.f32 %v416, %v1139
      %v1141 = vpop.f32.mrf.mxu0
      %1142 = vmatprep.mubr.f32.mxu0 0.0
      %1143 = vmatmul.mubr.f32.gmra.mxu0 %v585
      %v1144 = vpop.f32.mrf.mxu0
      %v1145 = vadd.f32 %v416, %v1144
      %v1146 = vpop.f32.mrf.mxu0
      %1147 = vmatprep.mubr.f32.mxu0 0.0
      %1148 = vmatmul.mubr.f32.gmra.mxu0 %v588
      %v1149 = vpop.f32.mrf.mxu0
      %v1150 = vadd.f32 %v416, %v1149
      %v1151 = vpop.f32.mrf.mxu0
      %1152 = vmatprep.mubr.f32.mxu0 0.0
      %1153 = vmatmul.mubr.f32.gmra.mxu0 %v591
      %v1154 = vpop.f32.mrf.mxu0
      %v1155 = vadd.f32 %v416, %v1154
      %v1156 = vpop.f32.mrf.mxu0
      %1157 = vmatprep.mubr.f32.mxu0 0.0
      %1158 = vmatmul.mubr.f32.gmra.mxu0 %v594
      %v1159 = vpop.f32.mrf.mxu0
      %v1160 = vadd.f32 %v416, %v1159
      %v1161 = vpop.f32.mrf.mxu0
      %1162 = vmatprep.mubr.f32.mxu0 0.0
      %1163 = vmatmul.mubr.f32.gmra.mxu0 %v597
      %v1164 = vpop.f32.mrf.mxu0
      %v1165 = vadd.f32 %v416, %v1164
      %v1166 = vpop.f32.mrf.mxu0
      %1167 = vmatprep.mubr.f32.mxu0 0.0
      %1168 = vmatmul.mubr.f32.gmra.mxu0 %v600
      %v1169 = vpop.f32.mrf.mxu0
      %v1170 = vadd.f32 %v416, %v1169
      %v1171 = vpop.f32.mrf.mxu0
      %1172 = vmatprep.mubr.f32.mxu0 0.0
      %1173 = vmatmul.mubr.f32.gmra.mxu0 %v603
      %v1174 = vpop.f32.mrf.mxu0
      %v1175 = vadd.f32 %v416, %v1174
      %v1176 = vpop.f32.mrf.mxu0
      %1177 = vmatprep.mubr.f32.mxu0 0.0
      %1178 = vmatmul.mubr.f32.gmra.mxu0 %v606
      %v1179 = vpop.f32.mrf.mxu0
      %v1180 = vadd.f32 %v416, %v1179
      %v1181 = vpop.f32.mrf.mxu0
      %1182 = vmatprep.mubr.f32.mxu0 0.0
      %1183 = vmatmul.mubr.f32.gmra.mxu0 %v609
      %v1184 = vpop.f32.mrf.mxu0
      %v1185 = vadd.f32 %v416, %v1184
      %v1186 = vpop.f32.mrf.mxu0
      %1187 = vmatprep.mubr.f32.mxu0 0.0
      %1188 = vmatmul.mubr.f32.gmra.mxu0 %v612
      %v1189 = vpop.f32.mrf.mxu0
      %v1190 = vadd.f32 %v416, %v1189
      %v1191 = vpop.f32.mrf.mxu0
      %1192 = vmatprep.mubr.f32.mxu0 0.0
      %1193 = vmatmul.mubr.f32.gmra.mxu0 %v615
      %v1194 = vpop.f32.mrf.mxu0
      %v1195 = vadd.f32 %v416, %v1194
      %v1196 = vpop.f32.mrf.mxu0
      %1197 = vmatprep.mubr.f32.mxu0 0.0
      %1198 = vmatmul.mubr.f32.gmra.mxu0 %v618
      %v1199 = vpop.f32.mrf.mxu0
      %v1200 = vadd.f32 %v416, %v1199
      %v1201 = vpop.f32.mrf.mxu0
      %1202 = vmatprep.mubr.f32.mxu0 0.0
      %1203 = vmatmul.mubr.f32.gmra.mxu0 %v621
      %v1204 = vpop.f32.mrf.mxu0
      %v1205 = vadd.f32 %v416, %v1204
      %v1206 = vpop.f32.mrf.mxu0
      %1207 = vmatprep.mubr.f32.mxu0 0.0
      %1208 = vmatmul.mubr.f32.gmra.mxu0 %v624
      %v1209 = vpop.f32.mrf.mxu0
      %v1210 = vadd.f32 %v416, %v1209
      %v1211 = vpop.f32.mrf.mxu0
      %1212 = vmatprep.mubr.f32.mxu0 0.0
      %1213 = vmatmul.mubr.f32.gmra.mxu0 %v627
      %v1214 = vpop.f32.mrf.mxu0
      %v1215 = vadd.f32 %v416, %v1214
      %v1216 = vpop.f32.mrf.mxu0
      %1217 = vmatprep.mubr.f32.mxu0 0.0
      %1218 = vmatmul.mubr.f32.gmra.mxu0 %v630
      %v1219 = vpop.f32.mrf.mxu0
      %v1220 = vadd.f32 %v416, %v1219
      %v1221 = vpop.f32.mrf.mxu0
      %1222 = vmatprep.mubr.f32.mxu0 0.0
      %1223 = vmatmul.mubr.f32.gmra.mxu0 %v633
      %v1224 = vpop.f32.mrf.mxu0
      %v1225 = vadd.f32 %v416, %v1224
      %v1226 = vpop.f32.mrf.mxu0
      %1227 = vmatprep.mubr.f32.mxu0 0.0
      %1228 = vmatmul.mubr.f32.gmra.mxu0 %v636
      %v1229 = vpop.f32.mrf.mxu0
      %v1230 = vadd.f32 %v416, %v1229
      %v1231 = vpop.f32.mrf.mxu0
      %1232 = vmatprep.mubr.f32.mxu0 0.0
      %1233 = vmatmul.mubr.f32.gmra.mxu0 %v639
      %v1234 = vpop.f32.mrf.mxu0
      %v1235 = vadd.f32 %v416, %v1234
      %v1236 = vpop.f32.mrf.mxu0
      %1237 = vmatprep.mubr.f32.mxu0 0.0
      %1238 = vmatmul.mubr.f32.gmra.mxu0 %v642
      %v1239 = vpop.f32.mrf.mxu0
      %v1240 = vadd.f32 %v416, %v1239
      %v1241 = vpop.f32.mrf.mxu0
      %1242 = vmatprep.mubr.f32.mxu0 0.0
      %1243 = vmatmul.mubr.f32.gmra.mxu0 %v645
      %v1244 = vpop.f32.mrf.mxu0
      %v1245 = vadd.f32 %v416, %v1244
      %v1246 = vpop.f32.mrf.mxu0
      %1247 = vmatprep.mubr.f32.mxu0 0.0
      %1248 = vmatmul.mubr.f32.gmra.mxu0 %v648
      %v1249 = vpop.f32.mrf.mxu0
      %v1250 = vadd.f32 %v416, %v1249
      %v1251 = vpop.f32.mrf.mxu0
      %1252 = vmatprep.mubr.f32.mxu0 0.0
      %1253 = vmatmul.mubr.f32.gmra.mxu0 %v651
      %v1254 = vpop.f32.mrf.mxu0
      %v1255 = vadd.f32 %v416, %v1254
      %v1256 = vpop.f32.mrf.mxu0
      %1257 = vmatprep.mubr.f32.mxu0 0.0
      %1258 = vmatmul.mubr.f32.gmra.mxu0 %v654
      %v1259 = vpop.f32.mrf.mxu0
      %v1260 = vadd.f32 %v416, %v1259
      %v1261 = vpop.f32.mrf.mxu0
      %1262 = vmatprep.mubr.f32.mxu0 0.0
      %1263 = vmatmul.mubr.f32.gmra.mxu0 %v657
      %v1264 = vpop.f32.mrf.mxu0
      %v1265 = vadd.f32 %v416, %v1264
      %v1266 = vpop.f32.mrf.mxu0
      %1267 = vmatprep.mubr.f32.mxu0 0.0
      %1268 = vmatmul.mubr.f32.gmra.mxu0 %v660
      %v1269 = vpop.f32.mrf.mxu0
      %v1270 = vadd.f32 %v416, %v1269
      %v1271 = vpop.f32.mrf.mxu0
      %1272 = vmatprep.mubr.f32.mxu0 0.0
      %1273 = vmatmul.mubr.f32.gmra.mxu0 %v663
      %v1274 = vpop.f32.mrf.mxu0
      %v1275 = vadd.f32 %v416, %v1274
      %v1276 = vpop.f32.mrf.mxu0
      %1277 = vmatprep.mubr.f32.mxu0 0.0
      %1278 = vmatmul.mubr.f32.gmra.mxu0 %v666
      %v1279 = vpop.f32.mrf.mxu0
      %v1280 = vadd.f32 %v416, %v1279
      %v1281 = vpop.f32.mrf.mxu0
      %1282 = vmatprep.mubr.f32.mxu0 0.0
      %1283 = vmatmul.mubr.f32.gmra.mxu0 %v669
      %v1284 = vpop.f32.mrf.mxu0
      %v1285 = vadd.f32 %v416, %v1284
      %v1286 = vpop.f32.mrf.mxu0
      %1287 = vmatprep.mubr.f32.mxu0 0.0
      %1288 = vmatmul.mubr.f32.gmra.mxu0 %v672
      %v1289 = vpop.f32.mrf.mxu0
      %v1290 = vadd.f32 %v416, %v1289
      %v1291 = vpop.f32.mrf.mxu0
      %1292 = vmatprep.mubr.f32.mxu0 0.0
      %1293 = vmatmul.mubr.f32.gmra.mxu0 %v675
      %v1294 = vpop.f32.mrf.mxu0
      %v1295 = vadd.f32 %v416, %v1294
      %v1296 = vpop.f32.mrf.mxu0
      %1297 = vmatprep.mubr.f32.mxu0 0.0
      %1298 = vmatmul.mubr.f32.gmra.mxu0 %v678
      %v1299 = vpop.f32.mrf.mxu0
      %v1300 = vadd.f32 %v416, %v1299
      %v1301 = vpop.f32.mrf.mxu0
      %1302 = vmatprep.mubr.f32.mxu0 0.0
      %1303 = vmatmul.mubr.f32.gmra.mxu0 %v681
      %v1304 = vpop.f32.mrf.mxu0
      %v1305 = vadd.f32 %v416, %v1304
      %v1306 = vpop.f32.mrf.mxu0
      %1307 = vmatprep.mubr.f32.mxu0 0.0
      %1308 = vmatmul.mubr.f32.gmra.mxu0 %v684
      %v1309 = vpop.f32.mrf.mxu0
      %v1310 = vadd.f32 %v416, %v1309
      %v1311 = vpop.f32.mrf.mxu0
      %1312 = vmatprep.mubr.f32.mxu0 0.0
      %1313 = vmatmul.mubr.f32.gmra.mxu0 %v687
      %v1314 = vpop.f32.mrf.mxu0
      %v1315 = vadd.f32 %v416, %v1314
      %v1316 = vpop.f32.mrf.mxu0
      %1317 = vmatprep.mubr.f32.mxu0 0.0
      %1318 = vmatmul.mubr.f32.gmra.mxu0 %v690
      %v1319 = vpop.f32.mrf.mxu0
      %v1320 = vadd.f32 %v416, %v1319
      %v1321 = vpop.f32.mrf.mxu0
      %1322 = vmatprep.mubr.f32.mxu0 0.0
      %1323 = vmatmul.mubr.f32.gmra.mxu0 %v693
      %v1324 = vpop.f32.mrf.mxu0
      %v1325 = vadd.f32 %v416, %v1324
      %v1326 = vpop.f32.mrf.mxu0
      %1327 = vmatprep.mubr.f32.mxu0 0.0
      %1328 = vmatmul.mubr.f32.gmra.mxu0 %v696
      %v1329 = vpop.f32.mrf.mxu0
      %v1330 = vadd.f32 %v416, %v1329
      %v1331 = vpop.f32.mrf.mxu0
      %1332 = vmatprep.mubr.f32.mxu0 0.0
      %1333 = vmatmul.mubr.f32.gmra.mxu0 %v699
      %v1334 = vpop.f32.mrf.mxu0
      %v1335 = vadd.f32 %v416, %v1334
      %v1336 = vpop.f32.mrf.mxu0
      %1337 = vmatprep.mubr.f32.mxu0 0.0
      %1338 = vmatmul.mubr.f32.gmra.mxu0 %v702
      %v1339 = vpop.f32.mrf.mxu0
      %v1340 = vadd.f32 %v416, %v1339
      %v1341 = vpop.f32.mrf.mxu0
      %1342 = vmatprep.mubr.f32.mxu0 0.0
      %1343 = vmatmul.mubr.f32.gmra.mxu0 %v705
      %v1344 = vpop.f32.mrf.mxu0
      %v1345 = vadd.f32 %v416, %v1344
      %v1346 = vpop.f32.mrf.mxu0
      %1347 = vmatprep.mubr.f32.mxu0 0.0
      %1348 = vmatmul.mubr.f32.gmra.mxu0 %v708
      %v1349 = vpop.f32.mrf.mxu0
      %v1350 = vadd.f32 %v416, %v1349
      %v1351 = vpop.f32.mrf.mxu0
      %1352 = vmatprep.mubr.f32.mxu0 0.0
      %1353 = vmatmul.mubr.f32.gmra.mxu0 %v711
      %v1354 = vpop.f32.mrf.mxu0
      %v1355 = vadd.f32 %v416, %v1354
      %v1356 = vpop.f32.mrf.mxu0
      %1357 = vmatprep.mubr.f32.mxu0 0.0
      %1358 = vmatmul.mubr.f32.gmra.mxu0 %v714
      %v1359 = vpop.f32.mrf.mxu0
      %v1360 = vadd.f32 %v416, %v1359
      %v1361 = vpop.f32.mrf.mxu0
      %1362 = vmatprep.mubr.f32.mxu0 0.0
      %1363 = vmatmul.mubr.f32.gmra.mxu0 %v717
      %v1364 = vpop.f32.mrf.mxu0
      %v1365 = vadd.f32 %v416, %v1364
      %v1366 = vpop.f32.mrf.mxu0
      %1367 = vmatprep.mubr.f32.mxu0 0.0
      %1368 = vmatmul.mubr.f32.gmra.mxu0 %v720
      %v1369 = vpop.f32.mrf.mxu0
      %v1370 = vadd.f32 %v416, %v1369
      %v1371 = vpop.f32.mrf.mxu0
      %1372 = vmatprep.mubr.f32.mxu0 0.0
      %1373 = vmatmul.mubr.f32.gmra.mxu0 %v723
      %v1374 = vpop.f32.mrf.mxu0
      %v1375 = vadd.f32 %v416, %v1374
      %v1376 = vpop.f32.mrf.mxu0
      %1377 = vmatprep.mubr.f32.mxu0 0.0
      %1378 = vmatmul.mubr.f32.gmra.mxu0 %v726
      %v1379 = vpop.f32.mrf.mxu0
      %v1380 = vadd.f32 %v416, %v1379
      %v1381 = vpop.f32.mrf.mxu0
      %1382 = vmatprep.mubr.f32.mxu0 0.0
      %1383 = vmatmul.mubr.f32.gmra.mxu0 %v729
      %v1384 = vpop.f32.mrf.mxu0
      %v1385 = vadd.f32 %v416, %v1384
      %v1386 = vpop.f32.mrf.mxu0
      %1387 = vmatprep.mubr.f32.mxu0 0.0
      %1388 = vmatmul.mubr.f32.gmra.mxu0 %v732
      %v1389 = vpop.f32.mrf.mxu0
      %v1390 = vadd.f32 %v416, %v1389
      %v1391 = vpop.f32.mrf.mxu0
      %1392 = vmatprep.mubr.f32.mxu0 0.0
      %1393 = vmatmul.mubr.f32.gmra.mxu0 %v735
      %v1394 = vpop.f32.mrf.mxu0
      %v1395 = vadd.f32 %v416, %v1394
      %v1396 = vpop.f32.mrf.mxu0
      %1397 = vmatprep.mubr.f32.mxu0 0.0
      %1398 = vmatmul.mubr.f32.gmra.mxu0 %v738
      %v1399 = vpop.f32.mrf.mxu0
      %v1400 = vadd.f32 %v416, %v1399
      %v1401 = vpop.f32.mrf.mxu0
      %1402 = vmatprep.mubr.f32.mxu0 0.0
      %1403 = vmatmul.mubr.f32.gmra.mxu0 %v741
      %v1404 = vpop.f32.mrf.mxu0
      %v1405 = vadd.f32 %v416, %v1404
      %v1406 = vpop.f32.mrf.mxu0
      %1407 = vmatprep.mubr.f32.mxu0 0.0
      %1408 = vmatmul.mubr.f32.gmra.mxu0 %v744
      %v1409 = vpop.f32.mrf.mxu0
      %v1410 = vadd.f32 %v416, %v1409
      %v1411 = vpop.f32.mrf.mxu0
      %1412 = vmatprep.mubr.f32.mxu0 0.0
      %1413 = vmatmul.mubr.f32.gmra.mxu0 %v747
      %v1414 = vpop.f32.mrf.mxu0
      %v1415 = vadd.f32 %v416, %v1414
      %v1416 = vpop.f32.mrf.mxu0
      %1417 = vmatprep.mubr.f32.mxu0 0.0
      %1418 = vmatmul.mubr.f32.gmra.mxu0 %v750
      %v1419 = vpop.f32.mrf.mxu0
      %v1420 = vadd.f32 %v416, %v1419
      %v1421 = vpop.f32.mrf.mxu0
      %1422 = vmatprep.mubr.f32.mxu0 0.0
      %1423 = vmatmul.mubr.f32.gmra.mxu0 %v753
      %v1424 = vpop.f32.mrf.mxu0
      %v1425 = vadd.f32 %v416, %v1424
      %v1426 = vpop.f32.mrf.mxu0
      %1427 = vmatprep.mubr.f32.mxu0 0.0
      %1428 = vmatmul.mubr.f32.gmra.mxu0 %v756
      %v1429 = vpop.f32.mrf.mxu0
      %v1430 = vadd.f32 %v416, %v1429
      %v1431 = vpop.f32.mrf.mxu0
      %1432 = vmatprep.mubr.f32.mxu0 0.0
      %1433 = vmatmul.mubr.f32.gmra.mxu0 %v759
      %v1434 = vpop.f32.mrf.mxu0
      %v1435 = vadd.f32 %v416, %v1434
      %v1436 = vpop.f32.mrf.mxu0
      %1437 = vmatprep.mubr.f32.mxu0 0.0
      %1438 = vmatmul.mubr.f32.gmra.mxu0 %v762
      %v1439 = vpop.f32.mrf.mxu0
      %v1440 = vadd.f32 %v416, %v1439
      %v1441 = vpop.f32.mrf.mxu0
      %1442 = vmatprep.mubr.f32.mxu0 0.0
      %1443 = vmatmul.mubr.f32.gmra.mxu0 %v765
      %v1444 = vpop.f32.mrf.mxu0
      %v1445 = vadd.f32 %v416, %v1444
      %v1446 = vpop.f32.mrf.mxu0
      %1447 = vmatprep.mubr.f32.mxu0 0.0
      %1448 = vmatmul.mubr.f32.gmra.mxu0 %v768
      %v1449 = vpop.f32.mrf.mxu0
      %v1450 = vadd.f32 %v416, %v1449
      %v1451 = vpop.f32.mrf.mxu0
      %1452 = vmatprep.mubr.f32.mxu0 0.0
      %1453 = vmatmul.mubr.f32.gmra.mxu0 %v771
      %v1454 = vpop.f32.mrf.mxu0
      %v1455 = vadd.f32 %v416, %v1454
      %v1456 = vpop.f32.mrf.mxu0
      %1457 = vmatprep.mubr.f32.mxu0 0.0
      %1458 = vmatmul.mubr.f32.gmra.mxu0 %v774
      %v1459 = vpop.f32.mrf.mxu0
      %v1460 = vadd.f32 %v416, %v1459
      %v1461 = vpop.f32.mrf.mxu0
      %1462 = vmatprep.mubr.f32.mxu0 0.0
      %1463 = vmatmul.mubr.f32.gmra.mxu0 %v777
      %v1464 = vpop.f32.mrf.mxu0
      %v1465 = vadd.f32 %v416, %v1464
      %v1466 = vpop.f32.mrf.mxu0
      %1467 = vmatprep.mubr.f32.mxu0 0.0
      %1468 = vmatmul.mubr.f32.gmra.mxu0 %v780
      %v1469 = vpop.f32.mrf.mxu0
      %v1470 = vadd.f32 %v416, %v1469
      %v1471 = vpop.f32.mrf.mxu0
      %1472 = vmatprep.mubr.f32.mxu0 0.0
      %1473 = vmatmul.mubr.f32.gmra.mxu0 %v783
      %v1474 = vpop.f32.mrf.mxu0
      %v1475 = vadd.f32 %v416, %v1474
      %v1476 = vpop.f32.mrf.mxu0
      %1477 = vmatprep.mubr.f32.mxu0 0.0
      %1478 = vmatmul.mubr.f32.gmra.mxu0 %v786
      %v1479 = vpop.f32.mrf.mxu0
      %v1480 = vadd.f32 %v416, %v1479
      %v1481 = vpop.f32.mrf.mxu0
      %1482 = vmatprep.mubr.f32.mxu0 0.0
      %1483 = vmatmul.mubr.f32.gmra.mxu0 %v789
      %v1484 = vpop.f32.mrf.mxu0
      %v1485 = vadd.f32 %v416, %v1484
      %v1486 = vpop.f32.mrf.mxu0
      %1487 = vmatprep.mubr.f32.mxu0 0.0
      %1488 = vmatmul.mubr.f32.gmra.mxu0 %v792
      %v1489 = vpop.f32.mrf.mxu0
      %v1490 = vadd.f32 %v416, %v1489
      %v1491 = vpop.f32.mrf.mxu0
      %1492 = vmatprep.mubr.f32.mxu0 0.0
      %1493 = vmatmul.mubr.f32.gmra.mxu0 %v795
      %v1494 = vpop.f32.mrf.mxu0
      %v1495 = vadd.f32 %v416, %v1494
      %v1496 = vpop.f32.mrf.mxu0
      %1497 = vmatprep.mubr.f32.mxu0 0.0
      %1498 = vmatmul.mubr.f32.gmra.mxu0 %v798
      %v1499 = vpop.f32.mrf.mxu0
      %v1500 = vadd.f32 %v416, %v1499
      %v1501 = vpop.f32.mrf.mxu0
      %1502 = vmatprep.mubr.f32.mxu0 0.0
      %1503 = vmatmul.mubr.f32.gmra.mxu0 %v801
      %v1504 = vpop.f32.mrf.mxu0
      %v1505 = vadd.f32 %v416, %v1504
      %v1506 = vpop.f32.mrf.mxu0
      %1507 = vdwg.mxu0
      %v1508 = vmax.f32 %v870, %v1190
      %v1509 = vmax.f32 %v875, %v1195
      %v1510 = vmax.f32 %v880, %v1200
      %v1511 = vmax.f32 %v885, %v1205
      %v1512 = vmax.f32 %v890, %v1210
      %v1513 = vmax.f32 %v895, %v1215
      %v1514 = vmax.f32 %v900, %v1220
      %v1515 = vmax.f32 %v905, %v1225
      %v1516 = vmax.f32 %v910, %v1230
      %v1517 = vmax.f32 %v915, %v1235
      %v1518 = vmax.f32 %v920, %v1240
      %v1519 = vmax.f32 %v925, %v1245
      %v1520 = vmax.f32 %v930, %v1250
      %v1521 = vmax.f32 %v935, %v1255
      %v1522 = vmax.f32 %v940, %v1260
      %v1523 = vmax.f32 %v945, %v1265
      %v1524 = vmax.f32 %v950, %v1270
      %v1525 = vmax.f32 %v955, %v1275
      %v1526 = vmax.f32 %v960, %v1280
      %v1527 = vmax.f32 %v965, %v1285
      %v1528 = vmax.f32 %v970, %v1290
      %v1529 = vmax.f32 %v975, %v1295
      %v1530 = vmax.f32 %v980, %v1300
      %v1531 = vmax.f32 %v985, %v1305
      %v1532 = vmax.f32 %v990, %v1310
      %v1533 = vmax.f32 %v995, %v1315
      %v1534 = vmax.f32 %v1000, %v1320
      %v1535 = vmax.f32 %v1005, %v1325
      %v1536 = vmax.f32 %v1010, %v1330
      %v1537 = vmax.f32 %v1015, %v1335
      %v1538 = vmax.f32 %v1020, %v1340
      %v1539 = vmax.f32 %v1025, %v1345
      %v1540 = vmax.f32 %v1030, %v1350
      %v1541 = vmax.f32 %v1035, %v1355
      %v1542 = vmax.f32 %v1040, %v1360
      %v1543 = vmax.f32 %v1045, %v1365
      %v1544 = vmax.f32 %v1050, %v1370
      %v1545 = vmax.f32 %v1055, %v1375
      %v1546 = vmax.f32 %v1060, %v1380
      %v1547 = vmax.f32 %v1065, %v1385
      %v1548 = vmax.f32 %v1070, %v1390
      %v1549 = vmax.f32 %v1075, %v1395
      %v1550 = vmax.f32 %v1080, %v1400
      %v1551 = vmax.f32 %v1085, %v1405
      %v1552 = vmax.f32 %v1090, %v1410
      %v1553 = vmax.f32 %v1095, %v1415
      %v1554 = vmax.f32 %v1100, %v1420
      %v1555 = vmax.f32 %v1105, %v1425
      %v1556 = vmax.f32 %v1110, %v1430
      %v1557 = vmax.f32 %v1115, %v1435
      %v1558 = vmax.f32 %v1120, %v1440
      %v1559 = vmax.f32 %v1125, %v1445
      %v1560 = vmax.f32 %v1130, %v1450
      %v1561 = vmax.f32 %v1135, %v1455
      %v1562 = vmax.f32 %v1140, %v1460
      %v1563 = vmax.f32 %v1145, %v1465
      %v1564 = vmax.f32 %v1150, %v1470
      %v1565 = vmax.f32 %v1155, %v1475
      %v1566 = vmax.f32 %v1160, %v1480
      %v1567 = vmax.f32 %v1165, %v1485
      %v1568 = vmax.f32 %v1170, %v1490
      %v1569 = vmax.f32 %v1175, %v1495
      %v1570 = vmax.f32 %v1180, %v1500
      %v1571 = vmax.f32 %v1185, %v1505
      %v1572 = vmax.f32 %v1508, %v1540
      %v1573 = vmax.f32 %v1509, %v1541
      %v1574 = vmax.f32 %v1510, %v1542
      %v1575 = vmax.f32 %v1511, %v1543
      %v1576 = vmax.f32 %v1512, %v1544
      %v1577 = vmax.f32 %v1513, %v1545
      %v1578 = vmax.f32 %v1514, %v1546
      %v1579 = vmax.f32 %v1515, %v1547
      %v1580 = vmax.f32 %v1516, %v1548
      %v1581 = vmax.f32 %v1517, %v1549
      %v1582 = vmax.f32 %v1518, %v1550
      %v1583 = vmax.f32 %v1519, %v1551
      %v1584 = vmax.f32 %v1520, %v1552
      %v1585 = vmax.f32 %v1521, %v1553
      %v1586 = vmax.f32 %v1522, %v1554
      %v1587 = vmax.f32 %v1523, %v1555
      %v1588 = vmax.f32 %v1524, %v1556
      %v1589 = vmax.f32 %v1525, %v1557
      %v1590 = vmax.f32 %v1526, %v1558
      %v1591 = vmax.f32 %v1527, %v1559
      %v1592 = vmax.f32 %v1528, %v1560
      %v1593 = vmax.f32 %v1529, %v1561
      %v1594 = vmax.f32 %v1530, %v1562
      %v1595 = vmax.f32 %v1531, %v1563
      %v1596 = vmax.f32 %v1532, %v1564
      %v1597 = vmax.f32 %v1533, %v1565
      %v1598 = vmax.f32 %v1534, %v1566
      %v1599 = vmax.f32 %v1535, %v1567
      %v1600 = vmax.f32 %v1536, %v1568
      %v1601 = vmax.f32 %v1537, %v1569
      %v1602 = vmax.f32 %v1538, %v1570
      %v1603 = vmax.f32 %v1539, %v1571
      %1604 = vst.msk [vmem:[#allocation2] sm:$0xff] %vm418, 0.0
      %1605 = vst.msk [vmem:[#allocation2 + $0x8] sm:$0xff] %vm418, 0.0
      %vm1606 = vcmask 254976
      %1607 = vst.msk [vmem:[#allocation2 + $0x10] sm:$0x3] %vm1606, 0.0
      %s1608 = scalar_lea.vmem [#allocation2], 408
      %1609 = vst.msk [vmem:[%s1608] sm:$0xff] %vm418, 0.0
      %1610 = vst.msk [vmem:[%s1608 + $0x8] sm:$0xff] %vm418, 0.0
      %1611 = vst.msk [vmem:[%s1608 + $0x10] sm:$0x3] %vm1606, 0.0
      %vm1612 = vcmask 253952
      %1613 = vst.msk [vmem:[#allocation2] sm:$0x1] %vm1612, 0.0
      %1614 = vst.msk [vmem:[#allocation2 + $0x18] sm:$0x1] %vm1612, 0.0
      %1615 = vst.msk [vmem:[#allocation2 + $0x30] sm:$0x1] %vm1612, 0.0
      %1616 = vst.msk [vmem:[#allocation2 + $0x48] sm:$0x1] %vm1612, 0.0
      %1617 = vst.msk [vmem:[#allocation2 + $0x60] sm:$0x1] %vm1612, 0.0
      %1618 = vst.msk [vmem:[#allocation2 + $0x78] sm:$0x1] %vm1612, 0.0
      %1619 = vst.msk [vmem:[#allocation2 + $0x90] sm:$0x1] %vm1612, 0.0
      %1620 = vst.msk [vmem:[#allocation2 + $0xa8] sm:$0x1] %vm1612, 0.0
      %1621 = vst.msk [vmem:[#allocation2 + $0xc0] sm:$0x1] %vm1612, 0.0
      %1622 = vst.msk [vmem:[#allocation2 + $0xd8] sm:$0x1] %vm1612, 0.0
      %1623 = vst.msk [vmem:[#allocation2 + $0xf0] sm:$0x1] %vm1612, 0.0
      %1624 = vst.msk [vmem:[#allocation2 + $0x108] sm:$0x1] %vm1612, 0.0
      %1625 = vst.msk [vmem:[#allocation2 + $0x120] sm:$0x1] %vm1612, 0.0
      %1626 = vst.msk [vmem:[#allocation2 + $0x138] sm:$0x1] %vm1612, 0.0
      %1627 = vst.msk [vmem:[#allocation2 + $0x150] sm:$0x1] %vm1612, 0.0
      %1628 = vst.msk [vmem:[#allocation2 + $0x168] sm:$0x1] %vm1612, 0.0
      %1629 = vst.msk [vmem:[#allocation2 + $0x180] sm:$0x1] %vm1612, 0.0
      %1630 = vst.msk [vmem:[#allocation2 + $0x198] sm:$0x1] %vm1612, 0.0
      %1631 = vst.msk [vmem:[#allocation2 + $0x11] sm:$0x1] %vm1612, 0.0
      %1632 = vst.msk [vmem:[#allocation2 + $0x29] sm:$0x1] %vm1612, 0.0
      %1633 = vst.msk [vmem:[#allocation2 + $0x41] sm:$0x1] %vm1612, 0.0
      %1634 = vst.msk [vmem:[#allocation2 + $0x59] sm:$0x1] %vm1612, 0.0
      %1635 = vst.msk [vmem:[#allocation2 + $0x71] sm:$0x1] %vm1612, 0.0
      %1636 = vst.msk [vmem:[#allocation2 + $0x89] sm:$0x1] %vm1612, 0.0
      %1637 = vst.msk [vmem:[#allocation2 + $0xa1] sm:$0x1] %vm1612, 0.0
      %1638 = vst.msk [vmem:[#allocation2 + $0xb9] sm:$0x1] %vm1612, 0.0
      %1639 = vst.msk [vmem:[#allocation2 + $0xd1] sm:$0x1] %vm1612, 0.0
      %1640 = vst.msk [vmem:[#allocation2 + $0xe9] sm:$0x1] %vm1612, 0.0
      %1641 = vst.msk [vmem:[#allocation2 + $0x101] sm:$0x1] %vm1612, 0.0
      %1642 = vst.msk [vmem:[#allocation2 + $0x119] sm:$0x1] %vm1612, 0.0
      %1643 = vst.msk [vmem:[#allocation2 + $0x131] sm:$0x1] %vm1612, 0.0
      %1644 = vst.msk [vmem:[#allocation2 + $0x149] sm:$0x1] %vm1612, 0.0
      %1645 = vst.msk [vmem:[#allocation2 + $0x161] sm:$0x1] %vm1612, 0.0
      %1646 = vst.msk [vmem:[#allocation2 + $0x179] sm:$0x1] %vm1612, 0.0
      %1647 = vst.msk [vmem:[#allocation2 + $0x191] sm:$0x1] %vm1612, 0.0
      %1648 = vst.msk [vmem:[#allocation2 + $0x1a9] sm:$0x1] %vm1612, 0.0
      %s1649 = scalar_lea.vmem [#allocation2], 24
      %1650 = vst.msk [vmem:[%s1649 + $0x1] sm:$0xff] %vm418, %v1572
      %1651 = vst.msk [vmem:[%s1649 + $0x9] sm:$0xff] %vm418, %v1573
      %1652 = vst.msk [vmem:[%s1649 + $0x19] sm:$0xff] %vm418, %v1574
      %1653 = vst.msk [vmem:[%s1649 + $0x21] sm:$0xff] %vm418, %v1575
      %1654 = vst.msk [vmem:[%s1649 + $0x31] sm:$0xff] %vm418, %v1576
      %1655 = vst.msk [vmem:[%s1649 + $0x39] sm:$0xff] %vm418, %v1577
      %1656 = vst.msk [vmem:[%s1649 + $0x49] sm:$0xff] %vm418, %v1578
      %1657 = vst.msk [vmem:[%s1649 + $0x51] sm:$0xff] %vm418, %v1579
      %1658 = vst.msk [vmem:[%s1649 + $0x61] sm:$0xff] %vm418, %v1580
      %1659 = vst.msk [vmem:[%s1649 + $0x69] sm:$0xff] %vm418, %v1581
      %1660 = vst.msk [vmem:[%s1649 + $0x79] sm:$0xff] %vm418, %v1582
      %1661 = vst.msk [vmem:[%s1649 + $0x81] sm:$0xff] %vm418, %v1583
      %1662 = vst.msk [vmem:[%s1649 + $0x91] sm:$0xff] %vm418, %v1584
      %1663 = vst.msk [vmem:[%s1649 + $0x99] sm:$0xff] %vm418, %v1585
      %1664 = vst.msk [vmem:[%s1649 + $0xa9] sm:$0xff] %vm418, %v1586
      %1665 = vst.msk [vmem:[%s1649 + $0xb1] sm:$0xff] %vm418, %v1587
      %1666 = vst.msk [vmem:[%s1649 + $0xc1] sm:$0xff] %vm418, %v1588
      %1667 = vst.msk [vmem:[%s1649 + $0xc9] sm:$0xff] %vm418, %v1589
      %1668 = vst.msk [vmem:[%s1649 + $0xd9] sm:$0xff] %vm418, %v1590
      %1669 = vst.msk [vmem:[%s1649 + $0xe1] sm:$0xff] %vm418, %v1591
      %1670 = vst.msk [vmem:[%s1649 + $0xf1] sm:$0xff] %vm418, %v1592
      %1671 = vst.msk [vmem:[%s1649 + $0xf9] sm:$0xff] %vm418, %v1593
      %1672 = vst.msk [vmem:[%s1649 + $0x109] sm:$0xff] %vm418, %v1594
      %1673 = vst.msk [vmem:[%s1649 + $0x111] sm:$0xff] %vm418, %v1595
      %1674 = vst.msk [vmem:[%s1649 + $0x121] sm:$0xff] %vm418, %v1596
      %1675 = vst.msk [vmem:[%s1649 + $0x129] sm:$0xff] %vm418, %v1597
      %1676 = vst.msk [vmem:[%s1649 + $0x139] sm:$0xff] %vm418, %v1598
      %1677 = vst.msk [vmem:[%s1649 + $0x141] sm:$0xff] %vm418, %v1599
      %1678 = vst.msk [vmem:[%s1649 + $0x151] sm:$0xff] %vm418, %v1600
      %1679 = vst.msk [vmem:[%s1649 + $0x159] sm:$0xff] %vm418, %v1601
      %1680 = vst.msk [vmem:[%s1649 + $0x169] sm:$0xff] %vm418, %v1602
      %1681 = vst.msk [vmem:[%s1649 + $0x171] sm:$0xff] %vm418, %v1603
      %v1682 = vld [vmem:[#allocation2] sm:$0xff]
      %v1683 = vld [vmem:[#allocation2 + $0x8] sm:$0xff]
      %v1684 = vld [vmem:[#allocation2 + $0x18] sm:$0xff]
      %v1685 = vld [vmem:[#allocation2 + $0x20] sm:$0xff]
      %v1686 = vld [vmem:[#allocation2 + $0x30] sm:$0xff]
      %v1687 = vld [vmem:[#allocation2 + $0x38] sm:$0xff]
      %v1688 = vld [vmem:[#allocation2 + $0x48] sm:$0xff]
      %v1689 = vld [vmem:[#allocation2 + $0x50] sm:$0xff]
      %v1690 = vld [vmem:[#allocation2 + $0x60] sm:$0xff]
      %v1691 = vld [vmem:[#allocation2 + $0x68] sm:$0xff]
      %v1692 = vld [vmem:[#allocation2 + $0x78] sm:$0xff]
      %v1693 = vld [vmem:[#allocation2 + $0x80] sm:$0xff]
      %v1694 = vld [vmem:[#allocation2 + $0x90] sm:$0xff]
      %v1695 = vld [vmem:[#allocation2 + $0x98] sm:$0xff]
      %v1696 = vld [vmem:[#allocation2 + $0xa8] sm:$0xff]
      %v1697 = vld [vmem:[#allocation2 + $0xb0] sm:$0xff]
      %v1698 = vld [vmem:[#allocation2 + $0xc0] sm:$0xff]
      %v1699 = vld [vmem:[#allocation2 + $0xc8] sm:$0xff]
      %v1700 = vld [vmem:[#allocation2 + $0xd8] sm:$0xff]
      %v1701 = vld [vmem:[#allocation2 + $0xe0] sm:$0xff]
      %v1702 = vld [vmem:[#allocation2 + $0xf0] sm:$0xff]
      %v1703 = vld [vmem:[#allocation2 + $0xf8] sm:$0xff]
      %v1704 = vld [vmem:[#allocation2 + $0x108] sm:$0xff]
      %v1705 = vld [vmem:[#allocation2 + $0x110] sm:$0xff]
      %v1706 = vld [vmem:[#allocation2 + $0x120] sm:$0xff]
      %v1707 = vld [vmem:[#allocation2 + $0x128] sm:$0xff]
      %v1708 = vld [vmem:[#allocation2 + $0x138] sm:$0xff]
      %v1709 = vld [vmem:[#allocation2 + $0x140] sm:$0xff]
      %v1710 = vld [vmem:[#allocation2 + $0x150] sm:$0xff]
      %v1711 = vld [vmem:[#allocation2 + $0x158] sm:$0xff]
      %v1712 = vld [vmem:[#allocation2 + $0x168] sm:$0xff]
      %v1713 = vld [vmem:[#allocation2 + $0x170] sm:$0xff]
      %v1714 = vld [vmem:[#allocation2 + $0x1] sm:$0xff]
      %v1715 = vld [vmem:[#allocation2 + $0x9] sm:$0xff]
      %v1716 = vld [vmem:[#allocation2 + $0x19] sm:$0xff]
      %v1717 = vld [vmem:[#allocation2 + $0x21] sm:$0xff]
      %v1718 = vld [vmem:[#allocation2 + $0x31] sm:$0xff]
      %v1719 = vld [vmem:[#allocation2 + $0x39] sm:$0xff]
      %v1720 = vld [vmem:[#allocation2 + $0x49] sm:$0xff]
      %v1721 = vld [vmem:[#allocation2 + $0x51] sm:$0xff]
      %v1722 = vld [vmem:[#allocation2 + $0x61] sm:$0xff]
      %v1723 = vld [vmem:[#allocation2 + $0x69] sm:$0xff]
      %v1724 = vld [vmem:[#allocation2 + $0x79] sm:$0xff]
      %v1725 = vld [vmem:[#allocation2 + $0x81] sm:$0xff]
      %v1726 = vld [vmem:[#allocation2 + $0x91] sm:$0xff]
      %v1727 = vld [vmem:[#allocation2 + $0x99] sm:$0xff]
      %v1728 = vld [vmem:[#allocation2 + $0xa9] sm:$0xff]
      %v1729 = vld [vmem:[#allocation2 + $0xb1] sm:$0xff]
      %v1730 = vld [vmem:[#allocation2 + $0xc1] sm:$0xff]
      %v1731 = vld [vmem:[#allocation2 + $0xc9] sm:$0xff]
      %v1732 = vld [vmem:[#allocation2 + $0xd9] sm:$0xff]
      %v1733 = vld [vmem:[#allocation2 + $0xe1] sm:$0xff]
      %v1734 = vld [vmem:[#allocation2 + $0xf1] sm:$0xff]
      %v1735 = vld [vmem:[#allocation2 + $0xf9] sm:$0xff]
      %v1736 = vld [vmem:[#allocation2 + $0x109] sm:$0xff]
      %v1737 = vld [vmem:[#allocation2 + $0x111] sm:$0xff]
      %v1738 = vld [vmem:[#allocation2 + $0x121] sm:$0xff]
      %v1739 = vld [vmem:[#allocation2 + $0x129] sm:$0xff]
      %v1740 = vld [vmem:[#allocation2 + $0x139] sm:$0xff]
      %v1741 = vld [vmem:[#allocation2 + $0x141] sm:$0xff]
      %v1742 = vld [vmem:[#allocation2 + $0x151] sm:$0xff]
      %v1743 = vld [vmem:[#allocation2 + $0x159] sm:$0xff]
      %v1744 = vld [vmem:[#allocation2 + $0x169] sm:$0xff]
      %v1745 = vld [vmem:[#allocation2 + $0x171] sm:$0xff]
      %v1746 = vld [vmem:[#allocation2 + $0x2] sm:$0xff]
      %v1747 = vld [vmem:[#allocation2 + $0xa] sm:$0xff]
      %v1748 = vld [vmem:[#allocation2 + $0x1a] sm:$0xff]
      %v1749 = vld [vmem:[#allocation2 + $0x22] sm:$0xff]
      %v1750 = vld [vmem:[#allocation2 + $0x32] sm:$0xff]
      %v1751 = vld [vmem:[#allocation2 + $0x3a] sm:$0xff]
      %v1752 = vld [vmem:[#allocation2 + $0x4a] sm:$0xff]
      %v1753 = vld [vmem:[#allocation2 + $0x52] sm:$0xff]
      %v1754 = vld [vmem:[#allocation2 + $0x62] sm:$0xff]
      %v1755 = vld [vmem:[#allocation2 + $0x6a] sm:$0xff]
      %v1756 = vld [vmem:[#allocation2 + $0x7a] sm:$0xff]
      %v1757 = vld [vmem:[#allocation2 + $0x82] sm:$0xff]
      %v1758 = vld [vmem:[#allocation2 + $0x92] sm:$0xff]
      %v1759 = vld [vmem:[#allocation2 + $0x9a] sm:$0xff]
      %v1760 = vld [vmem:[#allocation2 + $0xaa] sm:$0xff]
      %v1761 = vld [vmem:[#allocation2 + $0xb2] sm:$0xff]
      %v1762 = vld [vmem:[#allocation2 + $0xc2] sm:$0xff]
      %v1763 = vld [vmem:[#allocation2 + $0xca] sm:$0xff]
      %v1764 = vld [vmem:[#allocation2 + $0xda] sm:$0xff]
      %v1765 = vld [vmem:[#allocation2 + $0xe2] sm:$0xff]
      %v1766 = vld [vmem:[#allocation2 + $0xf2] sm:$0xff]
      %v1767 = vld [vmem:[#allocation2 + $0xfa] sm:$0xff]
      %v1768 = vld [vmem:[#allocation2 + $0x10a] sm:$0xff]
      %v1769 = vld [vmem:[#allocation2 + $0x112] sm:$0xff]
      %v1770 = vld [vmem:[#allocation2 + $0x122] sm:$0xff]
      %v1771 = vld [vmem:[#allocation2 + $0x12a] sm:$0xff]
      %v1772 = vld [vmem:[#allocation2 + $0x13a] sm:$0xff]
      %v1773 = vld [vmem:[#allocation2 + $0x142] sm:$0xff]
      %v1774 = vld [vmem:[#allocation2 + $0x152] sm:$0xff]
      %v1775 = vld [vmem:[#allocation2 + $0x15a] sm:$0xff]
      %v1776 = vld [vmem:[#allocation2 + $0x16a] sm:$0xff]
      %v1777 = vld [vmem:[#allocation2 + $0x172] sm:$0xff]
      %v1778 = vld [vmem:[%s1649] sm:$0xff]
      %v1779 = vld [vmem:[%s1649 + $0x8] sm:$0xff]
      %v1780 = vld [vmem:[%s1649 + $0x18] sm:$0xff]
      %v1781 = vld [vmem:[%s1649 + $0x20] sm:$0xff]
      %v1782 = vld [vmem:[%s1649 + $0x30] sm:$0xff]
      %v1783 = vld [vmem:[%s1649 + $0x38] sm:$0xff]
      %v1784 = vld [vmem:[%s1649 + $0x48] sm:$0xff]
      %v1785 = vld [vmem:[%s1649 + $0x50] sm:$0xff]
      %v1786 = vld [vmem:[%s1649 + $0x60] sm:$0xff]
      %v1787 = vld [vmem:[%s1649 + $0x68] sm:$0xff]
      %v1788 = vld [vmem:[%s1649 + $0x78] sm:$0xff]
      %v1789 = vld [vmem:[%s1649 + $0x80] sm:$0xff]
      %v1790 = vld [vmem:[%s1649 + $0x90] sm:$0xff]
      %v1791 = vld [vmem:[%s1649 + $0x98] sm:$0xff]
      %v1792 = vld [vmem:[%s1649 + $0xa8] sm:$0xff]
      %v1793 = vld [vmem:[%s1649 + $0xb0] sm:$0xff]
      %v1794 = vld [vmem:[%s1649 + $0xc0] sm:$0xff]
      %v1795 = vld [vmem:[%s1649 + $0xc8] sm:$0xff]
      %v1796 = vld [vmem:[%s1649 + $0xd8] sm:$0xff]
      %v1797 = vld [vmem:[%s1649 + $0xe0] sm:$0xff]
      %v1798 = vld [vmem:[%s1649 + $0xf0] sm:$0xff]
      %v1799 = vld [vmem:[%s1649 + $0xf8] sm:$0xff]
      %v1800 = vld [vmem:[%s1649 + $0x108] sm:$0xff]
      %v1801 = vld [vmem:[%s1649 + $0x110] sm:$0xff]
      %v1802 = vld [vmem:[%s1649 + $0x120] sm:$0xff]
      %v1803 = vld [vmem:[%s1649 + $0x128] sm:$0xff]
      %v1804 = vld [vmem:[%s1649 + $0x138] sm:$0xff]
      %v1805 = vld [vmem:[%s1649 + $0x140] sm:$0xff]
      %v1806 = vld [vmem:[%s1649 + $0x150] sm:$0xff]
      %v1807 = vld [vmem:[%s1649 + $0x158] sm:$0xff]
      %v1808 = vld [vmem:[%s1649 + $0x168] sm:$0xff]
      %v1809 = vld [vmem:[%s1649 + $0x170] sm:$0xff]
      %v1810 = vld [vmem:[%s1649 + $0x1] sm:$0xff]
      %v1811 = vld [vmem:[%s1649 + $0x9] sm:$0xff]
      %v1812 = vld [vmem:[%s1649 + $0x19] sm:$0xff]
      %v1813 = vld [vmem:[%s1649 + $0x21] sm:$0xff]
      %v1814 = vld [vmem:[%s1649 + $0x31] sm:$0xff]
      %v1815 = vld [vmem:[%s1649 + $0x39] sm:$0xff]
      %v1816 = vld [vmem:[%s1649 + $0x49] sm:$0xff]
      %v1817 = vld [vmem:[%s1649 + $0x51] sm:$0xff]
      %v1818 = vld [vmem:[%s1649 + $0x61] sm:$0xff]
      %v1819 = vld [vmem:[%s1649 + $0x69] sm:$0xff]
      %v1820 = vld [vmem:[%s1649 + $0x79] sm:$0xff]
      %v1821 = vld [vmem:[%s1649 + $0x81] sm:$0xff]
      %v1822 = vld [vmem:[%s1649 + $0x91] sm:$0xff]
      %v1823 = vld [vmem:[%s1649 + $0x99] sm:$0xff]
      %v1824 = vld [vmem:[%s1649 + $0xa9] sm:$0xff]
      %v1825 = vld [vmem:[%s1649 + $0xb1] sm:$0xff]
      %v1826 = vld [vmem:[%s1649 + $0xc1] sm:$0xff]
      %v1827 = vld [vmem:[%s1649 + $0xc9] sm:$0xff]
      %v1828 = vld [vmem:[%s1649 + $0xd9] sm:$0xff]
      %v1829 = vld [vmem:[%s1649 + $0xe1] sm:$0xff]
      %v1830 = vld [vmem:[%s1649 + $0xf1] sm:$0xff]
      %v1831 = vld [vmem:[%s1649 + $0xf9] sm:$0xff]
      %v1832 = vld [vmem:[%s1649 + $0x109] sm:$0xff]
      %v1833 = vld [vmem:[%s1649 + $0x111] sm:$0xff]
      %v1834 = vld [vmem:[%s1649 + $0x121] sm:$0xff]
      %v1835 = vld [vmem:[%s1649 + $0x129] sm:$0xff]
      %v1836 = vld [vmem:[%s1649 + $0x139] sm:$0xff]
      %v1837 = vld [vmem:[%s1649 + $0x141] sm:$0xff]
      %v1838 = vld [vmem:[%s1649 + $0x151] sm:$0xff]
      %v1839 = vld [vmem:[%s1649 + $0x159] sm:$0xff]
      %v1840 = vld [vmem:[%s1649 + $0x169] sm:$0xff]
      %v1841 = vld [vmem:[%s1649 + $0x171] sm:$0xff]
      %v1842 = vld [vmem:[%s1649 + $0x2] sm:$0xff]
      %v1843 = vld [vmem:[%s1649 + $0xa] sm:$0xff]
      %v1844 = vld [vmem:[%s1649 + $0x1a] sm:$0xff]
      %v1845 = vld [vmem:[%s1649 + $0x22] sm:$0xff]
      %v1846 = vld [vmem:[%s1649 + $0x32] sm:$0xff]
      %v1847 = vld [vmem:[%s1649 + $0x3a] sm:$0xff]
      %v1848 = vld [vmem:[%s1649 + $0x4a] sm:$0xff]
      %v1849 = vld [vmem:[%s1649 + $0x52] sm:$0xff]
      %v1850 = vld [vmem:[%s1649 + $0x62] sm:$0xff]
      %v1851 = vld [vmem:[%s1649 + $0x6a] sm:$0xff]
      %v1852 = vld [vmem:[%s1649 + $0x7a] sm:$0xff]
      %v1853 = vld [vmem:[%s1649 + $0x82] sm:$0xff]
      %v1854 = vld [vmem:[%s1649 + $0x92] sm:$0xff]
      %v1855 = vld [vmem:[%s1649 + $0x9a] sm:$0xff]
      %v1856 = vld [vmem:[%s1649 + $0xaa] sm:$0xff]
      %v1857 = vld [vmem:[%s1649 + $0xb2] sm:$0xff]
      %v1858 = vld [vmem:[%s1649 + $0xc2] sm:$0xff]
      %v1859 = vld [vmem:[%s1649 + $0xca] sm:$0xff]
      %v1860 = vld [vmem:[%s1649 + $0xda] sm:$0xff]
      %v1861 = vld [vmem:[%s1649 + $0xe2] sm:$0xff]
      %v1862 = vld [vmem:[%s1649 + $0xf2] sm:$0xff]
      %v1863 = vld [vmem:[%s1649 + $0xfa] sm:$0xff]
      %v1864 = vld [vmem:[%s1649 + $0x10a] sm:$0xff]
      %v1865 = vld [vmem:[%s1649 + $0x112] sm:$0xff]
      %v1866 = vld [vmem:[%s1649 + $0x122] sm:$0xff]
      %v1867 = vld [vmem:[%s1649 + $0x12a] sm:$0xff]
      %v1868 = vld [vmem:[%s1649 + $0x13a] sm:$0xff]
      %v1869 = vld [vmem:[%s1649 + $0x142] sm:$0xff]
      %v1870 = vld [vmem:[%s1649 + $0x152] sm:$0xff]
      %v1871 = vld [vmem:[%s1649 + $0x15a] sm:$0xff]
      %v1872 = vld [vmem:[%s1649 + $0x16a] sm:$0xff]
      %v1873 = vld [vmem:[%s1649 + $0x172] sm:$0xff]
      %s1874 = scalar_lea.vmem [#allocation2], 48
      %v1875 = vld [vmem:[%s1874] sm:$0xff]
      %v1876 = vld [vmem:[%s1874 + $0x8] sm:$0xff]
      %v1877 = vld [vmem:[%s1874 + $0x18] sm:$0xff]
      %v1878 = vld [vmem:[%s1874 + $0x20] sm:$0xff]
      %v1879 = vld [vmem:[%s1874 + $0x30] sm:$0xff]
      %v1880 = vld [vmem:[%s1874 + $0x38] sm:$0xff]
      %v1881 = vld [vmem:[%s1874 + $0x48] sm:$0xff]
      %v1882 = vld [vmem:[%s1874 + $0x50] sm:$0xff]
      %v1883 = vld [vmem:[%s1874 + $0x60] sm:$0xff]
      %v1884 = vld [vmem:[%s1874 + $0x68] sm:$0xff]
      %v1885 = vld [vmem:[%s1874 + $0x78] sm:$0xff]
      %v1886 = vld [vmem:[%s1874 + $0x80] sm:$0xff]
      %v1887 = vld [vmem:[%s1874 + $0x90] sm:$0xff]
      %v1888 = vld [vmem:[%s1874 + $0x98] sm:$0xff]
      %v1889 = vld [vmem:[%s1874 + $0xa8] sm:$0xff]
      %v1890 = vld [vmem:[%s1874 + $0xb0] sm:$0xff]
      %v1891 = vld [vmem:[%s1874 + $0xc0] sm:$0xff]
      %v1892 = vld [vmem:[%s1874 + $0xc8] sm:$0xff]
      %v1893 = vld [vmem:[%s1874 + $0xd8] sm:$0xff]
      %v1894 = vld [vmem:[%s1874 + $0xe0] sm:$0xff]
      %v1895 = vld [vmem:[%s1874 + $0xf0] sm:$0xff]
      %v1896 = vld [vmem:[%s1874 + $0xf8] sm:$0xff]
      %v1897 = vld [vmem:[%s1874 + $0x108] sm:$0xff]
      %v1898 = vld [vmem:[%s1874 + $0x110] sm:$0xff]
      %v1899 = vld [vmem:[%s1874 + $0x120] sm:$0xff]
      %v1900 = vld [vmem:[%s1874 + $0x128] sm:$0xff]
      %v1901 = vld [vmem:[%s1874 + $0x138] sm:$0xff]
      %v1902 = vld [vmem:[%s1874 + $0x140] sm:$0xff]
      %v1903 = vld [vmem:[%s1874 + $0x150] sm:$0xff]
      %v1904 = vld [vmem:[%s1874 + $0x158] sm:$0xff]
      %v1905 = vld [vmem:[%s1874 + $0x168] sm:$0xff]
      %v1906 = vld [vmem:[%s1874 + $0x170] sm:$0xff]
      %v1907 = vld [vmem:[%s1874 + $0x1] sm:$0xff]
      %v1908 = vld [vmem:[%s1874 + $0x9] sm:$0xff]
      %v1909 = vld [vmem:[%s1874 + $0x19] sm:$0xff]
      %v1910 = vld [vmem:[%s1874 + $0x21] sm:$0xff]
      %v1911 = vld [vmem:[%s1874 + $0x31] sm:$0xff]
      %v1912 = vld [vmem:[%s1874 + $0x39] sm:$0xff]
      %v1913 = vld [vmem:[%s1874 + $0x49] sm:$0xff]
      %v1914 = vld [vmem:[%s1874 + $0x51] sm:$0xff]
      %v1915 = vld [vmem:[%s1874 + $0x61] sm:$0xff]
      %v1916 = vld [vmem:[%s1874 + $0x69] sm:$0xff]
      %v1917 = vld [vmem:[%s1874 + $0x79] sm:$0xff]
      %v1918 = vld [vmem:[%s1874 + $0x81] sm:$0xff]
      %v1919 = vld [vmem:[%s1874 + $0x91] sm:$0xff]
      %v1920 = vld [vmem:[%s1874 + $0x99] sm:$0xff]
      %v1921 = vld [vmem:[%s1874 + $0xa9] sm:$0xff]
      %v1922 = vld [vmem:[%s1874 + $0xb1] sm:$0xff]
      %v1923 = vld [vmem:[%s1874 + $0xc1] sm:$0xff]
      %v1924 = vld [vmem:[%s1874 + $0xc9] sm:$0xff]
      %v1925 = vld [vmem:[%s1874 + $0xd9] sm:$0xff]
      %v1926 = vld [vmem:[%s1874 + $0xe1] sm:$0xff]
      %v1927 = vld [vmem:[%s1874 + $0xf1] sm:$0xff]
      %v1928 = vld [vmem:[%s1874 + $0xf9] sm:$0xff]
      %v1929 = vld [vmem:[%s1874 + $0x109] sm:$0xff]
      %v1930 = vld [vmem:[%s1874 + $0x111] sm:$0xff]
      %v1931 = vld [vmem:[%s1874 + $0x121] sm:$0xff]
      %v1932 = vld [vmem:[%s1874 + $0x129] sm:$0xff]
      %v1933 = vld [vmem:[%s1874 + $0x139] sm:$0xff]
      %v1934 = vld [vmem:[%s1874 + $0x141] sm:$0xff]
      %v1935 = vld [vmem:[%s1874 + $0x151] sm:$0xff]
      %v1936 = vld [vmem:[%s1874 + $0x159] sm:$0xff]
      %v1937 = vld [vmem:[%s1874 + $0x169] sm:$0xff]
      %v1938 = vld [vmem:[%s1874 + $0x171] sm:$0xff]
      %v1939 = vld [vmem:[%s1874 + $0x2] sm:$0xff]
      %v1940 = vld [vmem:[%s1874 + $0xa] sm:$0xff]
      %v1941 = vld [vmem:[%s1874 + $0x1a] sm:$0xff]
      %v1942 = vld [vmem:[%s1874 + $0x22] sm:$0xff]
      %v1943 = vld [vmem:[%s1874 + $0x32] sm:$0xff]
      %v1944 = vld [vmem:[%s1874 + $0x3a] sm:$0xff]
      %v1945 = vld [vmem:[%s1874 + $0x4a] sm:$0xff]
      %v1946 = vld [vmem:[%s1874 + $0x52] sm:$0xff]
      %v1947 = vld [vmem:[%s1874 + $0x62] sm:$0xff]
      %v1948 = vld [vmem:[%s1874 + $0x6a] sm:$0xff]
      %v1949 = vld [vmem:[%s1874 + $0x7a] sm:$0xff]
      %v1950 = vld [vmem:[%s1874 + $0x82] sm:$0xff]
      %v1951 = vld [vmem:[%s1874 + $0x92] sm:$0xff]
      %v1952 = vld [vmem:[%s1874 + $0x9a] sm:$0xff]
      %v1953 = vld [vmem:[%s1874 + $0xaa] sm:$0xff]
      %v1954 = vld [vmem:[%s1874 + $0xb2] sm:$0xff]
      %v1955 = vld [vmem:[%s1874 + $0xc2] sm:$0xff]
      %v1956 = vld [vmem:[%s1874 + $0xca] sm:$0xff]
      %v1957 = vld [vmem:[%s1874 + $0xda] sm:$0xff]
      %v1958 = vld [vmem:[%s1874 + $0xe2] sm:$0xff]
      %v1959 = vld [vmem:[%s1874 + $0xf2] sm:$0xff]
      %v1960 = vld [vmem:[%s1874 + $0xfa] sm:$0xff]
      %v1961 = vld [vmem:[%s1874 + $0x10a] sm:$0xff]
      %v1962 = vld [vmem:[%s1874 + $0x112] sm:$0xff]
      %v1963 = vld [vmem:[%s1874 + $0x122] sm:$0xff]
      %v1964 = vld [vmem:[%s1874 + $0x12a] sm:$0xff]
      %v1965 = vld [vmem:[%s1874 + $0x13a] sm:$0xff]
      %v1966 = vld [vmem:[%s1874 + $0x142] sm:$0xff]
      %v1967 = vld [vmem:[%s1874 + $0x152] sm:$0xff]
      %v1968 = vld [vmem:[%s1874 + $0x15a] sm:$0xff]
      %v1969 = vld [vmem:[%s1874 + $0x16a] sm:$0xff]
      %v1970 = vld [vmem:[%s1874 + $0x172] sm:$0xff]
      %2003 = vrot.lane.b32.xlu0 %v1714, 32
      %v2004 = vpop.permute.xlu0 %2003
      %2005 = vrot.lane.b32.xlu0 %v1715, 32
      %v2006 = vpop.permute.xlu0 %2005
      %2007 = vrot.lane.b32.xlu0 %v1716, 32
      %v2008 = vpop.permute.xlu0 %2007
      %2009 = vrot.lane.b32.xlu0 %v1717, 32
      %v2010 = vpop.permute.xlu0 %2009
      %2011 = vrot.lane.b32.xlu0 %v1718, 32
      %v2012 = vpop.permute.xlu0 %2011
      %2013 = vrot.lane.b32.xlu0 %v1719, 32
      %v2014 = vpop.permute.xlu0 %2013
      %2015 = vrot.lane.b32.xlu0 %v1720, 32
      %v2016 = vpop.permute.xlu0 %2015
      %2017 = vrot.lane.b32.xlu0 %v1721, 32
      %v2018 = vpop.permute.xlu0 %2017
      %2019 = vrot.lane.b32.xlu0 %v1722, 32
      %v2020 = vpop.permute.xlu0 %2019
      %2021 = vrot.lane.b32.xlu0 %v1723, 32
      %v2022 = vpop.permute.xlu0 %2021
      %2023 = vrot.lane.b32.xlu0 %v1724, 32
      %v2024 = vpop.permute.xlu0 %2023
      %2025 = vrot.lane.b32.xlu0 %v1725, 32
      %v2026 = vpop.permute.xlu0 %2025
      %2027 = vrot.lane.b32.xlu0 %v1726, 32
      %v2028 = vpop.permute.xlu0 %2027
      %2029 = vrot.lane.b32.xlu0 %v1727, 32
      %v2030 = vpop.permute.xlu0 %2029
      %2031 = vrot.lane.b32.xlu0 %v1728, 32
      %v2032 = vpop.permute.xlu0 %2031
      %2033 = vrot.lane.b32.xlu0 %v1729, 32
      %v2034 = vpop.permute.xlu0 %2033
      %2035 = vrot.lane.b32.xlu0 %v1730, 32
      %v2036 = vpop.permute.xlu0 %2035
      %2037 = vrot.lane.b32.xlu0 %v1731, 32
      %v2038 = vpop.permute.xlu0 %2037
      %2039 = vrot.lane.b32.xlu0 %v1732, 32
      %v2040 = vpop.permute.xlu0 %2039
      %2041 = vrot.lane.b32.xlu0 %v1733, 32
      %v2042 = vpop.permute.xlu0 %2041
      %2043 = vrot.lane.b32.xlu0 %v1734, 32
      %v2044 = vpop.permute.xlu0 %2043
      %2045 = vrot.lane.b32.xlu0 %v1735, 32
      %v2046 = vpop.permute.xlu0 %2045
      %2047 = vrot.lane.b32.xlu0 %v1736, 32
      %v2048 = vpop.permute.xlu0 %2047
      %2049 = vrot.lane.b32.xlu0 %v1737, 32
      %v2050 = vpop.permute.xlu0 %2049
      %2051 = vrot.lane.b32.xlu0 %v1738, 32
      %v2052 = vpop.permute.xlu0 %2051
      %2053 = vrot.lane.b32.xlu0 %v1739, 32
      %v2054 = vpop.permute.xlu0 %2053
      %2055 = vrot.lane.b32.xlu0 %v1740, 32
      %v2056 = vpop.permute.xlu0 %2055
      %2057 = vrot.lane.b32.xlu0 %v1741, 32
      %v2058 = vpop.permute.xlu0 %2057
      %2059 = vrot.lane.b32.xlu0 %v1742, 32
      %v2060 = vpop.permute.xlu0 %2059
      %2061 = vrot.lane.b32.xlu0 %v1743, 32
      %v2062 = vpop.permute.xlu0 %2061
      %2063 = vrot.lane.b32.xlu0 %v1744, 32
      %v2064 = vpop.permute.xlu0 %2063
      %2065 = vrot.lane.b32.xlu0 %v1745, 32
      %v2066 = vpop.permute.xlu0 %2065
      %2131 = vrot.lane.b32.xlu0 %v1746, 64
      %v2132 = vpop.permute.xlu0 %2131
      %2133 = vrot.lane.b32.xlu0 %v1747, 64
      %v2134 = vpop.permute.xlu0 %2133
      %2135 = vrot.lane.b32.xlu0 %v1748, 64
      %v2136 = vpop.permute.xlu0 %2135
      %2137 = vrot.lane.b32.xlu0 %v1749, 64
      %v2138 = vpop.permute.xlu0 %2137
      %2139 = vrot.lane.b32.xlu0 %v1750, 64
      %v2140 = vpop.permute.xlu0 %2139
      %2141 = vrot.lane.b32.xlu0 %v1751, 64
      %v2142 = vpop.permute.xlu0 %2141
      %2143 = vrot.lane.b32.xlu0 %v1752, 64
      %v2144 = vpop.permute.xlu0 %2143
      %2145 = vrot.lane.b32.xlu0 %v1753, 64
      %v2146 = vpop.permute.xlu0 %2145
      %2147 = vrot.lane.b32.xlu0 %v1754, 64
      %v2148 = vpop.permute.xlu0 %2147
      %2149 = vrot.lane.b32.xlu0 %v1755, 64
      %v2150 = vpop.permute.xlu0 %2149
      %2151 = vrot.lane.b32.xlu0 %v1756, 64
      %v2152 = vpop.permute.xlu0 %2151
      %2153 = vrot.lane.b32.xlu0 %v1757, 64
      %v2154 = vpop.permute.xlu0 %2153
      %2155 = vrot.lane.b32.xlu0 %v1758, 64
      %v2156 = vpop.permute.xlu0 %2155
      %2157 = vrot.lane.b32.xlu0 %v1759, 64
      %v2158 = vpop.permute.xlu0 %2157
      %2159 = vrot.lane.b32.xlu0 %v1760, 64
      %v2160 = vpop.permute.xlu0 %2159
      %2161 = vrot.lane.b32.xlu0 %v1761, 64
      %v2162 = vpop.permute.xlu0 %2161
      %2163 = vrot.lane.b32.xlu0 %v1762, 64
      %v2164 = vpop.permute.xlu0 %2163
      %2165 = vrot.lane.b32.xlu0 %v1763, 64
      %v2166 = vpop.permute.xlu0 %2165
      %2167 = vrot.lane.b32.xlu0 %v1764, 64
      %v2168 = vpop.permute.xlu0 %2167
      %2169 = vrot.lane.b32.xlu0 %v1765, 64
      %v2170 = vpop.permute.xlu0 %2169
      %2171 = vrot.lane.b32.xlu0 %v1766, 64
      %v2172 = vpop.permute.xlu0 %2171
      %2173 = vrot.lane.b32.xlu0 %v1767, 64
      %v2174 = vpop.permute.xlu0 %2173
      %2175 = vrot.lane.b32.xlu0 %v1768, 64
      %v2176 = vpop.permute.xlu0 %2175
      %2177 = vrot.lane.b32.xlu0 %v1769, 64
      %v2178 = vpop.permute.xlu0 %2177
      %2179 = vrot.lane.b32.xlu0 %v1770, 64
      %v2180 = vpop.permute.xlu0 %2179
      %2181 = vrot.lane.b32.xlu0 %v1771, 64
      %v2182 = vpop.permute.xlu0 %2181
      %2183 = vrot.lane.b32.xlu0 %v1772, 64
      %v2184 = vpop.permute.xlu0 %2183
      %2185 = vrot.lane.b32.xlu0 %v1773, 64
      %v2186 = vpop.permute.xlu0 %2185
      %2187 = vrot.lane.b32.xlu0 %v1774, 64
      %v2188 = vpop.permute.xlu0 %2187
      %2189 = vrot.lane.b32.xlu0 %v1775, 64
      %v2190 = vpop.permute.xlu0 %2189
      %2191 = vrot.lane.b32.xlu0 %v1776, 64
      %v2192 = vpop.permute.xlu0 %2191
      %2193 = vrot.lane.b32.xlu0 %v1777, 64
      %v2194 = vpop.permute.xlu0 %2193
      %2259 = vrot.lane.b32.xlu0 %v1778, 96
      %v2260 = vpop.permute.xlu0 %2259
      %2261 = vrot.lane.b32.xlu0 %v1779, 96
      %v2262 = vpop.permute.xlu0 %2261
      %2263 = vrot.lane.b32.xlu0 %v1780, 96
      %v2264 = vpop.permute.xlu0 %2263
      %2265 = vrot.lane.b32.xlu0 %v1781, 96
      %v2266 = vpop.permute.xlu0 %2265
      %2267 = vrot.lane.b32.xlu0 %v1782, 96
      %v2268 = vpop.permute.xlu0 %2267
      %2269 = vrot.lane.b32.xlu0 %v1783, 96
      %v2270 = vpop.permute.xlu0 %2269
      %2271 = vrot.lane.b32.xlu0 %v1784, 96
      %v2272 = vpop.permute.xlu0 %2271
      %2273 = vrot.lane.b32.xlu0 %v1785, 96
      %v2274 = vpop.permute.xlu0 %2273
      %2275 = vrot.lane.b32.xlu0 %v1786, 96
      %v2276 = vpop.permute.xlu0 %2275
      %2277 = vrot.lane.b32.xlu0 %v1787, 96
      %v2278 = vpop.permute.xlu0 %2277
      %2279 = vrot.lane.b32.xlu0 %v1788, 96
      %v2280 = vpop.permute.xlu0 %2279
      %2281 = vrot.lane.b32.xlu0 %v1789, 96
      %v2282 = vpop.permute.xlu0 %2281
      %2283 = vrot.lane.b32.xlu0 %v1790, 96
      %v2284 = vpop.permute.xlu0 %2283
      %2285 = vrot.lane.b32.xlu0 %v1791, 96
      %v2286 = vpop.permute.xlu0 %2285
      %2287 = vrot.lane.b32.xlu0 %v1792, 96
      %v2288 = vpop.permute.xlu0 %2287
      %2289 = vrot.lane.b32.xlu0 %v1793, 96
      %v2290 = vpop.permute.xlu0 %2289
      %2291 = vrot.lane.b32.xlu0 %v1794, 96
      %v2292 = vpop.permute.xlu0 %2291
      %2293 = vrot.lane.b32.xlu0 %v1795, 96
      %v2294 = vpop.permute.xlu0 %2293
      %2295 = vrot.lane.b32.xlu0 %v1796, 96
      %v2296 = vpop.permute.xlu0 %2295
      %2297 = vrot.lane.b32.xlu0 %v1797, 96
      %v2298 = vpop.permute.xlu0 %2297
      %2299 = vrot.lane.b32.xlu0 %v1798, 96
      %v2300 = vpop.permute.xlu0 %2299
      %2301 = vrot.lane.b32.xlu0 %v1799, 96
      %v2302 = vpop.permute.xlu0 %2301
      %2303 = vrot.lane.b32.xlu0 %v1800, 96
      %v2304 = vpop.permute.xlu0 %2303
      %2305 = vrot.lane.b32.xlu0 %v1801, 96
      %v2306 = vpop.permute.xlu0 %2305
      %2307 = vrot.lane.b32.xlu0 %v1802, 96
      %v2308 = vpop.permute.xlu0 %2307
      %2309 = vrot.lane.b32.xlu0 %v1803, 96
      %v2310 = vpop.permute.xlu0 %2309
      %2311 = vrot.lane.b32.xlu0 %v1804, 96
      %v2312 = vpop.permute.xlu0 %2311
      %2313 = vrot.lane.b32.xlu0 %v1805, 96
      %v2314 = vpop.permute.xlu0 %2313
      %2315 = vrot.lane.b32.xlu0 %v1806, 96
      %v2316 = vpop.permute.xlu0 %2315
      %2317 = vrot.lane.b32.xlu0 %v1807, 96
      %v2318 = vpop.permute.xlu0 %2317
      %2319 = vrot.lane.b32.xlu0 %v1808, 96
      %v2320 = vpop.permute.xlu0 %2319
      %2321 = vrot.lane.b32.xlu0 %v1809, 96
      %v2322 = vpop.permute.xlu0 %2321
      %2387 = vrot.lane.b32.xlu0 %v1842, 32
      %v2388 = vpop.permute.xlu0 %2387
      %2389 = vrot.lane.b32.xlu0 %v1843, 32
      %v2390 = vpop.permute.xlu0 %2389
      %2391 = vrot.lane.b32.xlu0 %v1844, 32
      %v2392 = vpop.permute.xlu0 %2391
      %2393 = vrot.lane.b32.xlu0 %v1845, 32
      %v2394 = vpop.permute.xlu0 %2393
      %2395 = vrot.lane.b32.xlu0 %v1846, 32
      %v2396 = vpop.permute.xlu0 %2395
      %2397 = vrot.lane.b32.xlu0 %v1847, 32
      %v2398 = vpop.permute.xlu0 %2397
      %2399 = vrot.lane.b32.xlu0 %v1848, 32
      %v2400 = vpop.permute.xlu0 %2399
      %2401 = vrot.lane.b32.xlu0 %v1849, 32
      %v2402 = vpop.permute.xlu0 %2401
      %2403 = vrot.lane.b32.xlu0 %v1850, 32
      %v2404 = vpop.permute.xlu0 %2403
      %2405 = vrot.lane.b32.xlu0 %v1851, 32
      %v2406 = vpop.permute.xlu0 %2405
      %2407 = vrot.lane.b32.xlu0 %v1852, 32
      %v2408 = vpop.permute.xlu0 %2407
      %2409 = vrot.lane.b32.xlu0 %v1853, 32
      %v2410 = vpop.permute.xlu0 %2409
      %2411 = vrot.lane.b32.xlu0 %v1854, 32
      %v2412 = vpop.permute.xlu0 %2411
      %2413 = vrot.lane.b32.xlu0 %v1855, 32
      %v2414 = vpop.permute.xlu0 %2413
      %2415 = vrot.lane.b32.xlu0 %v1856, 32
      %v2416 = vpop.permute.xlu0 %2415
      %2417 = vrot.lane.b32.xlu0 %v1857, 32
      %v2418 = vpop.permute.xlu0 %2417
      %2419 = vrot.lane.b32.xlu0 %v1858, 32
      %v2420 = vpop.permute.xlu0 %2419
      %2421 = vrot.lane.b32.xlu0 %v1859, 32
      %v2422 = vpop.permute.xlu0 %2421
      %2423 = vrot.lane.b32.xlu0 %v1860, 32
      %v2424 = vpop.permute.xlu0 %2423
      %2425 = vrot.lane.b32.xlu0 %v1861, 32
      %v2426 = vpop.permute.xlu0 %2425
      %2427 = vrot.lane.b32.xlu0 %v1862, 32
      %v2428 = vpop.permute.xlu0 %2427
      %2429 = vrot.lane.b32.xlu0 %v1863, 32
      %v2430 = vpop.permute.xlu0 %2429
      %2431 = vrot.lane.b32.xlu0 %v1864, 32
      %v2432 = vpop.permute.xlu0 %2431
      %2433 = vrot.lane.b32.xlu0 %v1865, 32
      %v2434 = vpop.permute.xlu0 %2433
      %2435 = vrot.lane.b32.xlu0 %v1866, 32
      %v2436 = vpop.permute.xlu0 %2435
      %2437 = vrot.lane.b32.xlu0 %v1867, 32
      %v2438 = vpop.permute.xlu0 %2437
      %2439 = vrot.lane.b32.xlu0 %v1868, 32
      %v2440 = vpop.permute.xlu0 %2439
      %2441 = vrot.lane.b32.xlu0 %v1869, 32
      %v2442 = vpop.permute.xlu0 %2441
      %2443 = vrot.lane.b32.xlu0 %v1870, 32
      %v2444 = vpop.permute.xlu0 %2443
      %2445 = vrot.lane.b32.xlu0 %v1871, 32
      %v2446 = vpop.permute.xlu0 %2445
      %2447 = vrot.lane.b32.xlu0 %v1872, 32
      %v2448 = vpop.permute.xlu0 %2447
      %2449 = vrot.lane.b32.xlu0 %v1873, 32
      %v2450 = vpop.permute.xlu0 %2449
      %2515 = vrot.lane.b32.xlu0 %v1875, 64
      %v2516 = vpop.permute.xlu0 %2515
      %2517 = vrot.lane.b32.xlu0 %v1876, 64
      %v2518 = vpop.permute.xlu0 %2517
      %2519 = vrot.lane.b32.xlu0 %v1877, 64
      %v2520 = vpop.permute.xlu0 %2519
      %2521 = vrot.lane.b32.xlu0 %v1878, 64
      %v2522 = vpop.permute.xlu0 %2521
      %2523 = vrot.lane.b32.xlu0 %v1879, 64
      %v2524 = vpop.permute.xlu0 %2523
      %2525 = vrot.lane.b32.xlu0 %v1880, 64
      %v2526 = vpop.permute.xlu0 %2525
      %2527 = vrot.lane.b32.xlu0 %v1881, 64
      %v2528 = vpop.permute.xlu0 %2527
      %2529 = vrot.lane.b32.xlu0 %v1882, 64
      %v2530 = vpop.permute.xlu0 %2529
      %2531 = vrot.lane.b32.xlu0 %v1883, 64
      %v2532 = vpop.permute.xlu0 %2531
      %2533 = vrot.lane.b32.xlu0 %v1884, 64
      %v2534 = vpop.permute.xlu0 %2533
      %2535 = vrot.lane.b32.xlu0 %v1885, 64
      %v2536 = vpop.permute.xlu0 %2535
      %2537 = vrot.lane.b32.xlu0 %v1886, 64
      %v2538 = vpop.permute.xlu0 %2537
      %2539 = vrot.lane.b32.xlu0 %v1887, 64
      %v2540 = vpop.permute.xlu0 %2539
      %2541 = vrot.lane.b32.xlu0 %v1888, 64
      %v2542 = vpop.permute.xlu0 %2541
      %2543 = vrot.lane.b32.xlu0 %v1889, 64
      %v2544 = vpop.permute.xlu0 %2543
      %2545 = vrot.lane.b32.xlu0 %v1890, 64
      %v2546 = vpop.permute.xlu0 %2545
      %2547 = vrot.lane.b32.xlu0 %v1891, 64
      %v2548 = vpop.permute.xlu0 %2547
      %2549 = vrot.lane.b32.xlu0 %v1892, 64
      %v2550 = vpop.permute.xlu0 %2549
      %2551 = vrot.lane.b32.xlu0 %v1893, 64
      %v2552 = vpop.permute.xlu0 %2551
      %2553 = vrot.lane.b32.xlu0 %v1894, 64
      %v2554 = vpop.permute.xlu0 %2553
      %2555 = vrot.lane.b32.xlu0 %v1895, 64
      %v2556 = vpop.permute.xlu0 %2555
      %2557 = vrot.lane.b32.xlu0 %v1896, 64
      %v2558 = vpop.permute.xlu0 %2557
      %2559 = vrot.lane.b32.xlu0 %v1897, 64
      %v2560 = vpop.permute.xlu0 %2559
      %2561 = vrot.lane.b32.xlu0 %v1898, 64
      %v2562 = vpop.permute.xlu0 %2561
      %2563 = vrot.lane.b32.xlu0 %v1899, 64
      %v2564 = vpop.permute.xlu0 %2563
      %2565 = vrot.lane.b32.xlu0 %v1900, 64
      %v2566 = vpop.permute.xlu0 %2565
      %2567 = vrot.lane.b32.xlu0 %v1901, 64
      %v2568 = vpop.permute.xlu0 %2567
      %2569 = vrot.lane.b32.xlu0 %v1902, 64
      %v2570 = vpop.permute.xlu0 %2569
      %2571 = vrot.lane.b32.xlu0 %v1903, 64
      %v2572 = vpop.permute.xlu0 %2571
      %2573 = vrot.lane.b32.xlu0 %v1904, 64
      %v2574 = vpop.permute.xlu0 %2573
      %2575 = vrot.lane.b32.xlu0 %v1905, 64
      %v2576 = vpop.permute.xlu0 %2575
      %2577 = vrot.lane.b32.xlu0 %v1906, 64
      %v2578 = vpop.permute.xlu0 %2577
      %2643 = vrot.lane.b32.xlu0 %v1907, 96
      %v2644 = vpop.permute.xlu0 %2643
      %2645 = vrot.lane.b32.xlu0 %v1908, 96
      %v2646 = vpop.permute.xlu0 %2645
      %2647 = vrot.lane.b32.xlu0 %v1909, 96
      %v2648 = vpop.permute.xlu0 %2647
      %2649 = vrot.lane.b32.xlu0 %v1910, 96
      %v2650 = vpop.permute.xlu0 %2649
      %2651 = vrot.lane.b32.xlu0 %v1911, 96
      %v2652 = vpop.permute.xlu0 %2651
      %2653 = vrot.lane.b32.xlu0 %v1912, 96
      %v2654 = vpop.permute.xlu0 %2653
      %2655 = vrot.lane.b32.xlu0 %v1913, 96
      %v2656 = vpop.permute.xlu0 %2655
      %2657 = vrot.lane.b32.xlu0 %v1914, 96
      %v2658 = vpop.permute.xlu0 %2657
      %2659 = vrot.lane.b32.xlu0 %v1915, 96
      %v2660 = vpop.permute.xlu0 %2659
      %2661 = vrot.lane.b32.xlu0 %v1916, 96
      %v2662 = vpop.permute.xlu0 %2661
      %2663 = vrot.lane.b32.xlu0 %v1917, 96
      %v2664 = vpop.permute.xlu0 %2663
      %2665 = vrot.lane.b32.xlu0 %v1918, 96
      %v2666 = vpop.permute.xlu0 %2665
      %2667 = vrot.lane.b32.xlu0 %v1919, 96
      %v2668 = vpop.permute.xlu0 %2667
      %2669 = vrot.lane.b32.xlu0 %v1920, 96
      %v2670 = vpop.permute.xlu0 %2669
      %2671 = vrot.lane.b32.xlu0 %v1921, 96
      %v2672 = vpop.permute.xlu0 %2671
      %2673 = vrot.lane.b32.xlu0 %v1922, 96
      %v2674 = vpop.permute.xlu0 %2673
      %2675 = vrot.lane.b32.xlu0 %v1923, 96
      %v2676 = vpop.permute.xlu0 %2675
      %2677 = vrot.lane.b32.xlu0 %v1924, 96
      %v2678 = vpop.permute.xlu0 %2677
      %2679 = vrot.lane.b32.xlu0 %v1925, 96
      %v2680 = vpop.permute.xlu0 %2679
      %2681 = vrot.lane.b32.xlu0 %v1926, 96
      %v2682 = vpop.permute.xlu0 %2681
      %2683 = vrot.lane.b32.xlu0 %v1927, 96
      %v2684 = vpop.permute.xlu0 %2683
      %2685 = vrot.lane.b32.xlu0 %v1928, 96
      %v2686 = vpop.permute.xlu0 %2685
      %2687 = vrot.lane.b32.xlu0 %v1929, 96
      %v2688 = vpop.permute.xlu0 %2687
      %2689 = vrot.lane.b32.xlu0 %v1930, 96
      %v2690 = vpop.permute.xlu0 %2689
      %2691 = vrot.lane.b32.xlu0 %v1931, 96
      %v2692 = vpop.permute.xlu0 %2691
      %2693 = vrot.lane.b32.xlu0 %v1932, 96
      %v2694 = vpop.permute.xlu0 %2693
      %2695 = vrot.lane.b32.xlu0 %v1933, 96
      %v2696 = vpop.permute.xlu0 %2695
      %2697 = vrot.lane.b32.xlu0 %v1934, 96
      %v2698 = vpop.permute.xlu0 %2697
      %2699 = vrot.lane.b32.xlu0 %v1935, 96
      %v2700 = vpop.permute.xlu0 %2699
      %2701 = vrot.lane.b32.xlu0 %v1936, 96
      %v2702 = vpop.permute.xlu0 %2701
      %2703 = vrot.lane.b32.xlu0 %v1937, 96
      %v2704 = vpop.permute.xlu0 %2703
      %2705 = vrot.lane.b32.xlu0 %v1938, 96
      %v2706 = vpop.permute.xlu0 %2705
      %v2739 = vsel %vm418, %v1682, %v2004
      %v2740 = vsel %vm418, %v1683, %v2006
      %v2741 = vsel %vm418, %v1684, %v2008
      %v2742 = vsel %vm418, %v1685, %v2010
      %v2743 = vsel %vm418, %v1686, %v2012
      %v2744 = vsel %vm418, %v1687, %v2014
      %v2745 = vsel %vm418, %v1688, %v2016
      %v2746 = vsel %vm418, %v1689, %v2018
      %v2747 = vsel %vm418, %v1690, %v2020
      %v2748 = vsel %vm418, %v1691, %v2022
      %v2749 = vsel %vm418, %v1692, %v2024
      %v2750 = vsel %vm418, %v1693, %v2026
      %v2751 = vsel %vm418, %v1694, %v2028
      %v2752 = vsel %vm418, %v1695, %v2030
      %v2753 = vsel %vm418, %v1696, %v2032
      %v2754 = vsel %vm418, %v1697, %v2034
      %v2755 = vsel %vm418, %v1698, %v2036
      %v2756 = vsel %vm418, %v1699, %v2038
      %v2757 = vsel %vm418, %v1700, %v2040
      %v2758 = vsel %vm418, %v1701, %v2042
      %v2759 = vsel %vm418, %v1702, %v2044
      %v2760 = vsel %vm418, %v1703, %v2046
      %v2761 = vsel %vm418, %v1704, %v2048
      %v2762 = vsel %vm418, %v1705, %v2050
      %v2763 = vsel %vm418, %v1706, %v2052
      %v2764 = vsel %vm418, %v1707, %v2054
      %v2765 = vsel %vm418, %v1708, %v2056
      %v2766 = vsel %vm418, %v1709, %v2058
      %v2767 = vsel %vm418, %v1710, %v2060
      %v2768 = vsel %vm418, %v1711, %v2062
      %v2769 = vsel %vm418, %v1712, %v2064
      %v2770 = vsel %vm418, %v1713, %v2066
      %vm2771 = vcmask 523264
      %v2772 = vsel %vm2771, %v2739, %v2132
      %v2773 = vsel %vm2771, %v2740, %v2134
      %v2774 = vsel %vm2771, %v2741, %v2136
      %v2775 = vsel %vm2771, %v2742, %v2138
      %v2776 = vsel %vm2771, %v2743, %v2140
      %v2777 = vsel %vm2771, %v2744, %v2142
      %v2778 = vsel %vm2771, %v2745, %v2144
      %v2779 = vsel %vm2771, %v2746, %v2146
      %v2780 = vsel %vm2771, %v2747, %v2148
      %v2781 = vsel %vm2771, %v2748, %v2150
      %v2782 = vsel %vm2771, %v2749, %v2152
      %v2783 = vsel %vm2771, %v2750, %v2154
      %v2784 = vsel %vm2771, %v2751, %v2156
      %v2785 = vsel %vm2771, %v2752, %v2158
      %v2786 = vsel %vm2771, %v2753, %v2160
      %v2787 = vsel %vm2771, %v2754, %v2162
      %v2788 = vsel %vm2771, %v2755, %v2164
      %v2789 = vsel %vm2771, %v2756, %v2166
      %v2790 = vsel %vm2771, %v2757, %v2168
      %v2791 = vsel %vm2771, %v2758, %v2170
      %v2792 = vsel %vm2771, %v2759, %v2172
      %v2793 = vsel %vm2771, %v2760, %v2174
      %v2794 = vsel %vm2771, %v2761, %v2176
      %v2795 = vsel %vm2771, %v2762, %v2178
      %v2796 = vsel %vm2771, %v2763, %v2180
      %v2797 = vsel %vm2771, %v2764, %v2182
      %v2798 = vsel %vm2771, %v2765, %v2184
      %v2799 = vsel %vm2771, %v2766, %v2186
      %v2800 = vsel %vm2771, %v2767, %v2188
      %v2801 = vsel %vm2771, %v2768, %v2190
      %v2802 = vsel %vm2771, %v2769, %v2192
      %v2803 = vsel %vm2771, %v2770, %v2194
      %vm2804 = vcmask 785408
      %v2805 = vsel %vm2804, %v2772, %v2260
      %v2806 = vsel %vm2804, %v2773, %v2262
      %v2807 = vsel %vm2804, %v2774, %v2264
      %v2808 = vsel %vm2804, %v2775, %v2266
      %v2809 = vsel %vm2804, %v2776, %v2268
      %v2810 = vsel %vm2804, %v2777, %v2270
      %v2811 = vsel %vm2804, %v2778, %v2272
      %v2812 = vsel %vm2804, %v2779, %v2274
      %v2813 = vsel %vm2804, %v2780, %v2276
      %v2814 = vsel %vm2804, %v2781, %v2278
      %v2815 = vsel %vm2804, %v2782, %v2280
      %v2816 = vsel %vm2804, %v2783, %v2282
      %v2817 = vsel %vm2804, %v2784, %v2284
      %v2818 = vsel %vm2804, %v2785, %v2286
      %v2819 = vsel %vm2804, %v2786, %v2288
      %v2820 = vsel %vm2804, %v2787, %v2290
      %v2821 = vsel %vm2804, %v2788, %v2292
      %v2822 = vsel %vm2804, %v2789, %v2294
      %v2823 = vsel %vm2804, %v2790, %v2296
      %v2824 = vsel %vm2804, %v2791, %v2298
      %v2825 = vsel %vm2804, %v2792, %v2300
      %v2826 = vsel %vm2804, %v2793, %v2302
      %v2827 = vsel %vm2804, %v2794, %v2304
      %v2828 = vsel %vm2804, %v2795, %v2306
      %v2829 = vsel %vm2804, %v2796, %v2308
      %v2830 = vsel %vm2804, %v2797, %v2310
      %v2831 = vsel %vm2804, %v2798, %v2312
      %v2832 = vsel %vm2804, %v2799, %v2314
      %v2833 = vsel %vm2804, %v2800, %v2316
      %v2834 = vsel %vm2804, %v2801, %v2318
      %v2835 = vsel %vm2804, %v2802, %v2320
      %v2836 = vsel %vm2804, %v2803, %v2322
      %v2837 = vsel %vm418, %v1810, %v2388
      %v2838 = vsel %vm418, %v1811, %v2390
      %v2839 = vsel %vm418, %v1812, %v2392
      %v2840 = vsel %vm418, %v1813, %v2394
      %v2841 = vsel %vm418, %v1814, %v2396
      %v2842 = vsel %vm418, %v1815, %v2398
      %v2843 = vsel %vm418, %v1816, %v2400
      %v2844 = vsel %vm418, %v1817, %v2402
      %v2845 = vsel %vm418, %v1818, %v2404
      %v2846 = vsel %vm418, %v1819, %v2406
      %v2847 = vsel %vm418, %v1820, %v2408
      %v2848 = vsel %vm418, %v1821, %v2410
      %v2849 = vsel %vm418, %v1822, %v2412
      %v2850 = vsel %vm418, %v1823, %v2414
      %v2851 = vsel %vm418, %v1824, %v2416
      %v2852 = vsel %vm418, %v1825, %v2418
      %v2853 = vsel %vm418, %v1826, %v2420
      %v2854 = vsel %vm418, %v1827, %v2422
      %v2855 = vsel %vm418, %v1828, %v2424
      %v2856 = vsel %vm418, %v1829, %v2426
      %v2857 = vsel %vm418, %v1830, %v2428
      %v2858 = vsel %vm418, %v1831, %v2430
      %v2859 = vsel %vm418, %v1832, %v2432
      %v2860 = vsel %vm418, %v1833, %v2434
      %v2861 = vsel %vm418, %v1834, %v2436
      %v2862 = vsel %vm418, %v1835, %v2438
      %v2863 = vsel %vm418, %v1836, %v2440
      %v2864 = vsel %vm418, %v1837, %v2442
      %v2865 = vsel %vm418, %v1838, %v2444
      %v2866 = vsel %vm418, %v1839, %v2446
      %v2867 = vsel %vm418, %v1840, %v2448
      %v2868 = vsel %vm418, %v1841, %v2450
      %v2869 = vsel %vm2771, %v2837, %v2516
      %v2870 = vsel %vm2771, %v2838, %v2518
      %v2871 = vsel %vm2771, %v2839, %v2520
      %v2872 = vsel %vm2771, %v2840, %v2522
      %v2873 = vsel %vm2771, %v2841, %v2524
      %v2874 = vsel %vm2771, %v2842, %v2526
      %v2875 = vsel %vm2771, %v2843, %v2528
      %v2876 = vsel %vm2771, %v2844, %v2530
      %v2877 = vsel %vm2771, %v2845, %v2532
      %v2878 = vsel %vm2771, %v2846, %v2534
      %v2879 = vsel %vm2771, %v2847, %v2536
      %v2880 = vsel %vm2771, %v2848, %v2538
      %v2881 = vsel %vm2771, %v2849, %v2540
      %v2882 = vsel %vm2771, %v2850, %v2542
      %v2883 = vsel %vm2771, %v2851, %v2544
      %v2884 = vsel %vm2771, %v2852, %v2546
      %v2885 = vsel %vm2771, %v2853, %v2548
      %v2886 = vsel %vm2771, %v2854, %v2550
      %v2887 = vsel %vm2771, %v2855, %v2552
      %v2888 = vsel %vm2771, %v2856, %v2554
      %v2889 = vsel %vm2771, %v2857, %v2556
      %v2890 = vsel %vm2771, %v2858, %v2558
      %v2891 = vsel %vm2771, %v2859, %v2560
      %v2892 = vsel %vm2771, %v2860, %v2562
      %v2893 = vsel %vm2771, %v2861, %v2564
      %v2894 = vsel %vm2771, %v2862, %v2566
      %v2895 = vsel %vm2771, %v2863, %v2568
      %v2896 = vsel %vm2771, %v2864, %v2570
      %v2897 = vsel %vm2771, %v2865, %v2572
      %v2898 = vsel %vm2771, %v2866, %v2574
      %v2899 = vsel %vm2771, %v2867, %v2576
      %v2900 = vsel %vm2771, %v2868, %v2578
      %v2901 = vsel %vm2804, %v2869, %v2644
      %v2902 = vsel %vm2804, %v2870, %v2646
      %v2903 = vsel %vm2804, %v2871, %v2648
      %v2904 = vsel %vm2804, %v2872, %v2650
      %v2905 = vsel %vm2804, %v2873, %v2652
      %v2906 = vsel %vm2804, %v2874, %v2654
      %v2907 = vsel %vm2804, %v2875, %v2656
      %v2908 = vsel %vm2804, %v2876, %v2658
      %v2909 = vsel %vm2804, %v2877, %v2660
      %v2910 = vsel %vm2804, %v2878, %v2662
      %v2911 = vsel %vm2804, %v2879, %v2664
      %v2912 = vsel %vm2804, %v2880, %v2666
      %v2913 = vsel %vm2804, %v2881, %v2668
      %v2914 = vsel %vm2804, %v2882, %v2670
      %v2915 = vsel %vm2804, %v2883, %v2672
      %v2916 = vsel %vm2804, %v2884, %v2674
      %v2917 = vsel %vm2804, %v2885, %v2676
      %v2918 = vsel %vm2804, %v2886, %v2678
      %v2919 = vsel %vm2804, %v2887, %v2680
      %v2920 = vsel %vm2804, %v2888, %v2682
      %v2921 = vsel %vm2804, %v2889, %v2684
      %v2922 = vsel %vm2804, %v2890, %v2686
      %v2923 = vsel %vm2804, %v2891, %v2688
      %v2924 = vsel %vm2804, %v2892, %v2690
      %v2925 = vsel %vm2804, %v2893, %v2692
      %v2926 = vsel %vm2804, %v2894, %v2694
      %v2927 = vsel %vm2804, %v2895, %v2696
      %v2928 = vsel %vm2804, %v2896, %v2698
      %v2929 = vsel %vm2804, %v2897, %v2700
      %v2930 = vsel %vm2804, %v2898, %v2702
      %v2931 = vsel %vm2804, %v2899, %v2704
      %v2932 = vsel %vm2804, %v2900, %v2706
      %v2933 = vld [vmem:[%s3] sm:$0xff]
      %v2934 = vld [vmem:[%s3 + $0x8] sm:$0xff]
      %v2935 = vld [vmem:[%s3 + $0x10] sm:$0xff]
      %v2936 = vld [vmem:[%s3 + $0x18] sm:$0xff]
      %v2937 = vld [vmem:[%s3 + $0x20] sm:$0xff]
      %v2938 = vld [vmem:[%s3 + $0x28] sm:$0xff]
      %v2939 = vld [vmem:[%s3 + $0x30] sm:$0xff]
      %v2940 = vld [vmem:[%s3 + $0x38] sm:$0xff]
      %v2941 = vld [vmem:[%s3 + $0x40] sm:$0xff]
      %v2942 = vld [vmem:[%s3 + $0x48] sm:$0xff]
      %v2943 = vld [vmem:[%s3 + $0x50] sm:$0xff]
      %v2944 = vld [vmem:[%s3 + $0x58] sm:$0xff]
      %v2945 = vld [vmem:[%s3 + $0x60] sm:$0xff]
      %v2946 = vld [vmem:[%s3 + $0x68] sm:$0xff]
      %v2947 = vld [vmem:[%s3 + $0x70] sm:$0xff]
      %v2948 = vld [vmem:[%s3 + $0x78] sm:$0xff]
      %v2949 = vld [vmem:[%s3 + $0x80] sm:$0xff]
      %v2950 = vld [vmem:[%s3 + $0x88] sm:$0xff]
      %v2951 = vld [vmem:[%s3 + $0x90] sm:$0xff]
      %v2952 = vld [vmem:[%s3 + $0x98] sm:$0xff]
      %v2953 = vld [vmem:[%s3 + $0xa0] sm:$0xff]
      %v2954 = vld [vmem:[%s3 + $0xa8] sm:$0xff]
      %v2955 = vld [vmem:[%s3 + $0xb0] sm:$0xff]
      %v2956 = vld [vmem:[%s3 + $0xb8] sm:$0xff]
      %v2957 = vld [vmem:[%s3 + $0xc0] sm:$0xff]
      %v2958 = vld [vmem:[%s3 + $0xc8] sm:$0xff]
      %v2959 = vld [vmem:[%s3 + $0xd0] sm:$0xff]
      %v2960 = vld [vmem:[%s3 + $0xd8] sm:$0xff]
      %v2961 = vld [vmem:[%s3 + $0xe0] sm:$0xff]
      %v2962 = vld [vmem:[%s3 + $0xe8] sm:$0xff]
      %v2963 = vld [vmem:[%s3 + $0xf0] sm:$0xff]
      %v2964 = vld [vmem:[%s3 + $0xf8] sm:$0xff]
      %v2965 = vld [vmem:[%s3 + $0x100] sm:$0xff]
      %v2966 = vld [vmem:[%s3 + $0x108] sm:$0xff]
      %v2967 = vld [vmem:[%s3 + $0x110] sm:$0xff]
      %v2968 = vld [vmem:[%s3 + $0x118] sm:$0xff]
      %v2969 = vld [vmem:[%s4] sm:$0x1]
      %v2971 = vlaneseq
      %v2972 = vshrl.u32 %v2971, 7
      %v2973 = vsub.s32 0, %v2972
      %v2974 = vrot.slane %v2969, %v2973
      %v2977 = vsel %vm418, %v1939, 0
      %v2980 = vsel %vm418, %v1940, 0
      %v2983 = vsel %vm418, %v1941, 0
      %v2986 = vsel %vm418, %v1942, 0
      %v2989 = vsel %vm418, %v1943, 0
      %v2992 = vsel %vm418, %v1944, 0
      %v2995 = vsel %vm418, %v1945, 0
      %v2998 = vsel %vm418, %v1946, 0
      %v3001 = vsel %vm418, %v1947, 0
      %v3004 = vsel %vm418, %v1948, 0
      %v3007 = vsel %vm418, %v1949, 0
      %v3010 = vsel %vm418, %v1950, 0
      %v3013 = vsel %vm418, %v1951, 0
      %v3016 = vsel %vm418, %v1952, 0
      %v3019 = vsel %vm418, %v1953, 0
      %v3022 = vsel %vm418, %v1954, 0
      %v3025 = vsel %vm418, %v1955, 0
      %v3028 = vsel %vm418, %v1956, 0
      %v3031 = vsel %vm418, %v1957, 0
      %v3034 = vsel %vm418, %v1958, 0
      %v3037 = vsel %vm418, %v1959, 0
      %v3040 = vsel %vm418, %v1960, 0
      %v3043 = vsel %vm418, %v1961, 0
      %v3046 = vsel %vm418, %v1962, 0
      %v3049 = vsel %vm418, %v1963, 0
      %v3052 = vsel %vm418, %v1964, 0
      %v3055 = vsel %vm418, %v1965, 0
      %v3058 = vsel %vm418, %v1966, 0
      %v3061 = vsel %vm418, %v1967, 0
      %v3064 = vsel %vm418, %v1968, 0
      %v3067 = vsel %vm418, %v1969, 0
      %v3070 = vsel %vm418, %v1970, 0
      %3072 = vmatprep.subr.mxu0 0.0
      %3073 = vmatpush1.msra.mxu0 %v2948
      %3074 = vmatprep.subr.mxu0 0.0
      %3075 = vmatpush1.msra.mxu0 %v2947
      %3076 = vmatprep.subr.mxu0 0.0
      %3077 = vmatpush1.msra.mxu0 %v2946
      %3078 = vmatprep.subr.mxu0 0.0
      %3079 = vmatpush1.msra.mxu0 %v2945
      %3080 = vmatprep.subr.mxu0 0.0
      %3081 = vmatpush1.msra.mxu0 %v2944
      %3082 = vmatprep.subr.mxu0 0.0
      %3083 = vmatpush1.msra.mxu0 %v2943
      %3084 = vmatprep.subr.mxu0 0.0
      %3085 = vmatpush1.msra.mxu0 %v2942
      %3086 = vmatprep.subr.mxu0 0.0
      %3087 = vmatpush1.msra.mxu0 %v2941
      %3088 = vmatprep.subr.mxu0 0.0
      %3089 = vmatpush1.msra.mxu0 %v2940
      %3090 = vmatprep.subr.mxu0 0.0
      %3091 = vmatpush1.msra.mxu0 %v2939
      %3092 = vmatprep.subr.mxu0 0.0
      %3093 = vmatpush1.msra.mxu0 %v2938
      %3094 = vmatprep.subr.mxu0 0.0
      %3095 = vmatpush1.msra.mxu0 %v2937
      %3096 = vmatprep.subr.mxu0 0.0
      %3097 = vmatpush1.msra.mxu0 %v2936
      %3098 = vmatprep.subr.mxu0 0.0
      %3099 = vmatpush1.msra.mxu0 %v2935
      %3100 = vmatprep.subr.mxu0 0.0
      %3101 = vmatpush1.msra.mxu0 %v2934
      %3102 = vmatprep.subr.mxu0 0.0
      %3103 = vmatpush1.msra.mxu0 %v2933
      %3104 = vmatprep.subr.mxu0 0.0
      %3105 = vmatpush2.msra.mxu0 %v2964
      %3106 = vmatprep.subr.mxu0 0.0
      %3107 = vmatpush2.msra.mxu0 %v2963
      %3108 = vmatprep.subr.mxu0 0.0
      %3109 = vmatpush2.msra.mxu0 %v2962
      %3110 = vmatprep.subr.mxu0 0.0
      %3111 = vmatpush2.msra.mxu0 %v2961
      %3112 = vmatprep.subr.mxu0 0.0
      %3113 = vmatpush2.msra.mxu0 %v2960
      %3114 = vmatprep.subr.mxu0 0.0
      %3115 = vmatpush2.msra.mxu0 %v2959
      %3116 = vmatprep.subr.mxu0 0.0
      %3117 = vmatpush2.msra.mxu0 %v2958
      %3118 = vmatprep.subr.mxu0 0.0
      %3119 = vmatpush2.msra.mxu0 %v2957
      %3120 = vmatprep.subr.mxu0 0.0
      %3121 = vmatpush2.msra.mxu0 %v2956
      %3122 = vmatprep.subr.mxu0 0.0
      %3123 = vmatpush2.msra.mxu0 %v2955
      %3124 = vmatprep.subr.mxu0 0.0
      %3125 = vmatpush2.msra.mxu0 %v2954
      %3126 = vmatprep.subr.mxu0 0.0
      %3127 = vmatpush2.msra.mxu0 %v2953
      %3128 = vmatprep.subr.mxu0 0.0
      %3129 = vmatpush2.msra.mxu0 %v2952
      %3130 = vmatprep.subr.mxu0 0.0
      %3131 = vmatpush2.msra.mxu0 %v2951
      %3132 = vmatprep.subr.mxu0 0.0
      %3133 = vmatpush2.msra.mxu0 %v2950
      %3134 = vmatprep.subr.mxu0 0.0
      %3135 = vmatpush2.msra.mxu0 %v2949
      %3136 = vmatprep.mubr.f32.mxu0 %v2901
      %3137 = vmatmul.mubr.f32.gmra.mxu0 %v2805
      %v3138 = vpop.f32.mrf.mxu0
      %v3139 = vadd.f32 %v2974, %v3138
      %v3140 = vpop.f32.mrf.mxu0
      %3141 = vmatprep.mubr.f32.mxu0 %v2902
      %3142 = vmatmul.mubr.f32.gmra.mxu0 %v2806
      %v3143 = vpop.f32.mrf.mxu0
      %v3144 = vadd.f32 %v2974, %v3143
      %v3145 = vpop.f32.mrf.mxu0
      %3146 = vmatprep.mubr.f32.mxu0 %v2903
      %3147 = vmatmul.mubr.f32.gmra.mxu0 %v2807
      %v3148 = vpop.f32.mrf.mxu0
      %v3149 = vadd.f32 %v2974, %v3148
      %v3150 = vpop.f32.mrf.mxu0
      %3151 = vmatprep.mubr.f32.mxu0 %v2904
      %3152 = vmatmul.mubr.f32.gmra.mxu0 %v2808
      %v3153 = vpop.f32.mrf.mxu0
      %v3154 = vadd.f32 %v2974, %v3153
      %v3155 = vpop.f32.mrf.mxu0
      %3156 = vmatprep.mubr.f32.mxu0 %v2905
      %3157 = vmatmul.mubr.f32.gmra.mxu0 %v2809
      %v3158 = vpop.f32.mrf.mxu0
      %v3159 = vadd.f32 %v2974, %v3158
      %v3160 = vpop.f32.mrf.mxu0
      %3161 = vmatprep.mubr.f32.mxu0 %v2906
      %3162 = vmatmul.mubr.f32.gmra.mxu0 %v2810
      %v3163 = vpop.f32.mrf.mxu0
      %v3164 = vadd.f32 %v2974, %v3163
      %v3165 = vpop.f32.mrf.mxu0
      %3166 = vmatprep.mubr.f32.mxu0 %v2907
      %3167 = vmatmul.mubr.f32.gmra.mxu0 %v2811
      %v3168 = vpop.f32.mrf.mxu0
      %v3169 = vadd.f32 %v2974, %v3168
      %v3170 = vpop.f32.mrf.mxu0
      %3171 = vmatprep.mubr.f32.mxu0 %v2908
      %3172 = vmatmul.mubr.f32.gmra.mxu0 %v2812
      %v3173 = vpop.f32.mrf.mxu0
      %v3174 = vadd.f32 %v2974, %v3173
      %v3175 = vpop.f32.mrf.mxu0
      %3176 = vmatprep.mubr.f32.mxu0 %v2909
      %3177 = vmatmul.mubr.f32.gmra.mxu0 %v2813
      %v3178 = vpop.f32.mrf.mxu0
      %v3179 = vadd.f32 %v2974, %v3178
      %v3180 = vpop.f32.mrf.mxu0
      %3181 = vmatprep.mubr.f32.mxu0 %v2910
      %3182 = vmatmul.mubr.f32.gmra.mxu0 %v2814
      %v3183 = vpop.f32.mrf.mxu0
      %v3184 = vadd.f32 %v2974, %v3183
      %v3185 = vpop.f32.mrf.mxu0
      %3186 = vmatprep.mubr.f32.mxu0 %v2911
      %3187 = vmatmul.mubr.f32.gmra.mxu0 %v2815
      %v3188 = vpop.f32.mrf.mxu0
      %v3189 = vadd.f32 %v2974, %v3188
      %v3190 = vpop.f32.mrf.mxu0
      %3191 = vmatprep.mubr.f32.mxu0 %v2912
      %3192 = vmatmul.mubr.f32.gmra.mxu0 %v2816
      %v3193 = vpop.f32.mrf.mxu0
      %v3194 = vadd.f32 %v2974, %v3193
      %v3195 = vpop.f32.mrf.mxu0
      %3196 = vmatprep.mubr.f32.mxu0 %v2913
      %3197 = vmatmul.mubr.f32.gmra.mxu0 %v2817
      %v3198 = vpop.f32.mrf.mxu0
      %v3199 = vadd.f32 %v2974, %v3198
      %v3200 = vpop.f32.mrf.mxu0
      %3201 = vmatprep.mubr.f32.mxu0 %v2914
      %3202 = vmatmul.mubr.f32.gmra.mxu0 %v2818
      %v3203 = vpop.f32.mrf.mxu0
      %v3204 = vadd.f32 %v2974, %v3203
      %v3205 = vpop.f32.mrf.mxu0
      %3206 = vmatprep.mubr.f32.mxu0 %v2915
      %3207 = vmatmul.mubr.f32.gmra.mxu0 %v2819
      %v3208 = vpop.f32.mrf.mxu0
      %v3209 = vadd.f32 %v2974, %v3208
      %v3210 = vpop.f32.mrf.mxu0
      %3211 = vmatprep.mubr.f32.mxu0 %v2916
      %3212 = vmatmul.mubr.f32.gmra.mxu0 %v2820
      %v3213 = vpop.f32.mrf.mxu0
      %v3214 = vadd.f32 %v2974, %v3213
      %v3215 = vpop.f32.mrf.mxu0
      %3216 = vmatprep.mubr.f32.mxu0 %v2917
      %3217 = vmatmul.mubr.f32.gmra.mxu0 %v2821
      %v3218 = vpop.f32.mrf.mxu0
      %v3219 = vadd.f32 %v2974, %v3218
      %v3220 = vpop.f32.mrf.mxu0
      %3221 = vmatprep.mubr.f32.mxu0 %v2918
      %3222 = vmatmul.mubr.f32.gmra.mxu0 %v2822
      %v3223 = vpop.f32.mrf.mxu0
      %v3224 = vadd.f32 %v2974, %v3223
      %v3225 = vpop.f32.mrf.mxu0
      %3226 = vmatprep.mubr.f32.mxu0 %v2919
      %3227 = vmatmul.mubr.f32.gmra.mxu0 %v2823
      %v3228 = vpop.f32.mrf.mxu0
      %v3229 = vadd.f32 %v2974, %v3228
      %v3230 = vpop.f32.mrf.mxu0
      %3231 = vmatprep.mubr.f32.mxu0 %v2920
      %3232 = vmatmul.mubr.f32.gmra.mxu0 %v2824
      %v3233 = vpop.f32.mrf.mxu0
      %v3234 = vadd.f32 %v2974, %v3233
      %v3235 = vpop.f32.mrf.mxu0
      %3236 = vmatprep.mubr.f32.mxu0 %v2921
      %3237 = vmatmul.mubr.f32.gmra.mxu0 %v2825
      %v3238 = vpop.f32.mrf.mxu0
      %v3239 = vadd.f32 %v2974, %v3238
      %v3240 = vpop.f32.mrf.mxu0
      %3241 = vmatprep.mubr.f32.mxu0 %v2922
      %3242 = vmatmul.mubr.f32.gmra.mxu0 %v2826
      %v3243 = vpop.f32.mrf.mxu0
      %v3244 = vadd.f32 %v2974, %v3243
      %v3245 = vpop.f32.mrf.mxu0
      %3246 = vmatprep.mubr.f32.mxu0 %v2923
      %3247 = vmatmul.mubr.f32.gmra.mxu0 %v2827
      %v3248 = vpop.f32.mrf.mxu0
      %v3249 = vadd.f32 %v2974, %v3248
      %v3250 = vpop.f32.mrf.mxu0
      %3251 = vmatprep.mubr.f32.mxu0 %v2924
      %3252 = vmatmul.mubr.f32.gmra.mxu0 %v2828
      %v3253 = vpop.f32.mrf.mxu0
      %v3254 = vadd.f32 %v2974, %v3253
      %v3255 = vpop.f32.mrf.mxu0
      %3256 = vmatprep.mubr.f32.mxu0 %v2925
      %3257 = vmatmul.mubr.f32.gmra.mxu0 %v2829
      %v3258 = vpop.f32.mrf.mxu0
      %v3259 = vadd.f32 %v2974, %v3258
      %v3260 = vpop.f32.mrf.mxu0
      %3261 = vmatprep.mubr.f32.mxu0 %v2926
      %3262 = vmatmul.mubr.f32.gmra.mxu0 %v2830
      %v3263 = vpop.f32.mrf.mxu0
      %v3264 = vadd.f32 %v2974, %v3263
      %v3265 = vpop.f32.mrf.mxu0
      %3266 = vmatprep.mubr.f32.mxu0 %v2927
      %3267 = vmatmul.mubr.f32.gmra.mxu0 %v2831
      %v3268 = vpop.f32.mrf.mxu0
      %v3269 = vadd.f32 %v2974, %v3268
      %v3270 = vpop.f32.mrf.mxu0
      %3271 = vmatprep.mubr.f32.mxu0 %v2928
      %3272 = vmatmul.mubr.f32.gmra.mxu0 %v2832
      %v3273 = vpop.f32.mrf.mxu0
      %v3274 = vadd.f32 %v2974, %v3273
      %v3275 = vpop.f32.mrf.mxu0
      %3276 = vmatprep.mubr.f32.mxu0 %v2929
      %3277 = vmatmul.mubr.f32.gmra.mxu0 %v2833
      %v3278 = vpop.f32.mrf.mxu0
      %v3279 = vadd.f32 %v2974, %v3278
      %v3280 = vpop.f32.mrf.mxu0
      %3281 = vmatprep.mubr.f32.mxu0 %v2930
      %3282 = vmatmul.mubr.f32.gmra.mxu0 %v2834
      %v3283 = vpop.f32.mrf.mxu0
      %v3284 = vadd.f32 %v2974, %v3283
      %v3285 = vpop.f32.mrf.mxu0
      %3286 = vmatprep.mubr.f32.mxu0 %v2931
      %3287 = vmatmul.mubr.f32.gmra.mxu0 %v2835
      %v3288 = vpop.f32.mrf.mxu0
      %v3289 = vadd.f32 %v2974, %v3288
      %v3290 = vpop.f32.mrf.mxu0
      %3291 = vmatprep.mubr.f32.mxu0 %v2932
      %3292 = vmatmul.mubr.f32.gmra.mxu0 %v2836
      %v3293 = vpop.f32.mrf.mxu0
      %v3294 = vadd.f32 %v2974, %v3293
      %v3295 = vpop.f32.mrf.mxu0
      %3296 = vdwg.mxu0
      %3297 = vmatprep.subr.mxu0 0.0
      %3298 = vmatpush1.msra.mxu0 0.0
      %3299 = vmatprep.subr.mxu0 0.0
      %3300 = vmatpush1.msra.mxu0 0.0
      %3301 = vmatprep.subr.mxu0 0.0
      %3302 = vmatpush1.msra.mxu0 0.0
      %3303 = vmatprep.subr.mxu0 0.0
      %3304 = vmatpush1.msra.mxu0 0.0
      %3305 = vmatprep.subr.mxu0 0.0
      %3306 = vmatpush1.msra.mxu0 0.0
      %3307 = vmatprep.subr.mxu0 0.0
      %3308 = vmatpush1.msra.mxu0 0.0
      %3309 = vmatprep.subr.mxu0 0.0
      %3310 = vmatpush1.msra.mxu0 0.0
      %3311 = vmatprep.subr.mxu0 0.0
      %3312 = vmatpush1.msra.mxu0 0.0
      %3313 = vmatprep.subr.mxu0 0.0
      %3314 = vmatpush1.msra.mxu0 0.0
      %3315 = vmatprep.subr.mxu0 0.0
      %3316 = vmatpush1.msra.mxu0 0.0
      %3317 = vmatprep.subr.mxu0 0.0
      %3318 = vmatpush1.msra.mxu0 0.0
      %3319 = vmatprep.subr.mxu0 0.0
      %3320 = vmatpush1.msra.mxu0 0.0
      %3321 = vmatprep.subr.mxu0 0.0
      %3322 = vmatpush1.msra.mxu0 %v2968
      %3323 = vmatprep.subr.mxu0 0.0
      %3324 = vmatpush1.msra.mxu0 %v2967
      %3325 = vmatprep.subr.mxu0 0.0
      %3326 = vmatpush1.msra.mxu0 %v2966
      %3327 = vmatprep.subr.mxu0 0.0
      %3328 = vmatpush1.msra.mxu0 %v2965
      %3329 = vmatprep.subr.mxu0 0.0
      %3330 = vmatpush2.msra.mxu0 0.0
      %3331 = vmatprep.subr.mxu0 0.0
      %3332 = vmatpush2.msra.mxu0 0.0
      %3333 = vmatprep.subr.mxu0 0.0
      %3334 = vmatpush2.msra.mxu0 0.0
      %3335 = vmatprep.subr.mxu0 0.0
      %3336 = vmatpush2.msra.mxu0 0.0
      %3337 = vmatprep.subr.mxu0 0.0
      %3338 = vmatpush2.msra.mxu0 0.0
      %3339 = vmatprep.subr.mxu0 0.0
      %3340 = vmatpush2.msra.mxu0 0.0
      %3341 = vmatprep.subr.mxu0 0.0
      %3342 = vmatpush2.msra.mxu0 0.0
      %3343 = vmatprep.subr.mxu0 0.0
      %3344 = vmatpush2.msra.mxu0 0.0
      %3345 = vmatprep.subr.mxu0 0.0
      %3346 = vmatpush2.msra.mxu0 0.0
      %3347 = vmatprep.subr.mxu0 0.0
      %3348 = vmatpush2.msra.mxu0 0.0
      %3349 = vmatprep.subr.mxu0 0.0
      %3350 = vmatpush2.msra.mxu0 0.0
      %3351 = vmatprep.subr.mxu0 0.0
      %3352 = vmatpush2.msra.mxu0 0.0
      %3353 = vmatprep.subr.mxu0 0.0
      %3354 = vmatpush2.msra.mxu0 0.0
      %3355 = vmatprep.subr.mxu0 0.0
      %3356 = vmatpush2.msra.mxu0 0.0
      %3357 = vmatprep.subr.mxu0 0.0
      %3358 = vmatpush2.msra.mxu0 0.0
      %3359 = vmatprep.subr.mxu0 0.0
      %3360 = vmatpush2.msra.mxu0 0.0
      %3361 = vmatprep.mubr.f32.mxu0 0.0
      %3362 = vmatmul.mubr.f32.gmra.mxu0 %v2977
      %v3363 = vpop.f32.mrf.mxu0
      %v3364 = vadd.f32 %v3139, %v3363
      %v3365 = vpop.f32.mrf.mxu0
      %3366 = vmatprep.mubr.f32.mxu0 0.0
      %3367 = vmatmul.mubr.f32.gmra.mxu0 %v2980
      %v3368 = vpop.f32.mrf.mxu0
      %v3369 = vadd.f32 %v3144, %v3368
      %v3370 = vpop.f32.mrf.mxu0
      %3371 = vmatprep.mubr.f32.mxu0 0.0
      %3372 = vmatmul.mubr.f32.gmra.mxu0 %v2983
      %v3373 = vpop.f32.mrf.mxu0
      %v3374 = vadd.f32 %v3149, %v3373
      %v3375 = vpop.f32.mrf.mxu0
      %3376 = vmatprep.mubr.f32.mxu0 0.0
      %3377 = vmatmul.mubr.f32.gmra.mxu0 %v2986
      %v3378 = vpop.f32.mrf.mxu0
      %v3379 = vadd.f32 %v3154, %v3378
      %v3380 = vpop.f32.mrf.mxu0
      %3381 = vmatprep.mubr.f32.mxu0 0.0
      %3382 = vmatmul.mubr.f32.gmra.mxu0 %v2989
      %v3383 = vpop.f32.mrf.mxu0
      %v3384 = vadd.f32 %v3159, %v3383
      %v3385 = vpop.f32.mrf.mxu0
      %3386 = vmatprep.mubr.f32.mxu0 0.0
      %3387 = vmatmul.mubr.f32.gmra.mxu0 %v2992
      %v3388 = vpop.f32.mrf.mxu0
      %v3389 = vadd.f32 %v3164, %v3388
      %v3390 = vpop.f32.mrf.mxu0
      %3391 = vmatprep.mubr.f32.mxu0 0.0
      %3392 = vmatmul.mubr.f32.gmra.mxu0 %v2995
      %v3393 = vpop.f32.mrf.mxu0
      %v3394 = vadd.f32 %v3169, %v3393
      %v3395 = vpop.f32.mrf.mxu0
      %3396 = vmatprep.mubr.f32.mxu0 0.0
      %3397 = vmatmul.mubr.f32.gmra.mxu0 %v2998
      %v3398 = vpop.f32.mrf.mxu0
      %v3399 = vadd.f32 %v3174, %v3398
      %v3400 = vpop.f32.mrf.mxu0
      %3401 = vmatprep.mubr.f32.mxu0 0.0
      %3402 = vmatmul.mubr.f32.gmra.mxu0 %v3001
      %v3403 = vpop.f32.mrf.mxu0
      %v3404 = vadd.f32 %v3179, %v3403
      %v3405 = vpop.f32.mrf.mxu0
      %3406 = vmatprep.mubr.f32.mxu0 0.0
      %3407 = vmatmul.mubr.f32.gmra.mxu0 %v3004
      %v3408 = vpop.f32.mrf.mxu0
      %v3409 = vadd.f32 %v3184, %v3408
      %v3410 = vpop.f32.mrf.mxu0
      %3411 = vmatprep.mubr.f32.mxu0 0.0
      %3412 = vmatmul.mubr.f32.gmra.mxu0 %v3007
      %v3413 = vpop.f32.mrf.mxu0
      %v3414 = vadd.f32 %v3189, %v3413
      %v3415 = vpop.f32.mrf.mxu0
      %3416 = vmatprep.mubr.f32.mxu0 0.0
      %3417 = vmatmul.mubr.f32.gmra.mxu0 %v3010
      %v3418 = vpop.f32.mrf.mxu0
      %v3419 = vadd.f32 %v3194, %v3418
      %v3420 = vpop.f32.mrf.mxu0
      %3421 = vmatprep.mubr.f32.mxu0 0.0
      %3422 = vmatmul.mubr.f32.gmra.mxu0 %v3013
      %v3423 = vpop.f32.mrf.mxu0
      %v3424 = vadd.f32 %v3199, %v3423
      %v3425 = vpop.f32.mrf.mxu0
      %3426 = vmatprep.mubr.f32.mxu0 0.0
      %3427 = vmatmul.mubr.f32.gmra.mxu0 %v3016
      %v3428 = vpop.f32.mrf.mxu0
      %v3429 = vadd.f32 %v3204, %v3428
      %v3430 = vpop.f32.mrf.mxu0
      %3431 = vmatprep.mubr.f32.mxu0 0.0
      %3432 = vmatmul.mubr.f32.gmra.mxu0 %v3019
      %v3433 = vpop.f32.mrf.mxu0
      %v3434 = vadd.f32 %v3209, %v3433
      %v3435 = vpop.f32.mrf.mxu0
      %3436 = vmatprep.mubr.f32.mxu0 0.0
      %3437 = vmatmul.mubr.f32.gmra.mxu0 %v3022
      %v3438 = vpop.f32.mrf.mxu0
      %v3439 = vadd.f32 %v3214, %v3438
      %v3440 = vpop.f32.mrf.mxu0
      %3441 = vmatprep.mubr.f32.mxu0 0.0
      %3442 = vmatmul.mubr.f32.gmra.mxu0 %v3025
      %v3443 = vpop.f32.mrf.mxu0
      %v3444 = vadd.f32 %v3219, %v3443
      %v3445 = vpop.f32.mrf.mxu0
      %3446 = vmatprep.mubr.f32.mxu0 0.0
      %3447 = vmatmul.mubr.f32.gmra.mxu0 %v3028
      %v3448 = vpop.f32.mrf.mxu0
      %v3449 = vadd.f32 %v3224, %v3448
      %v3450 = vpop.f32.mrf.mxu0
      %3451 = vmatprep.mubr.f32.mxu0 0.0
      %3452 = vmatmul.mubr.f32.gmra.mxu0 %v3031
      %v3453 = vpop.f32.mrf.mxu0
      %v3454 = vadd.f32 %v3229, %v3453
      %v3455 = vpop.f32.mrf.mxu0
      %3456 = vmatprep.mubr.f32.mxu0 0.0
      %3457 = vmatmul.mubr.f32.gmra.mxu0 %v3034
      %v3458 = vpop.f32.mrf.mxu0
      %v3459 = vadd.f32 %v3234, %v3458
      %v3460 = vpop.f32.mrf.mxu0
      %3461 = vmatprep.mubr.f32.mxu0 0.0
      %3462 = vmatmul.mubr.f32.gmra.mxu0 %v3037
      %v3463 = vpop.f32.mrf.mxu0
      %v3464 = vadd.f32 %v3239, %v3463
      %v3465 = vpop.f32.mrf.mxu0
      %3466 = vmatprep.mubr.f32.mxu0 0.0
      %3467 = vmatmul.mubr.f32.gmra.mxu0 %v3040
      %v3468 = vpop.f32.mrf.mxu0
      %v3469 = vadd.f32 %v3244, %v3468
      %v3470 = vpop.f32.mrf.mxu0
      %3471 = vmatprep.mubr.f32.mxu0 0.0
      %3472 = vmatmul.mubr.f32.gmra.mxu0 %v3043
      %v3473 = vpop.f32.mrf.mxu0
      %v3474 = vadd.f32 %v3249, %v3473
      %v3475 = vpop.f32.mrf.mxu0
      %3476 = vmatprep.mubr.f32.mxu0 0.0
      %3477 = vmatmul.mubr.f32.gmra.mxu0 %v3046
      %v3478 = vpop.f32.mrf.mxu0
      %v3479 = vadd.f32 %v3254, %v3478
      %v3480 = vpop.f32.mrf.mxu0
      %3481 = vmatprep.mubr.f32.mxu0 0.0
      %3482 = vmatmul.mubr.f32.gmra.mxu0 %v3049
      %v3483 = vpop.f32.mrf.mxu0
      %v3484 = vadd.f32 %v3259, %v3483
      %v3485 = vpop.f32.mrf.mxu0
      %3486 = vmatprep.mubr.f32.mxu0 0.0
      %3487 = vmatmul.mubr.f32.gmra.mxu0 %v3052
      %v3488 = vpop.f32.mrf.mxu0
      %v3489 = vadd.f32 %v3264, %v3488
      %v3490 = vpop.f32.mrf.mxu0
      %3491 = vmatprep.mubr.f32.mxu0 0.0
      %3492 = vmatmul.mubr.f32.gmra.mxu0 %v3055
      %v3493 = vpop.f32.mrf.mxu0
      %v3494 = vadd.f32 %v3269, %v3493
      %v3495 = vpop.f32.mrf.mxu0
      %3496 = vmatprep.mubr.f32.mxu0 0.0
      %3497 = vmatmul.mubr.f32.gmra.mxu0 %v3058
      %v3498 = vpop.f32.mrf.mxu0
      %v3499 = vadd.f32 %v3274, %v3498
      %v3500 = vpop.f32.mrf.mxu0
      %3501 = vmatprep.mubr.f32.mxu0 0.0
      %3502 = vmatmul.mubr.f32.gmra.mxu0 %v3061
      %v3503 = vpop.f32.mrf.mxu0
      %v3504 = vadd.f32 %v3279, %v3503
      %v3505 = vpop.f32.mrf.mxu0
      %3506 = vmatprep.mubr.f32.mxu0 0.0
      %3507 = vmatmul.mubr.f32.gmra.mxu0 %v3064
      %v3508 = vpop.f32.mrf.mxu0
      %v3509 = vadd.f32 %v3284, %v3508
      %v3510 = vpop.f32.mrf.mxu0
      %3511 = vmatprep.mubr.f32.mxu0 0.0
      %3512 = vmatmul.mubr.f32.gmra.mxu0 %v3067
      %v3513 = vpop.f32.mrf.mxu0
      %v3514 = vadd.f32 %v3289, %v3513
      %v3515 = vpop.f32.mrf.mxu0
      %3516 = vmatprep.mubr.f32.mxu0 0.0
      %3517 = vmatmul.mubr.f32.gmra.mxu0 %v3070
      %v3518 = vpop.f32.mrf.mxu0
      %v3519 = vadd.f32 %v3294, %v3518
      %v3520 = vpop.f32.mrf.mxu0
      %3521 = vdwg.mxu0
      %v3522 = vmax.f32 %v3364, %v3374
      %v3523 = vmax.f32 %v3369, %v3379
      %v3524 = vmax.f32 %v3384, %v3394
      %v3525 = vmax.f32 %v3389, %v3399
      %v3526 = vmax.f32 %v3404, %v3414
      %v3527 = vmax.f32 %v3409, %v3419
      %v3528 = vmax.f32 %v3424, %v3434
      %v3529 = vmax.f32 %v3429, %v3439
      %v3530 = vmax.f32 %v3444, %v3454
      %v3531 = vmax.f32 %v3449, %v3459
      %v3532 = vmax.f32 %v3464, %v3474
      %v3533 = vmax.f32 %v3469, %v3479
      %v3534 = vmax.f32 %v3484, %v3494
      %v3535 = vmax.f32 %v3489, %v3499
      %v3536 = vmax.f32 %v3504, %v3514
      %v3537 = vmax.f32 %v3509, %v3519
      %vm3538 = vcmask 130048
      %3539 = vst.msk [vmem:[#allocation3] sm:$0xff] %vm3538, %v3522
      %3540 = vst.msk [vmem:[#allocation3 + $0x8] sm:$0xff] %vm3538, %v3523
      %3541 = vst.msk [vmem:[#allocation3 + $0x10] sm:$0xff] %vm3538, %v3524
      %3542 = vst.msk [vmem:[#allocation3 + $0x18] sm:$0xff] %vm3538, %v3525
      %3543 = vst.msk [vmem:[#allocation3 + $0x20] sm:$0xff] %vm3538, %v3526
      %3544 = vst.msk [vmem:[#allocation3 + $0x28] sm:$0xff] %vm3538, %v3527
      %3545 = vst.msk [vmem:[#allocation3 + $0x30] sm:$0xff] %vm3538, %v3528
      %3546 = vst.msk [vmem:[#allocation3 + $0x38] sm:$0xff] %vm3538, %v3529
      %3547 = vst.msk [vmem:[#allocation3 + $0x40] sm:$0xff] %vm3538, %v3530
      %3548 = vst.msk [vmem:[#allocation3 + $0x48] sm:$0xff] %vm3538, %v3531
      %3549 = vst.msk [vmem:[#allocation3 + $0x50] sm:$0xff] %vm3538, %v3532
      %3550 = vst.msk [vmem:[#allocation3 + $0x58] sm:$0xff] %vm3538, %v3533
      %3551 = vst.msk [vmem:[#allocation3 + $0x60] sm:$0xff] %vm3538, %v3534
      %3552 = vst.msk [vmem:[#allocation3 + $0x68] sm:$0xff] %vm3538, %v3535
      %3553 = vst.msk [vmem:[#allocation3 + $0x70] sm:$0xff] %vm3538, %v3536
      %3554 = vst.msk [vmem:[#allocation3 + $0x78] sm:$0xff] %vm3538, %v3537
      %v3555 = vld [vmem:[#allocation3] ss:$2 sm:$0xff]
      %s3556 = scalar_lea.vmem [#allocation3], 16
      %v3557 = vld [vmem:[%s3556] ss:$2 sm:$0xff]
      %s3558 = scalar_lea.vmem [#allocation3], 32
      %v3559 = vld [vmem:[%s3558] ss:$2 sm:$0xff]
      %s3560 = scalar_lea.vmem [#allocation3], 48
      %v3561 = vld [vmem:[%s3560] ss:$2 sm:$0xff]
      %s3562 = scalar_lea.vmem [#allocation3], 64
      %v3563 = vld [vmem:[%s3562] ss:$2 sm:$0xff]
      %s3564 = scalar_lea.vmem [#allocation3], 80
      %v3565 = vld [vmem:[%s3564] ss:$2 sm:$0xff]
      %s3566 = scalar_lea.vmem [#allocation3], 96
      %v3567 = vld [vmem:[%s3566] ss:$2 sm:$0xff]
      %s3568 = scalar_lea.vmem [#allocation3], 112
      %v3569 = vld [vmem:[%s3568] ss:$2 sm:$0xff]
      %s3570 = scalar_lea.vmem [#allocation3], 1
      %v3571 = vld [vmem:[%s3570] ss:$2 sm:$0xff]
      %s3572 = scalar_lea.vmem [#allocation3], 17
      %v3573 = vld [vmem:[%s3572] ss:$2 sm:$0xff]
      %s3574 = scalar_lea.vmem [#allocation3], 33
      %v3575 = vld [vmem:[%s3574] ss:$2 sm:$0xff]
      %s3576 = scalar_lea.vmem [#allocation3], 49
      %v3577 = vld [vmem:[%s3576] ss:$2 sm:$0xff]
      %s3578 = scalar_lea.vmem [#allocation3], 65
      %v3579 = vld [vmem:[%s3578] ss:$2 sm:$0xff]
      %s3580 = scalar_lea.vmem [#allocation3], 81
      %v3581 = vld [vmem:[%s3580] ss:$2 sm:$0xff]
      %s3582 = scalar_lea.vmem [#allocation3], 97
      %v3583 = vld [vmem:[%s3582] ss:$2 sm:$0xff]
      %s3584 = scalar_lea.vmem [#allocation3], 113
      %v3585 = vld [vmem:[%s3584] ss:$2 sm:$0xff]
      %v3586 = vmax.f32 %v3555, %v3571
      %v3587 = vmax.f32 %v3557, %v3573
      %v3588 = vmax.f32 %v3559, %v3575
      %v3589 = vmax.f32 %v3561, %v3577
      %v3590 = vmax.f32 %v3563, %v3579
      %v3591 = vmax.f32 %v3565, %v3581
      %v3592 = vmax.f32 %v3567, %v3583
      %v3593 = vmax.f32 %v3569, %v3585
      %v3594 = vld [vmem:[%s5] sm:$0xff]
      %v3595 = vld [vmem:[%s5 + $0x8] sm:$0xff]
      %v3596 = vld [vmem:[%s6] sm:$0x1]
      %v3598 = vlaneseq
      %v3599 = vshrl.u32 %v3598, 7
      %v3600 = vsub.s32 0, %v3599
      %v3601 = vrot.slane %v3596, %v3600
      %v3604 = vsel %vm3538, %v3586, 0
      %v3607 = vsel %vm3538, %v3587, 0
      %v3610 = vsel %vm3538, %v3588, 0
      %v3613 = vsel %vm3538, %v3589, 0
      %v3616 = vsel %vm3538, %v3590, 0
      %v3619 = vsel %vm3538, %v3591, 0
      %v3622 = vsel %vm3538, %v3592, 0
      %v3625 = vsel %vm3538, %v3593, 0
      %3627 = vmatprep.subr.mxu0 0.0
      %3628 = vmatpush1.msra.mxu0 0.0
      %3629 = vmatprep.subr.mxu0 0.0
      %3630 = vmatpush1.msra.mxu0 0.0
      %3631 = vmatprep.subr.mxu0 0.0
      %3632 = vmatpush1.msra.mxu0 0.0
      %3633 = vmatprep.subr.mxu0 0.0
      %3634 = vmatpush1.msra.mxu0 0.0
      %3635 = vmatprep.subr.mxu0 0.0
      %3636 = vmatpush1.msra.mxu0 0.0
      %3637 = vmatprep.subr.mxu0 0.0
      %3638 = vmatpush1.msra.mxu0 0.0
      %3639 = vmatprep.subr.mxu0 0.0
      %3640 = vmatpush1.msra.mxu0 0.0
      %3641 = vmatprep.subr.mxu0 0.0
      %3642 = vmatpush1.msra.mxu0 0.0
      %3643 = vmatprep.subr.mxu0 0.0
      %3644 = vmatpush1.msra.mxu0 0.0
      %3645 = vmatprep.subr.mxu0 0.0
      %3646 = vmatpush1.msra.mxu0 0.0
      %3647 = vmatprep.subr.mxu0 0.0
      %3648 = vmatpush1.msra.mxu0 0.0
      %3649 = vmatprep.subr.mxu0 0.0
      %3650 = vmatpush1.msra.mxu0 0.0
      %3651 = vmatprep.subr.mxu0 0.0
      %3652 = vmatpush1.msra.mxu0 0.0
      %3653 = vmatprep.subr.mxu0 0.0
      %3654 = vmatpush1.msra.mxu0 0.0
      %3655 = vmatprep.subr.mxu0 0.0
      %3656 = vmatpush1.msra.mxu0 %v3595
      %3657 = vmatprep.subr.mxu0 0.0
      %3658 = vmatpush1.msra.mxu0 %v3594
      %3659 = vmatprep.subr.mxu0 0.0
      %3660 = vmatpush2.msra.mxu0 0.0
      %3661 = vmatprep.subr.mxu0 0.0
      %3662 = vmatpush2.msra.mxu0 0.0
      %3663 = vmatprep.subr.mxu0 0.0
      %3664 = vmatpush2.msra.mxu0 0.0
      %3665 = vmatprep.subr.mxu0 0.0
      %3666 = vmatpush2.msra.mxu0 0.0
      %3667 = vmatprep.subr.mxu0 0.0
      %3668 = vmatpush2.msra.mxu0 0.0
      %3669 = vmatprep.subr.mxu0 0.0
      %3670 = vmatpush2.msra.mxu0 0.0
      %3671 = vmatprep.subr.mxu0 0.0
      %3672 = vmatpush2.msra.mxu0 0.0
      %3673 = vmatprep.subr.mxu0 0.0
      %3674 = vmatpush2.msra.mxu0 0.0
      %3675 = vmatprep.subr.mxu0 0.0
      %3676 = vmatpush2.msra.mxu0 0.0
      %3677 = vmatprep.subr.mxu0 0.0
      %3678 = vmatpush2.msra.mxu0 0.0
      %3679 = vmatprep.subr.mxu0 0.0
      %3680 = vmatpush2.msra.mxu0 0.0
      %3681 = vmatprep.subr.mxu0 0.0
      %3682 = vmatpush2.msra.mxu0 0.0
      %3683 = vmatprep.subr.mxu0 0.0
      %3684 = vmatpush2.msra.mxu0 0.0
      %3685 = vmatprep.subr.mxu0 0.0
      %3686 = vmatpush2.msra.mxu0 0.0
      %3687 = vmatprep.subr.mxu0 0.0
      %3688 = vmatpush2.msra.mxu0 0.0
      %3689 = vmatprep.subr.mxu0 0.0
      %3690 = vmatpush2.msra.mxu0 0.0
      %3691 = vmatprep.mubr.f32.mxu0 0.0
      %3692 = vmatmul.mubr.f32.gmra.mxu0 %v3604
      %v3693 = vpop.f32.mrf.mxu0
      %v3694 = vadd.f32 %v3601, %v3693
      %v3695 = vpop.f32.mrf.mxu0
      %3696 = vmatprep.mubr.f32.mxu0 0.0
      %3697 = vmatmul.mubr.f32.gmra.mxu0 %v3607
      %v3698 = vpop.f32.mrf.mxu0
      %v3699 = vadd.f32 %v3601, %v3698
      %v3700 = vpop.f32.mrf.mxu0
      %3701 = vmatprep.mubr.f32.mxu0 0.0
      %3702 = vmatmul.mubr.f32.gmra.mxu0 %v3610
      %v3703 = vpop.f32.mrf.mxu0
      %v3704 = vadd.f32 %v3601, %v3703
      %v3705 = vpop.f32.mrf.mxu0
      %3706 = vmatprep.mubr.f32.mxu0 0.0
      %3707 = vmatmul.mubr.f32.gmra.mxu0 %v3613
      %v3708 = vpop.f32.mrf.mxu0
      %v3709 = vadd.f32 %v3601, %v3708
      %v3710 = vpop.f32.mrf.mxu0
      %3711 = vmatprep.mubr.f32.mxu0 0.0
      %3712 = vmatmul.mubr.f32.gmra.mxu0 %v3616
      %v3713 = vpop.f32.mrf.mxu0
      %v3714 = vadd.f32 %v3601, %v3713
      %v3715 = vpop.f32.mrf.mxu0
      %3716 = vmatprep.mubr.f32.mxu0 0.0
      %3717 = vmatmul.mubr.f32.gmra.mxu0 %v3619
      %v3718 = vpop.f32.mrf.mxu0
      %v3719 = vadd.f32 %v3601, %v3718
      %v3720 = vpop.f32.mrf.mxu0
      %3721 = vmatprep.mubr.f32.mxu0 0.0
      %3722 = vmatmul.mubr.f32.gmra.mxu0 %v3622
      %v3723 = vpop.f32.mrf.mxu0
      %v3724 = vadd.f32 %v3601, %v3723
      %v3725 = vpop.f32.mrf.mxu0
      %3726 = vmatprep.mubr.f32.mxu0 0.0
      %3727 = vmatmul.mubr.f32.gmra.mxu0 %v3625
      %v3728 = vpop.f32.mrf.mxu0
      %v3729 = vadd.f32 %v3601, %v3728
      %v3730 = vpop.f32.mrf.mxu0
      %3731 = vdwg.mxu0
      %3732 = vst [vmem:[%s278] sm:$0xff] %v3694
      %3733 = vst [vmem:[%s278 + $0x8] sm:$0xff] %v3699
      %3734 = vst [vmem:[%s278 + $0x10] sm:$0xff] %v3704
      %3735 = vst [vmem:[%s278 + $0x18] sm:$0xff] %v3709
      %3736 = vst [vmem:[%s278 + $0x20] sm:$0xff] %v3714
      %3737 = vst [vmem:[%s278 + $0x28] sm:$0xff] %v3719
      %3738 = vst [vmem:[%s278 + $0x30] sm:$0xff] %v3724
      %3739 = vst [vmem:[%s278 + $0x38] sm:$0xff] %v3729
      %p3740 = scmp.lt.s32.totalorder %s18, 1
      %s3741 = scalar_select %p3740, %s18, 1
      %s3742 = smul.addr %s3741, 8
      %s3743 = smul.addr %s3742, 8
      %s3744 = scalar_lea.vmem %s7, %s3743
      // Predicated region
      $region49: #{mynet_forward.1} parent=47 // pred_check
        %p3745 = pneg %p188
      $region50: #{mynet_forward.1} parent=47 // pred_check_branch
        %3747 = sbr.rel (%p3745) target = $region52
      $region51: #{mynet_forward.1} parent=47 // pred_region
        _
      $region52: #{mynet_forward.1} parent=47 // pred_fallthru
        _
    $region48: #{mynet_forward.1} parent=5 // pred_fallthru
      _
    %p3748 = scmp.le.s32.totalorder 2, %s13
    // Predicated region
    $region53: #{mynet_forward.1} parent=5 // pred_check
      %p3749 = pneg %p3748
    $region54: #{mynet_forward.1} parent=5 // pred_check_branch
      %3751 = sbr.rel (%p3749) target = $region56
    $region55: #{mynet_forward.1} parent=5 // pred_region
      %s3752 = ssub.s32 %s13, 2
      // Predicated region
      $region57: #{mynet_forward.1} parent=55 // pred_check
        %p3753 = pneg %p194
      $region58: #{mynet_forward.1} parent=55 // pred_check_branch
        %3755 = sbr.rel (%p3753) target = $region60
      $region59: #{mynet_forward.1} parent=55 // pred_region
        %p3756 = scmp.lt.s32.totalorder %s19, 1
        %s3757 = scalar_select %p3756, %s19, 1
        %s3758 = smul.addr %s3757, 8
        %s3759 = smul.addr %s3758, 8
        %s3760 = scalar_lea.vmem %s7, %s3759
      $region60: #{mynet_forward.1} parent=55 // pred_fallthru
        _
    $region56: #{mynet_forward.1} parent=5 // pred_fallthru
      _
  $region6: #{mynet_forward.1} parent=0 // loop_footer
    %s17 = sadd.s32 1, %s13
  $region7: #{mynet_forward.1} parent=0 // loop_footer_branch
    %12 = sbr.rel target = $region3
  $region8: #{mynet_forward.1} parent=0 // loop_exit
    _

</llo_original>
